<compile_context>
chip_gen: v7x
topology: tpu7x:2x2x1
jax: 0.10.0
libtpu: 0.0.40
codegen_flags: <defaults>
</compile_context>

<pallas_src>
import functools

import jax
import jax.numpy as jnp
from jax import lax
from jax.experimental import pallas as pl
from jax.experimental.pallas import tpu as pltpu

NEG_SLOPE = 0.2    # LeakyReLU slope
IN_EPS = 1e-5      # InstanceNorm2d default eps
LANE = 128
OC_TILE = 128      # output-channel tile (OCp is always a multiple of 128)


def _vmem_capacity_bytes():
    try:
        return int(pltpu.get_tpu_info().vmem_capacity_bytes)
    except Exception:
        return 64 * 1024 * 1024          # conservative (v7x-sized) fallback


_VMEM_CAP = _vmem_capacity_bytes()
_VMEM_LIMIT = 96 * 2**20 if _VMEM_CAP >= 100 * 2**20 else 56 * 2**20
_ACC_BUDGET = 4 * 2**20 if _VMEM_CAP >= 100 * 2**20 else 3 * 2**20

# Test hook: override the f32-accumulator budget used by _pick_row_tile so the
# row-tiling (MT > 1) path can be exercised at small shapes.
_ACC_BUDGET_OVERRIDE = None


def _conv_block_kernel(x_ref, w_ref, b_ref, o_ref, acc_ref, *,
                       taps, th, ow, use_norm, use_act):
    """One (sample, cout-tile, row-tile) step of conv + bias [+ IN] [+ LeakyReLU].

    x_ref  : (1, HP2, S*WPf, K)  padded, width-folded sample (bf16), resident per n
    w_ref  : (NTAPS, K, OCt)     per-tap weight matrices (bf16)
    b_ref  : (1, OCt)            bias (f32)
    o_ref  : (1, TH*OW, OCt)     output tile (bf16)
    acc_ref: (TH*OW, OCt)        f32 VMEM accumulator (scratch)
    """
    k = x_ref.shape[-1]
    row0 = pl.multiple_of(pl.program_id(2) * th, th)

    for t, (r_off, c_off) in enumerate(taps):       # static, short unrolled loop
        xs = x_ref[0, pl.ds(row0 + r_off, th), pl.ds(c_off, ow), :]
        part = jnp.dot(xs.reshape(th * ow, k), w_ref[t],
                       preferred_element_type=jnp.float32)
        if t == 0:
            acc_ref[...] = part                      # in-place VMEM accumulation
        else:
            acc_ref[...] += part

    y = acc_ref[...] + b_ref[...]                    # f32

    if use_norm:
        # InstanceNorm2d (affine=False), biased variance, single pass.
        # Requires TH == OH (whole sample in this row tile).  Stats are
        # per-channel, so output-channel tiling is safe.
        m = float(th * ow)
        s1 = jnp.sum(y, axis=0, keepdims=True)
        s2 = jnp.sum(y * y, axis=0, keepdims=True)
        mean = s1 * (1.0 / m)
        var = jnp.maximum(s2 * (1.0 / m) - mean * mean, 0.0)
        y = (y - mean) * lax.rsqrt(var + IN_EPS)

    if use_act:
        y = jnp.where(y > 0, y, NEG_SLOPE * y)

    o_ref[0] = y.astype(o_ref.dtype)


def _fold_input(x_nhwc, stride, pad, kh, kw, oh, ow):
    """Pad & fold (reshape-only, no transpose): (N,H,W,C) -> (N, HP2, S*WPf, S*C)."""
    N, H, W, C = x_nhwc.shape
    S = stride
    hp2 = oh + (kh - 1) // S
    wpf = ow + (kw - 1) // S
    HP, WP = S * hp2, S * wpf
    xp = jnp.pad(x_nhwc, ((0, 0),
                          (pad, max(HP - H - pad, 0)),
                          (pad, max(WP - W - pad, 0)),
                          (0, 0)))[:, :HP, :WP, :]
    xp = xp.reshape(N, hp2, S, wpf, S * C)     # split row phases / fold width phases
    return xp.reshape(N, hp2, S * wpf, S * C), hp2, wpf


def _im2col_first_layer(x_nhwc, stride, pad, kh, kw, oh, ow):
    """Small-Cin first layer: (N,H,W,C) -> (N, OH, OW, KH*KW*C) patches (tiny)."""
    xp = jnp.pad(x_nhwc, ((0, 0), (pad, pad), (pad, pad), (0, 0)))
    cols = []
    for i in range(kh):
        for j in range(kw):
            cols.append(xp[:, i:i + (oh - 1) * stride + 1:stride,
                              j:j + (ow - 1) * stride + 1:stride, :])
    return jnp.concatenate(cols, axis=-1)


def _prep_weights(weight_oihw, stride, ocp, im2col):
    """(OC,Cin,KH,KW) -> (NTAPS, K, OCp) bf16, matching the activation layout."""
    OC, Cin, KH, KW = weight_oihw.shape
    wt = jnp.transpose(weight_oihw, (2, 3, 1, 0))          # (KH, KW, Cin, OC)
    if im2col:
        w = wt.reshape(1, KH * KW * Cin, OC)               # (i, j, cin) order
    else:
        S = stride
        blocks = [wt[i, c * S:(c + 1) * S].reshape(S * Cin, OC)
                  for i in range(KH) for c in range(KW // S)]
        w = jnp.stack(blocks, 0)                           # (KH*(KW//S), S*Cin, OC)
    return jnp.pad(w, ((0, 0), (0, 0), (0, ocp - OC))).astype(jnp.bfloat16)


def _pick_row_tile(oh, ow, oct_, acc_budget):
    """Largest divisor TH of OH whose f32 accumulator fits the budget and whose
    flattened rows satisfy (TH*OW) % 16 == 0 (bf16 packing); fall back to %8,
    then to the whole sample."""
    max_rows = max(128, acc_budget // (4 * oct_))
    if oh * ow <= max_rows:
        return oh
    best8 = None
    for th in range(oh, 0, -1):
        if oh % th or th * ow > max_rows:
            continue
        if (th * ow) % 16 == 0:
            return th
        if best8 is None and (th * ow) % 8 == 0:
            best8 = th
    return best8 if best8 is not None else oh


def conv_layer_pallas(x_nhwc, weight_oihw, bias, *, stride, pad,
                      use_norm, use_act, im2col=False):
    """Fused Conv2d(+bias)(+InstanceNorm)(+LeakyReLU). NHWC in, NHWC bf16 out."""
    N, H, W, Cin = x_nhwc.shape
    OC, _, KH, KW = weight_oihw.shape
    assert KW % stride == 0, "width-fold requires KW % stride == 0"
    OH = (H + 2 * pad - KH) // stride + 1
    OW = (W + 2 * pad - KW) // stride + 1
    OCp = ((OC + LANE - 1) // LANE) * LANE
    OCt = min(OCp, OC_TILE)
    CT = OCp // OCt

    xb = x_nhwc.astype(jnp.bfloat16)
    if im2col:
        xf = _im2col_first_layer(xb, stride, pad, KH, KW, OH, OW)
        taps = [(0, 0)]
    else:
        xf, _, wpf = _fold_input(xb, stride, pad, KH, KW, OH, OW)
        S = stride
        taps = [(i // S, (i % S) * wpf + c)
                for i in range(KH) for c in range(KW // S)]

    w = _prep_weights(weight_oihw, stride, OCp, im2col)
    b = jnp.pad(bias, (0, OCp - OC)).reshape(1, OCp).astype(jnp.float32)

    budget = _ACC_BUDGET_OVERRIDE or _ACC_BUDGET
    # Norm layers need the whole sample in one row tile (one-pass statistics).
    TH = OH if use_norm else _pick_row_tile(OH, OW, OCt, budget)
    MT = OH // TH
    ntaps, kdim = w.shape[0], w.shape[1]
    hp2f, wcols = xf.shape[1], xf.shape[2]

    kernel = functools.partial(_conv_block_kernel, taps=taps, th=TH, ow=OW,
                               use_norm=use_norm, use_act=use_act)

    out = pl.pallas_call(
        kernel,
        out_shape=jax.ShapeDtypeStruct((N, OH * OW, OCp), jnp.bfloat16),
        grid_spec=pltpu.PrefetchScalarGridSpec(
            num_scalar_prefetch=0,
            grid=(N, CT, MT),
            in_specs=[
                # Whole folded sample; constant index across (ct, m) so it stays
                # resident and is re-DMA'd only when the sample index changes.
                pl.BlockSpec((1, hp2f, wcols, kdim),
                             lambda n, ct, m: (n, 0, 0, 0)),
                pl.BlockSpec((ntaps, kdim, OCt), lambda n, ct, m: (0, 0, ct)),
                pl.BlockSpec((1, OCt), lambda n, ct, m: (0, ct)),
            ],
            out_specs=pl.BlockSpec((1, TH * OW, OCt),
                                   lambda n, ct, m: (n, m, ct)),
            scratch_shapes=[pltpu.VMEM((TH * OW, OCt), jnp.float32)],
        ),
        compiler_params=pltpu.CompilerParams(
            dimension_semantics=("parallel", "parallel", "parallel"),
            vmem_limit_bytes=_VMEM_LIMIT,
        ),
    )(xf, w, b)

    out = out.reshape(N, OH, OW, OCp)
    return out[..., :OC]      # channel un-pad; fuses with the next layer's pad


def make_params(key, input_nc, ndf=64, n_layers=3):
    """Deterministic synthetic parameters matching the PyTorch module's shapes."""
    kw = 4
    cfgs = [(input_nc, ndf, 2, False, True)]                      # conv + lrelu
    nf_mult = 1
    for n in range(1, n_layers):
        nf_prev = nf_mult
        nf_mult = min(2 ** n, 8)
        cfgs.append((ndf * nf_prev, ndf * nf_mult, 2, True, True))  # conv+IN+lrelu
    cfgs.append((ndf * nf_mult, 1, 1, False, False))               # final conv
    params = []
    for (cin, cout, stride, use_norm, use_act) in cfgs:
        key, k1, k2 = jax.random.split(key, 3)
        w = jax.random.normal(k1, (cout, cin, kw, kw), jnp.float32) * 0.05
        b = jax.random.normal(k2, (cout,), jnp.float32) * 0.05
        params.append(dict(w=w, b=b, stride=stride,
                           use_norm=use_norm, use_act=use_act))
    return params


def discriminator_forward(x_nchw, params):
    x = jnp.transpose(x_nchw, (0, 2, 3, 1))                        # NCHW -> NHWC
    for idx, p in enumerate(params):
        x = conv_layer_pallas(x, p["w"], p["b"], stride=p["stride"], pad=1,
                              use_norm=p["use_norm"], use_act=p["use_act"],
                              im2col=(idx == 0))
    return jnp.transpose(x, (0, 3, 1, 2)).astype(jnp.float32)       # -> NCHW


def reference_forward(x_nchw, params):
    """Pure-JAX reference mirroring the kernel's bf16-operand / f32-accum pipeline."""
    x = x_nchw
    for p in params:
        xb = x.astype(jnp.bfloat16)
        wb = p["w"].astype(jnp.bfloat16)
        y = lax.conv_general_dilated(
            xb, wb, window_strides=(p["stride"], p["stride"]),
            padding=((1, 1), (1, 1)),
            dimension_numbers=("NCHW", "OIHW", "NCHW"),
            preferred_element_type=jnp.float32)
        y = y + p["b"][None, :, None, None]
        if p["use_norm"]:
            mean = jnp.mean(y, axis=(2, 3), keepdims=True)
            var = jnp.mean((y - mean) ** 2, axis=(2, 3), keepdims=True)
            y = (y - mean) * lax.rsqrt(var + IN_EPS)
        if p["use_act"]:
            y = jnp.where(y > 0, y, NEG_SLOPE * y)
        x = y.astype(jnp.bfloat16).astype(jnp.float32)              # layers emit bf16
    return x


if __name__ == "__main__":
    key = jax.random.PRNGKey(0)
    kx, kp, kx2, kp2 = jax.random.split(key, 4)

    # Test 1: small shapes (batch=2, input_nc=3, 16x16, ndf=8, n_layers=3).
    N, C, H, W = 2, 3, 16, 16
    x = jax.random.normal(kx, (N, C, H, W), jnp.float32)
    params = make_params(kp, input_nc=C, ndf=8, n_layers=3)
    fwd = jax.jit(lambda xx: discriminator_forward(xx, params))
    out = jax.block_until_ready(fwd(x))
    ref = reference_forward(x, params)
    assert out.shape == ref.shape == (N, 1, 1, 1), (out.shape, ref.shape)
    assert jnp.allclose(out, ref, atol=2e-2, rtol=2e-2), (
        "mismatch", float(jnp.max(jnp.abs(out - ref))))

    # Test 2: exercise row tiling (MT>1), channel tiling (CT>1, OC=256 layer)
    # and batch=1, by forcing a small accumulator budget on a 32x32 / ndf=64 run.
    _ACC_BUDGET_OVERRIDE = 16 * 1024
    N2, C2, H2, W2 = 1, 3, 32, 32
    x2 = jax.random.normal(kx2, (N2, C2, H2, W2), jnp.float32)
    params2 = make_params(kp2, input_nc=C2, ndf=64, n_layers=3)
    fwd2 = jax.jit(lambda xx: discriminator_forward(xx, params2))
    out2 = jax.block_until_ready(fwd2(x2))
    ref2 = reference_forward(x2, params2)
    assert out2.shape == ref2.shape == (N2, 1, 3, 3), (out2.shape, ref2.shape)
    assert jnp.allclose(out2, ref2, atol=2e-2, rtol=2e-2), (
        "mismatch2", float(jnp.max(jnp.abs(out2 - ref2))))
    _ACC_BUDGET_OVERRIDE = None

    print("KERNEL_OK")
</pallas_src>

<mosaic_0001>
module attributes {stable_mosaic.version = 11 : i64} {
  func.func @_conv_block_kernel(%arg0: i32, %arg1: i32, %arg2: i32, %arg3: memref<1x8x8x48xbf16, #tpu.memory_space<vmem>>, %arg4: memref<1x48x128xbf16, #tpu.memory_space<vmem>>, %arg5: memref<1x128xf32, #tpu.memory_space<vmem>>, %arg6: memref<1x64x128xbf16, #tpu.memory_space<vmem>>, %arg7: memref<64x128xf32, #tpu.memory_space<vmem>>) attributes {dimension_semantics = [#tpu.dimension_semantics<parallel>, #tpu.dimension_semantics<parallel>, #tpu.dimension_semantics<parallel>], iteration_bounds = array<i64: 2, 1, 1>, scalar_prefetch = 0 : i64, scratch_operands = 1 : i64, tpu.core_type = #tpu.core_type<tc>, window_params = [{transform_indices = @transform_0, window_bounds = array<i64: 1, 8, 8, 48>}, {transform_indices = @transform_1, window_bounds = array<i64: 1, 48, 128>}, {transform_indices = @transform_2, window_bounds = array<i64: 1, 128>}, {transform_indices = @transform_3, window_bounds = array<i64: 1, 64, 128>}]} {
    %c8_i32 = arith.constant 8 : i32
    %0 = arith.muli %arg2, %c8_i32 : i32
    %1 = tpu.assume_multiple %0, 8 : i32
    %c0_i32 = arith.constant 0 : i32
    %2 = arith.addi %1, %c0_i32 : i32
    %c0 = arith.constant 0 : index
    %3 = arith.index_cast %2 : i32 to index
    %c0_0 = arith.constant 0 : index
    %c0_1 = arith.constant 0 : index
    %4 = vector.load %arg3[%c0, %3, %c0_0, %c0_1] : memref<1x8x8x48xbf16, #tpu.memory_space<vmem>>, vector<1x8x8x48xbf16>
    %5 = vector.shape_cast %4 : vector<1x8x8x48xbf16> to vector<8x8x48xbf16>
    %6 = vector.shape_cast %5 : vector<8x8x48xbf16> to vector<64x48xbf16>
    %c0_2 = arith.constant 0 : index
    %c0_3 = arith.constant 0 : index
    %c0_4 = arith.constant 0 : index
    %7 = vector.load %arg4[%c0_2, %c0_3, %c0_4] : memref<1x48x128xbf16, #tpu.memory_space<vmem>>, vector<1x48x128xbf16>
    %8 = vector.shape_cast %7 : vector<1x48x128xbf16> to vector<48x128xbf16>
    %cst = arith.constant dense<0.000000e+00> : vector<64x128xf32>
    %9 = tpu.matmul %6, %8, %cst {dimension_numbers = #tpu.dot_dimension_numbers<[1], [0], [0], [1], [0, 0, 1, 1], [], []>} : vector<64x48xbf16>, vector<48x128xbf16>, vector<64x128xf32> -> vector<64x128xf32>
    %c0_5 = arith.constant 0 : index
    %c0_6 = arith.constant 0 : index
    %10 = vector.load %arg7[%c0_5, %c0_6] : memref<64x128xf32, #tpu.memory_space<vmem>>, vector<64x128xf32>
    tpu.vector_store %arg7[%c0_5, %c0_6], %9 {strides = array<i32>} : memref<64x128xf32, #tpu.memory_space<vmem>>, vector<64x128xf32>,
    %c0_7 = arith.constant 0 : index
    %c0_8 = arith.constant 0 : index
    %11 = vector.load %arg7[%c0_7, %c0_8] : memref<64x128xf32, #tpu.memory_space<vmem>>, vector<64x128xf32>
    %c0_9 = arith.constant 0 : index
    %c0_10 = arith.constant 0 : index
    %12 = vector.load %arg5[%c0_9, %c0_10] : memref<1x128xf32, #tpu.memory_space<vmem>>, vector<1x128xf32>
    %13 = vector.broadcast %12 : vector<1x128xf32> to vector<64x128xf32>
    %14 = arith.addf %11, %13 : vector<64x128xf32>
    %cst_11 = arith.constant 0.000000e+00 : f32
    %15 = vector.broadcast %cst_11 : f32 to vector<64x128xf32>
    %16 = arith.cmpf ogt, %14, %15 : vector<64x128xf32>
    %cst_12 = arith.constant 2.000000e-01 : f32
    %17 = vector.broadcast %cst_12 : f32 to vector<64x128xf32>
    %18 = arith.mulf %17, %14 : vector<64x128xf32>
    %19 = arith.select %16, %14, %18 : vector<64x128xi1>, vector<64x128xf32>
    %20 = arith.truncf %19 : vector<64x128xf32> to vector<64x128xbf16>
    %c0_13 = arith.constant 0 : index
    %c0_14 = arith.constant 0 : index
    %c0_15 = arith.constant 0 : index
    %21 = vector.load %arg6[%c0_13, %c0_14, %c0_15] : memref<1x64x128xbf16, #tpu.memory_space<vmem>>, vector<1x64x128xbf16>
    %22 = vector.shape_cast %21 : vector<1x64x128xbf16> to vector<64x128xbf16>
    %23 = vector.shape_cast %20 : vector<64x128xbf16> to vector<1x64x128xbf16>
    tpu.vector_store %arg6[%c0_13, %c0_14, %c0_15], %23 {strides = array<i32>} : memref<1x64x128xbf16, #tpu.memory_space<vmem>>, vector<1x64x128xbf16>,
    return
  }
  func.func @transform_0(%arg0: i32, %arg1: i32, %arg2: i32) -> (i32, i32, i32, i32) {
    %c0_i32 = arith.constant 0 : i32
    %c0_i32_0 = arith.constant 0 : i32
    %c0_i32_1 = arith.constant 0 : i32
    %c0_i32_2 = arith.constant 0 : i32
    return %arg0, %c0_i32, %c0_i32_0, %c0_i32_1 : i32, i32, i32, i32
  }
  func.func @transform_1(%arg0: i32, %arg1: i32, %arg2: i32) -> (i32, i32, i32) {
    %c0_i32 = arith.constant 0 : i32
    %c0_i32_0 = arith.constant 0 : i32
    %c0_i32_1 = arith.constant 0 : i32
    return %c0_i32, %c0_i32_0, %arg1 : i32, i32, i32
  }
  func.func @transform_2(%arg0: i32, %arg1: i32, %arg2: i32) -> (i32, i32) {
    %c0_i32 = arith.constant 0 : i32
    %c0_i32_0 = arith.constant 0 : i32
    return %c0_i32, %arg1 : i32, i32
  }
  func.func @transform_3(%arg0: i32, %arg1: i32, %arg2: i32) -> (i32, i32, i32) {
    %c0_i32 = arith.constant 0 : i32
    return %arg0, %arg2, %arg1 : i32, i32, i32
  }
}

module attributes {stable_mosaic.version = 11 : i64} {
  func.func @_conv_block_kernel(%arg0: i32, %arg1: i32, %arg2: i32, %arg3: memref<1x5x10x16xbf16, #tpu.memory_space<vmem>>, %arg4: memref<8x16x128xbf16, #tpu.memory_space<vmem>>, %arg5: memref<1x128xf32, #tpu.memory_space<vmem>>, %arg6: memref<1x16x128xbf16, #tpu.memory_space<vmem>>, %arg7: memref<16x128xf32, #tpu.memory_space<vmem>>) attributes {dimension_semantics = [#tpu.dimension_semantics<parallel>, #tpu.dimension_semantics<parallel>, #tpu.dimension_semantics<parallel>], iteration_bounds = array<i64: 2, 1, 1>, scalar_prefetch = 0 : i64, scratch_operands = 1 : i64, tpu.core_type = #tpu.core_type<tc>, window_params = [{transform_indices = @transform_0, window_bounds = array<i64: 1, 5, 10, 16>}, {transform_indices = @transform_1, window_bounds = array<i64: 8, 16, 128>}, {transform_indices = @transform_2, window_bounds = array<i64: 1, 128>}, {transform_indices = @transform_3, window_bounds = array<i64: 1, 16, 128>}]} {
    %c4_i32 = arith.constant 4 : i32
    %0 = arith.muli %arg2, %c4_i32 : i32
    %1 = tpu.assume_multiple %0, 4 : i32
    %c0_i32 = arith.constant 0 : i32
    %2 = arith.addi %1, %c0_i32 : i32
    %c0 = arith.constant 0 : index
    %3 = arith.index_cast %2 : i32 to index
    %c0_0 = arith.constant 0 : index
    %c0_1 = arith.constant 0 : index
    %4 = vector.load %arg3[%c0, %3, %c0_0, %c0_1] : memref<1x5x10x16xbf16, #tpu.memory_space<vmem>>, vector<1x4x4x16xbf16>
    %5 = vector.shape_cast %4 : vector<1x4x4x16xbf16> to vector<4x4x16xbf16>
    %6 = vector.shape_cast %5 : vector<4x4x16xbf16> to vector<16x16xbf16>
    %c0_2 = arith.constant 0 : index
    %c0_3 = arith.constant 0 : index
    %c0_4 = arith.constant 0 : index
    %7 = vector.load %arg4[%c0_2, %c0_3, %c0_4] : memref<8x16x128xbf16, #tpu.memory_space<vmem>>, vector<1x16x128xbf16>
    %8 = vector.shape_cast %7 : vector<1x16x128xbf16> to vector<16x128xbf16>
    %cst = arith.constant dense<0.000000e+00> : vector<16x128xf32>
    %9 = tpu.matmul %6, %8, %cst {dimension_numbers = #tpu.dot_dimension_numbers<[1], [0], [0], [1], [0, 0, 1, 1], [], []>} : vector<16x16xbf16>, vector<16x128xbf16>, vector<16x128xf32> -> vector<16x128xf32>
    %c0_5 = arith.constant 0 : index
    %c0_6 = arith.constant 0 : index
    %10 = vector.load %arg7[%c0_5, %c0_6] : memref<16x128xf32, #tpu.memory_space<vmem>>, vector<16x128xf32>
    tpu.vector_store %arg7[%c0_5, %c0_6], %9 {strides = array<i32>} : memref<16x128xf32, #tpu.memory_space<vmem>>, vector<16x128xf32>,
    %c0_i32_7 = arith.constant 0 : i32
    %11 = arith.addi %1, %c0_i32_7 : i32
    %c0_8 = arith.constant 0 : index
    %12 = arith.index_cast %11 : i32 to index
    %c1 = arith.constant 1 : index
    %c0_9 = arith.constant 0 : index
    %13 = vector.load %arg3[%c0_8, %12, %c1, %c0_9] : memref<1x5x10x16xbf16, #tpu.memory_space<vmem>>, vector<1x4x4x16xbf16>
    %14 = vector.shape_cast %13 : vector<1x4x4x16xbf16> to vector<4x4x16xbf16>
    %15 = vector.shape_cast %14 : vector<4x4x16xbf16> to vector<16x16xbf16>
    %c1_10 = arith.constant 1 : index
    %c0_11 = arith.constant 0 : index
    %c0_12 = arith.constant 0 : index
    %16 = vector.load %arg4[%c1_10, %c0_11, %c0_12] : memref<8x16x128xbf16, #tpu.memory_space<vmem>>, vector<1x16x128xbf16>
    %17 = vector.shape_cast %16 : vector<1x16x128xbf16> to vector<16x128xbf16>
    %cst_13 = arith.constant dense<0.000000e+00> : vector<16x128xf32>
    %18 = tpu.matmul %15, %17, %cst_13 {dimension_numbers = #tpu.dot_dimension_numbers<[1], [0], [0], [1], [0, 0, 1, 1], [], []>} : vector<16x16xbf16>, vector<16x128xbf16>, vector<16x128xf32> -> vector<16x128xf32>
    %c0_14 = arith.constant 0 : index
    %c0_15 = arith.constant 0 : index
    %19 = vector.load %arg7[%c0_14, %c0_15] : memref<16x128xf32, #tpu.memory_space<vmem>>, vector<16x128xf32>
    %20 = arith.addf %19, %18 : vector<16x128xf32>
    %c0_16 = arith.constant 0 : index
    %c0_17 = arith.constant 0 : index
    %21 = vector.load %arg7[%c0_16, %c0_17] : memref<16x128xf32, #tpu.memory_space<vmem>>, vector<16x128xf32>
    tpu.vector_store %arg7[%c0_16, %c0_17], %20 {strides = array<i32>} : memref<16x128xf32, #tpu.memory_space<vmem>>, vector<16x128xf32>,
    %c0_i32_18 = arith.constant 0 : i32
    %22 = arith.addi %1, %c0_i32_18 : i32
    %c0_19 = arith.constant 0 : index
    %23 = arith.index_cast %22 : i32 to index
    %c5 = arith.constant 5 : index
    %c0_20 = arith.constant 0 : index
    %24 = vector.load %arg3[%c0_19, %23, %c5, %c0_20] : memref<1x5x10x16xbf16, #tpu.memory_space<vmem>>, vector<1x4x4x16xbf16>
    %25 = vector.shape_cast %24 : vector<1x4x4x16xbf16> to vector<4x4x16xbf16>
    %26 = vector.shape_cast %25 : vector<4x4x16xbf16> to vector<16x16xbf16>
    %c2 = arith.constant 2 : index
    %c0_21 = arith.constant 0 : index
    %c0_22 = arith.constant 0 : index
    %27 = vector.load %arg4[%c2, %c0_21, %c0_22] : memref<8x16x128xbf16, #tpu.memory_space<vmem>>, vector<1x16x128xbf16>
    %28 = vector.shape_cast %27 : vector<1x16x128xbf16> to vector<16x128xbf16>
    %cst_23 = arith.constant dense<0.000000e+00> : vector<16x128xf32>
    %29 = tpu.matmul %26, %28, %cst_23 {dimension_numbers = #tpu.dot_dimension_numbers<[1], [0], [0], [1], [0, 0, 1, 1], [], []>} : vector<16x16xbf16>, vector<16x128xbf16>, vector<16x128xf32> -> vector<16x128xf32>
    %c0_24 = arith.constant 0 : index
    %c0_25 = arith.constant 0 : index
    %30 = vector.load %arg7[%c0_24, %c0_25] : memref<16x128xf32, #tpu.memory_space<vmem>>, vector<16x128xf32>
    %31 = arith.addf %30, %29 : vector<16x128xf32>
    %c0_26 = arith.constant 0 : index
    %c0_27 = arith.constant 0 : index
    %32 = vector.load %arg7[%c0_26, %c0_27] : memref<16x128xf32, #tpu.memory_space<vmem>>, vector<16x128xf32>
    tpu.vector_store %arg7[%c0_26, %c0_27], %31 {strides = array<i32>} : memref<16x128xf32, #tpu.memory_space<vmem>>, vector<16x128xf32>,
    %c0_i32_28 = arith.constant 0 : i32
    %33 = arith.addi %1, %c0_i32_28 : i32
    %c0_29 = arith.constant 0 : index
    %34 = arith.index_cast %33 : i32 to index
    %c6 = arith.constant 6 : index
    %c0_30 = arith.constant 0 : index
    %35 = vector.load %arg3[%c0_29, %34, %c6, %c0_30] : memref<1x5x10x16xbf16, #tpu.memory_space<vmem>>, vector<1x4x4x16xbf16>
    %36 = vector.shape_cast %35 : vector<1x4x4x16xbf16> to vector<4x4x16xbf16>
    %37 = vector.shape_cast %36 : vector<4x4x16xbf16> to vector<16x16xbf16>
    %c3 = arith.constant 3 : index
    %c0_31 = arith.constant 0 : index
    %c0_32 = arith.constant 0 : index
    %38 = vector.load %arg4[%c3, %c0_31, %c0_32] : memref<8x16x128xbf16, #tpu.memory_space<vmem>>, vector<1x16x128xbf16>
    %39 = vector.shape_cast %38 : vector<1x16x128xbf16> to vector<16x128xbf16>
    %cst_33 = arith.constant dense<0.000000e+00> : vector<16x128xf32>
    %40 = tpu.matmul %37, %39, %cst_33 {dimension_numbers = #tpu.dot_dimension_numbers<[1], [0], [0], [1], [0, 0, 1, 1], [], []>} : vector<16x16xbf16>, vector<16x128xbf16>, vector<16x128xf32> -> vector<16x128xf32>
    %c0_34 = arith.constant 0 : index
    %c0_35 = arith.constant 0 : index
    %41 = vector.load %arg7[%c0_34, %c0_35] : memref<16x128xf32, #tpu.memory_space<vmem>>, vector<16x128xf32>
    %42 = arith.addf %41, %40 : vector<16x128xf32>
    %c0_36 = arith.constant 0 : index
    %c0_37 = arith.constant 0 : index
    %43 = vector.load %arg7[%c0_36, %c0_37] : memref<16x128xf32, #tpu.memory_space<vmem>>, vector<16x128xf32>
    tpu.vector_store %arg7[%c0_36, %c0_37], %42 {strides = array<i32>} : memref<16x128xf32, #tpu.memory_space<vmem>>, vector<16x128xf32>,
    %c1_i32 = arith.constant 1 : i32
    %44 = arith.addi %1, %c1_i32 : i32
    %c0_38 = arith.constant 0 : index
    %45 = arith.index_cast %44 : i32 to index
    %c0_39 = arith.constant 0 : index
    %c0_40 = arith.constant 0 : index
    %46 = vector.load %arg3[%c0_38, %45, %c0_39, %c0_40] : memref<1x5x10x16xbf16, #tpu.memory_space<vmem>>, vector<1x4x4x16xbf16>
    %47 = vector.shape_cast %46 : vector<1x4x4x16xbf16> to vector<4x4x16xbf16>
    %48 = vector.shape_cast %47 : vector<4x4x16xbf16> to vector<16x16xbf16>
    %c4 = arith.constant 4 : index
    %c0_41 = arith.constant 0 : index
    %c0_42 = arith.constant 0 : index
    %49 = vector.load %arg4[%c4, %c0_41, %c0_42] : memref<8x16x128xbf16, #tpu.memory_space<vmem>>, vector<1x16x128xbf16>
    %50 = vector.shape_cast %49 : vector<1x16x128xbf16> to vector<16x128xbf16>
    %cst_43 = arith.constant dense<0.000000e+00> : vector<16x128xf32>
    %51 = tpu.matmul %48, %50, %cst_43 {dimension_numbers = #tpu.dot_dimension_numbers<[1], [0], [0], [1], [0, 0, 1, 1], [], []>} : vector<16x16xbf16>, vector<16x128xbf16>, vector<16x128xf32> -> vector<16x128xf32>
    %c0_44 = arith.constant 0 : index
    %c0_45 = arith.constant 0 : index
    %52 = vector.load %arg7[%c0_44, %c0_45] : memref<16x128xf32, #tpu.memory_space<vmem>>, vector<16x128xf32>
    %53 = arith.addf %52, %51 : vector<16x128xf32>
    %c0_46 = arith.constant 0 : index
    %c0_47 = arith.constant 0 : index
    %54 = vector.load %arg7[%c0_46, %c0_47] : memref<16x128xf32, #tpu.memory_space<vmem>>, vector<16x128xf32>
    tpu.vector_store %arg7[%c0_46, %c0_47], %53 {strides = array<i32>} : memref<16x128xf32, #tpu.memory_space<vmem>>, vector<16x128xf32>,
    %c1_i32_48 = arith.constant 1 : i32
    %55 = arith.addi %1, %c1_i32_48 : i32
    %c0_49 = arith.constant 0 : index
    %56 = arith.index_cast %55 : i32 to index
    %c1_50 = arith.constant 1 : index
    %c0_51 = arith.constant 0 : index
    %57 = vector.load %arg3[%c0_49, %56, %c1_50, %c0_51] : memref<1x5x10x16xbf16, #tpu.memory_space<vmem>>, vector<1x4x4x16xbf16>
    %58 = vector.shape_cast %57 : vector<1x4x4x16xbf16> to vector<4x4x16xbf16>
    %59 = vector.shape_cast %58 : vector<4x4x16xbf16> to vector<16x16xbf16>
    %c5_52 = arith.constant 5 : index
    %c0_53 = arith.constant 0 : index
    %c0_54 = arith.constant 0 : index
    %60 = vector.load %arg4[%c5_52, %c0_53, %c0_54] : memref<8x16x128xbf16, #tpu.memory_space<vmem>>, vector<1x16x128xbf16>
    %61 = vector.shape_cast %60 : vector<1x16x128xbf16> to vector<16x128xbf16>
    %cst_55 = arith.constant dense<0.000000e+00> : vector<16x128xf32>
    %62 = tpu.matmul %59, %61, %cst_55 {dimension_numbers = #tpu.dot_dimension_numbers<[1], [0], [0], [1], [0, 0, 1, 1], [], []>} : vector<16x16xbf16>, vector<16x128xbf16>, vector<16x128xf32> -> vector<16x128xf32>
    %c0_56 = arith.constant 0 : index
    %c0_57 = arith.constant 0 : index
    %63 = vector.load %arg7[%c0_56, %c0_57] : memref<16x128xf32, #tpu.memory_space<vmem>>, vector<16x128xf32>
    %64 = arith.addf %63, %62 : vector<16x128xf32>
    %c0_58 = arith.constant 0 : index
    %c0_59 = arith.constant 0 : index
    %65 = vector.load %arg7[%c0_58, %c0_59] : memref<16x128xf32, #tpu.memory_space<vmem>>, vector<16x128xf32>
    tpu.vector_store %arg7[%c0_58, %c0_59], %64 {strides = array<i32>} : memref<16x128xf32, #tpu.memory_space<vmem>>, vector<16x128xf32>,
    %c1_i32_60 = arith.constant 1 : i32
    %66 = arith.addi %1, %c1_i32_60 : i32
    %c0_61 = arith.constant 0 : index
    %67 = arith.index_cast %66 : i32 to index
    %c5_62 = arith.constant 5 : index
    %c0_63 = arith.constant 0 : index
    %68 = vector.load %arg3[%c0_61, %67, %c5_62, %c0_63] : memref<1x5x10x16xbf16, #tpu.memory_space<vmem>>, vector<1x4x4x16xbf16>
    %69 = vector.shape_cast %68 : vector<1x4x4x16xbf16> to vector<4x4x16xbf16>
    %70 = vector.shape_cast %69 : vector<4x4x16xbf16> to vector<16x16xbf16>
    %c6_64 = arith.constant 6 : index
    %c0_65 = arith.constant 0 : index
    %c0_66 = arith.constant 0 : index
    %71 = vector.load %arg4[%c6_64, %c0_65, %c0_66] : memref<8x16x128xbf16, #tpu.memory_space<vmem>>, vector<1x16x128xbf16>
    %72 = vector.shape_cast %71 : vector<1x16x128xbf16> to vector<16x128xbf16>
    %cst_67 = arith.constant dense<0.000000e+00> : vector<16x128xf32>
    %73 = tpu.matmul %70, %72, %cst_67 {dimension_numbers = #tpu.dot_dimension_numbers<[1], [0], [0], [1], [0, 0, 1, 1], [], []>} : vector<16x16xbf16>, vector<16x128xbf16>, vector<16x128xf32> -> vector<16x128xf32>
    %c0_68 = arith.constant 0 : index
    %c0_69 = arith.constant 0 : index
    %74 = vector.load %arg7[%c0_68, %c0_69] : memref<16x128xf32, #tpu.memory_space<vmem>>, vector<16x128xf32>
    %75 = arith.addf %74, %73 : vector<16x128xf32>
    %c0_70 = arith.constant 0 : index
    %c0_71 = arith.constant 0 : index
    %76 = vector.load %arg7[%c0_70, %c0_71] : memref<16x128xf32, #tpu.memory_space<vmem>>, vector<16x128xf32>
    tpu.vector_store %arg7[%c0_70, %c0_71], %75 {strides = array<i32>} : memref<16x128xf32, #tpu.memory_space<vmem>>, vector<16x128xf32>,
    %c1_i32_72 = arith.constant 1 : i32
    %77 = arith.addi %1, %c1_i32_72 : i32
    %c0_73 = arith.constant 0 : index
    %78 = arith.index_cast %77 : i32 to index
    %c6_74 = arith.constant 6 : index
    %c0_75 = arith.constant 0 : index
    %79 = vector.load %arg3[%c0_73, %78, %c6_74, %c0_75] : memref<1x5x10x16xbf16, #tpu.memory_space<vmem>>, vector<1x4x4x16xbf16>
    %80 = vector.shape_cast %79 : vector<1x4x4x16xbf16> to vector<4x4x16xbf16>
    %81 = vector.shape_cast %80 : vector<4x4x16xbf16> to vector<16x16xbf16>
    %c7 = arith.constant 7 : index
    %c0_76 = arith.constant 0 : index
    %c0_77 = arith.constant 0 : index
    %82 = vector.load %arg4[%c7, %c0_76, %c0_77] : memref<8x16x128xbf16, #tpu.memory_space<vmem>>, vector<1x16x128xbf16>
    %83 = vector.shape_cast %82 : vector<1x16x128xbf16> to vector<16x128xbf16>
    %cst_78 = arith.constant dense<0.000000e+00> : vector<16x128xf32>
    %84 = tpu.matmul %81, %83, %cst_78 {dimension_numbers = #tpu.dot_dimension_numbers<[1], [0], [0], [1], [0, 0, 1, 1], [], []>} : vector<16x16xbf16>, vector<16x128xbf16>, vector<16x128xf32> -> vector<16x128xf32>
    %c0_79 = arith.constant 0 : index
    %c0_80 = arith.constant 0 : index
    %85 = vector.load %arg7[%c0_79, %c0_80] : memref<16x128xf32, #tpu.memory_space<vmem>>, vector<16x128xf32>
    %86 = arith.addf %85, %84 : vector<16x128xf32>
    %c0_81 = arith.constant 0 : index
    %c0_82 = arith.constant 0 : index
    %87 = vector.load %arg7[%c0_81, %c0_82] : memref<16x128xf32, #tpu.memory_space<vmem>>, vector<16x128xf32>
    tpu.vector_store %arg7[%c0_81, %c0_82], %86 {strides = array<i32>} : memref<16x128xf32, #tpu.memory_space<vmem>>, vector<16x128xf32>,
    %c0_83 = arith.constant 0 : index
    %c0_84 = arith.constant 0 : index
    %88 = vector.load %arg7[%c0_83, %c0_84] : memref<16x128xf32, #tpu.memory_space<vmem>>, vector<16x128xf32>
    %c0_85 = arith.constant 0 : index
    %c0_86 = arith.constant 0 : index
    %89 = vector.load %arg5[%c0_85, %c0_86] : memref<1x128xf32, #tpu.memory_space<vmem>>, vector<1x128xf32>
    %90 = vector.broadcast %89 : vector<1x128xf32> to vector<16x128xf32>
    %91 = arith.addf %88, %90 : vector<16x128xf32>
    %cst_87 = arith.constant dense<0.000000e+00> : vector<128xf32>
    %92 = vector.multi_reduction <add>, %91, %cst_87 [0] : vector<16x128xf32> to vector<128xf32>
    %93 = vector.shape_cast %92 : vector<128xf32> to vector<1x128xf32>
    %94 = arith.mulf %91, %91 : vector<16x128xf32>
    %cst_88 = arith.constant dense<0.000000e+00> : vector<128xf32>
    %95 = vector.multi_reduction <add>, %94, %cst_88 [0] : vector<16x128xf32> to vector<128xf32>
    %96 = vector.shape_cast %95 : vector<128xf32> to vector<1x128xf32>
    %cst_89 = arith.constant 6.250000e-02 : f32
    %97 = vector.broadcast %cst_89 : f32 to vector<1x128xf32>
    %98 = arith.mulf %93, %97 : vector<1x128xf32>
    %cst_90 = arith.constant 6.250000e-02 : f32
    %99 = vector.broadcast %cst_90 : f32 to vector<1x128xf32>
    %100 = arith.mulf %96, %99 : vector<1x128xf32>
    %101 = arith.mulf %98, %98 : vector<1x128xf32>
    %102 = arith.subf %100, %101 : vector<1x128xf32>
    %cst_91 = arith.constant 0.000000e+00 : f32
    %103 = vector.broadcast %cst_91 : f32 to vector<1x128xf32>
    %104 = arith.maximumf %102, %103 : vector<1x128xf32>
    %105 = vector.broadcast %98 : vector<1x128xf32> to vector<16x128xf32>
    %106 = arith.subf %91, %105 : vector<16x128xf32>
    %cst_92 = arith.constant 9.99999974E-6 : f32
    %107 = vector.broadcast %cst_92 : f32 to vector<1x128xf32>
    %108 = arith.addf %104, %107 : vector<1x128xf32>
    %109 = math.rsqrt %108 : vector<1x128xf32>
    %110 = vector.broadcast %109 : vector<1x128xf32> to vector<16x128xf32>
    %111 = arith.mulf %106, %110 : vector<16x128xf32>
    %cst_93 = arith.constant 0.000000e+00 : f32
    %112 = vector.broadcast %cst_93 : f32 to vector<16x128xf32>
    %113 = arith.cmpf ogt, %111, %112 : vector<16x128xf32>
    %cst_94 = arith.constant 2.000000e-01 : f32
    %114 = vector.broadcast %cst_94 : f32 to vector<16x128xf32>
    %115 = arith.mulf %114, %111 : vector<16x128xf32>
    %116 = arith.select %113, %111, %115 : vector<16x128xi1>, vector<16x128xf32>
    %117 = arith.truncf %116 : vector<16x128xf32> to vector<16x128xbf16>
    %c0_95 = arith.constant 0 : index
    %c0_96 = arith.constant 0 : index
    %c0_97 = arith.constant 0 : index
    %118 = vector.load %arg6[%c0_95, %c0_96, %c0_97] : memref<1x16x128xbf16, #tpu.memory_space<vmem>>, vector<1x16x128xbf16>
    %119 = vector.shape_cast %118 : vector<1x16x128xbf16> to vector<16x128xbf16>
    %120 = vector.shape_cast %117 : vector<16x128xbf16> to vector<1x16x128xbf16>
    tpu.vector_store %arg6[%c0_95, %c0_96, %c0_97], %120 {strides = array<i32>} : memref<1x16x128xbf16, #tpu.memory_space<vmem>>, vector<1x16x128xbf16>,
    return
  }
  func.func @transform_0(%arg0: i32, %arg1: i32, %arg2: i32) -> (i32, i32, i32, i32) {
    %c0_i32 = arith.constant 0 : i32
    %c0_i32_0 = arith.constant 0 : i32
    %c0_i32_1 = arith.constant 0 : i32
    %c0_i32_2 = arith.constant 0 : i32
    return %arg0, %c0_i32, %c0_i32_0, %c0_i32_1 : i32, i32, i32, i32
  }
  func.func @transform_1(%arg0: i32, %arg1: i32, %arg2: i32) -> (i32, i32, i32) {
    %c0_i32 = arith.constant 0 : i32
    %c0_i32_0 = arith.constant 0 : i32
    %c0_i32_1 = arith.constant 0 : i32
    return %c0_i32, %c0_i32_0, %arg1 : i32, i32, i32
  }
  func.func @transform_2(%arg0: i32, %arg1: i32, %arg2: i32) -> (i32, i32) {
    %c0_i32 = arith.constant 0 : i32
    %c0_i32_0 = arith.constant 0 : i32
    return %c0_i32, %arg1 : i32, i32
  }
  func.func @transform_3(%arg0: i32, %arg1: i32, %arg2: i32) -> (i32, i32, i32) {
    %c0_i32 = arith.constant 0 : i32
    return %arg0, %arg2, %arg1 : i32, i32, i32
  }
}

module attributes {stable_mosaic.version = 11 : i64} {
  func.func @_conv_block_kernel(%arg0: i32, %arg1: i32, %arg2: i32, %arg3: memref<1x3x6x32xbf16, #tpu.memory_space<vmem>>, %arg4: memref<8x32x128xbf16, #tpu.memory_space<vmem>>, %arg5: memref<1x128xf32, #tpu.memory_space<vmem>>, %arg6: memref<1x4x128xbf16, #tpu.memory_space<vmem>>, %arg7: memref<4x128xf32, #tpu.memory_space<vmem>>) attributes {dimension_semantics = [#tpu.dimension_semantics<parallel>, #tpu.dimension_semantics<parallel>, #tpu.dimension_semantics<parallel>], iteration_bounds = array<i64: 2, 1, 1>, scalar_prefetch = 0 : i64, scratch_operands = 1 : i64, tpu.core_type = #tpu.core_type<tc>, window_params = [{transform_indices = @transform_0, window_bounds = array<i64: 1, 3, 6, 32>}, {transform_indices = @transform_1, window_bounds = array<i64: 8, 32, 128>}, {transform_indices = @transform_2, window_bounds = array<i64: 1, 128>}, {transform_indices = @transform_3, window_bounds = array<i64: 1, 4, 128>}]} {
    %c2_i32 = arith.constant 2 : i32
    %0 = arith.muli %arg2, %c2_i32 : i32
    %1 = tpu.assume_multiple %0, 2 : i32
    %c0_i32 = arith.constant 0 : i32
    %2 = arith.addi %1, %c0_i32 : i32
    %c0 = arith.constant 0 : index
    %3 = arith.index_cast %2 : i32 to index
    %c0_0 = arith.constant 0 : index
    %c0_1 = arith.constant 0 : index
    %4 = vector.load %arg3[%c0, %3, %c0_0, %c0_1] : memref<1x3x6x32xbf16, #tpu.memory_space<vmem>>, vector<1x2x2x32xbf16>
    %5 = vector.shape_cast %4 : vector<1x2x2x32xbf16> to vector<2x2x32xbf16>
    %6 = vector.shape_cast %5 : vector<2x2x32xbf16> to vector<4x32xbf16>
    %c0_2 = arith.constant 0 : index
    %c0_3 = arith.constant 0 : index
    %c0_4 = arith.constant 0 : index
    %7 = vector.load %arg4[%c0_2, %c0_3, %c0_4] : memref<8x32x128xbf16, #tpu.memory_space<vmem>>, vector<1x32x128xbf16>
    %8 = vector.shape_cast %7 : vector<1x32x128xbf16> to vector<32x128xbf16>
    %cst = arith.constant dense<0.000000e+00> : vector<4x128xf32>
    %9 = tpu.matmul %6, %8, %cst {dimension_numbers = #tpu.dot_dimension_numbers<[1], [0], [0], [1], [0, 0, 1, 1], [], []>} : vector<4x32xbf16>, vector<32x128xbf16>, vector<4x128xf32> -> vector<4x128xf32>
    %c0_5 = arith.constant 0 : index
    %c0_6 = arith.constant 0 : index
    %10 = vector.load %arg7[%c0_5, %c0_6] : memref<4x128xf32, #tpu.memory_space<vmem>>, vector<4x128xf32>
    tpu.vector_store %arg7[%c0_5, %c0_6], %9 {strides = array<i32>} : memref<4x128xf32, #tpu.memory_space<vmem>>, vector<4x128xf32>,
    %c0_i32_7 = arith.constant 0 : i32
    %11 = arith.addi %1, %c0_i32_7 : i32
    %c0_8 = arith.constant 0 : index
    %12 = arith.index_cast %11 : i32 to index
    %c1 = arith.constant 1 : index
    %c0_9 = arith.constant 0 : index
    %13 = vector.load %arg3[%c0_8, %12, %c1, %c0_9] : memref<1x3x6x32xbf16, #tpu.memory_space<vmem>>, vector<1x2x2x32xbf16>
    %14 = vector.shape_cast %13 : vector<1x2x2x32xbf16> to vector<2x2x32xbf16>
    %15 = vector.shape_cast %14 : vector<2x2x32xbf16> to vector<4x32xbf16>
    %c1_10 = arith.constant 1 : index
    %c0_11 = arith.constant 0 : index
    %c0_12 = arith.constant 0 : index
    %16 = vector.load %arg4[%c1_10, %c0_11, %c0_12] : memref<8x32x128xbf16, #tpu.memory_space<vmem>>, vector<1x32x128xbf16>
    %17 = vector.shape_cast %16 : vector<1x32x128xbf16> to vector<32x128xbf16>
    %cst_13 = arith.constant dense<0.000000e+00> : vector<4x128xf32>
    %18 = tpu.matmul %15, %17, %cst_13 {dimension_numbers = #tpu.dot_dimension_numbers<[1], [0], [0], [1], [0, 0, 1, 1], [], []>} : vector<4x32xbf16>, vector<32x128xbf16>, vector<4x128xf32> -> vector<4x128xf32>
    %c0_14 = arith.constant 0 : index
    %c0_15 = arith.constant 0 : index
    %19 = vector.load %arg7[%c0_14, %c0_15] : memref<4x128xf32, #tpu.memory_space<vmem>>, vector<4x128xf32>
    %20 = arith.addf %19, %18 : vector<4x128xf32>
    %c0_16 = arith.constant 0 : index
    %c0_17 = arith.constant 0 : index
    %21 = vector.load %arg7[%c0_16, %c0_17] : memref<4x128xf32, #tpu.memory_space<vmem>>, vector<4x128xf32>
    tpu.vector_store %arg7[%c0_16, %c0_17], %20 {strides = array<i32>} : memref<4x128xf32, #tpu.memory_space<vmem>>, vector<4x128xf32>,
    %c0_i32_18 = arith.constant 0 : i32
    %22 = arith.addi %1, %c0_i32_18 : i32
    %c0_19 = arith.constant 0 : index
    %23 = arith.index_cast %22 : i32 to index
    %c3 = arith.constant 3 : index
    %c0_20 = arith.constant 0 : index
    %24 = vector.load %arg3[%c0_19, %23, %c3, %c0_20] : memref<1x3x6x32xbf16, #tpu.memory_space<vmem>>, vector<1x2x2x32xbf16>
    %25 = vector.shape_cast %24 : vector<1x2x2x32xbf16> to vector<2x2x32xbf16>
    %26 = vector.shape_cast %25 : vector<2x2x32xbf16> to vector<4x32xbf16>
    %c2 = arith.constant 2 : index
    %c0_21 = arith.constant 0 : index
    %c0_22 = arith.constant 0 : index
    %27 = vector.load %arg4[%c2, %c0_21, %c0_22] : memref<8x32x128xbf16, #tpu.memory_space<vmem>>, vector<1x32x128xbf16>
    %28 = vector.shape_cast %27 : vector<1x32x128xbf16> to vector<32x128xbf16>
    %cst_23 = arith.constant dense<0.000000e+00> : vector<4x128xf32>
    %29 = tpu.matmul %26, %28, %cst_23 {dimension_numbers = #tpu.dot_dimension_numbers<[1], [0], [0], [1], [0, 0, 1, 1], [], []>} : vector<4x32xbf16>, vector<32x128xbf16>, vector<4x128xf32> -> vector<4x128xf32>
    %c0_24 = arith.constant 0 : index
    %c0_25 = arith.constant 0 : index
    %30 = vector.load %arg7[%c0_24, %c0_25] : memref<4x128xf32, #tpu.memory_space<vmem>>, vector<4x128xf32>
    %31 = arith.addf %30, %29 : vector<4x128xf32>
    %c0_26 = arith.constant 0 : index
    %c0_27 = arith.constant 0 : index
    %32 = vector.load %arg7[%c0_26, %c0_27] : memref<4x128xf32, #tpu.memory_space<vmem>>, vector<4x128xf32>
    tpu.vector_store %arg7[%c0_26, %c0_27], %31 {strides = array<i32>} : memref<4x128xf32, #tpu.memory_space<vmem>>, vector<4x128xf32>,
    %c0_i32_28 = arith.constant 0 : i32
    %33 = arith.addi %1, %c0_i32_28 : i32
    %c0_29 = arith.constant 0 : index
    %34 = arith.index_cast %33 : i32 to index
    %c4 = arith.constant 4 : index
    %c0_30 = arith.constant 0 : index
    %35 = vector.load %arg3[%c0_29, %34, %c4, %c0_30] : memref<1x3x6x32xbf16, #tpu.memory_space<vmem>>, vector<1x2x2x32xbf16>
    %36 = vector.shape_cast %35 : vector<1x2x2x32xbf16> to vector<2x2x32xbf16>
    %37 = vector.shape_cast %36 : vector<2x2x32xbf16> to vector<4x32xbf16>
    %c3_31 = arith.constant 3 : index
    %c0_32 = arith.constant 0 : index
    %c0_33 = arith.constant 0 : index
    %38 = vector.load %arg4[%c3_31, %c0_32, %c0_33] : memref<8x32x128xbf16, #tpu.memory_space<vmem>>, vector<1x32x128xbf16>
    %39 = vector.shape_cast %38 : vector<1x32x128xbf16> to vector<32x128xbf16>
    %cst_34 = arith.constant dense<0.000000e+00> : vector<4x128xf32>
    %40 = tpu.matmul %37, %39, %cst_34 {dimension_numbers = #tpu.dot_dimension_numbers<[1], [0], [0], [1], [0, 0, 1, 1], [], []>} : vector<4x32xbf16>, vector<32x128xbf16>, vector<4x128xf32> -> vector<4x128xf32>
    %c0_35 = arith.constant 0 : index
    %c0_36 = arith.constant 0 : index
    %41 = vector.load %arg7[%c0_35, %c0_36] : memref<4x128xf32, #tpu.memory_space<vmem>>, vector<4x128xf32>
    %42 = arith.addf %41, %40 : vector<4x128xf32>
    %c0_37 = arith.constant 0 : index
    %c0_38 = arith.constant 0 : index
    %43 = vector.load %arg7[%c0_37, %c0_38] : memref<4x128xf32, #tpu.memory_space<vmem>>, vector<4x128xf32>
    tpu.vector_store %arg7[%c0_37, %c0_38], %42 {strides = array<i32>} : memref<4x128xf32, #tpu.memory_space<vmem>>, vector<4x128xf32>,
    %c1_i32 = arith.constant 1 : i32
    %44 = arith.addi %1, %c1_i32 : i32
    %c0_39 = arith.constant 0 : index
    %45 = arith.index_cast %44 : i32 to index
    %c0_40 = arith.constant 0 : index
    %c0_41 = arith.constant 0 : index
    %46 = vector.load %arg3[%c0_39, %45, %c0_40, %c0_41] : memref<1x3x6x32xbf16, #tpu.memory_space<vmem>>, vector<1x2x2x32xbf16>
    %47 = vector.shape_cast %46 : vector<1x2x2x32xbf16> to vector<2x2x32xbf16>
    %48 = vector.shape_cast %47 : vector<2x2x32xbf16> to vector<4x32xbf16>
    %c4_42 = arith.constant 4 : index
    %c0_43 = arith.constant 0 : index
    %c0_44 = arith.constant 0 : index
    %49 = vector.load %arg4[%c4_42, %c0_43, %c0_44] : memref<8x32x128xbf16, #tpu.memory_space<vmem>>, vector<1x32x128xbf16>
    %50 = vector.shape_cast %49 : vector<1x32x128xbf16> to vector<32x128xbf16>
    %cst_45 = arith.constant dense<0.000000e+00> : vector<4x128xf32>
    %51 = tpu.matmul %48, %50, %cst_45 {dimension_numbers = #tpu.dot_dimension_numbers<[1], [0], [0], [1], [0, 0, 1, 1], [], []>} : vector<4x32xbf16>, vector<32x128xbf16>, vector<4x128xf32> -> vector<4x128xf32>
    %c0_46 = arith.constant 0 : index
    %c0_47 = arith.constant 0 : index
    %52 = vector.load %arg7[%c0_46, %c0_47] : memref<4x128xf32, #tpu.memory_space<vmem>>, vector<4x128xf32>
    %53 = arith.addf %52, %51 : vector<4x128xf32>
    %c0_48 = arith.constant 0 : index
    %c0_49 = arith.constant 0 : index
    %54 = vector.load %arg7[%c0_48, %c0_49] : memref<4x128xf32, #tpu.memory_space<vmem>>, vector<4x128xf32>
    tpu.vector_store %arg7[%c0_48, %c0_49], %53 {strides = array<i32>} : memref<4x128xf32, #tpu.memory_space<vmem>>, vector<4x128xf32>,
    %c1_i32_50 = arith.constant 1 : i32
    %55 = arith.addi %1, %c1_i32_50 : i32
    %c0_51 = arith.constant 0 : index
    %56 = arith.index_cast %55 : i32 to index
    %c1_52 = arith.constant 1 : index
    %c0_53 = arith.constant 0 : index
    %57 = vector.load %arg3[%c0_51, %56, %c1_52, %c0_53] : memref<1x3x6x32xbf16, #tpu.memory_space<vmem>>, vector<1x2x2x32xbf16>
    %58 = vector.shape_cast %57 : vector<1x2x2x32xbf16> to vector<2x2x32xbf16>
    %59 = vector.shape_cast %58 : vector<2x2x32xbf16> to vector<4x32xbf16>
    %c5 = arith.constant 5 : index
    %c0_54 = arith.constant 0 : index
    %c0_55 = arith.constant 0 : index
    %60 = vector.load %arg4[%c5, %c0_54, %c0_55] : memref<8x32x128xbf16, #tpu.memory_space<vmem>>, vector<1x32x128xbf16>
    %61 = vector.shape_cast %60 : vector<1x32x128xbf16> to vector<32x128xbf16>
    %cst_56 = arith.constant dense<0.000000e+00> : vector<4x128xf32>
    %62 = tpu.matmul %59, %61, %cst_56 {dimension_numbers = #tpu.dot_dimension_numbers<[1], [0], [0], [1], [0, 0, 1, 1], [], []>} : vector<4x32xbf16>, vector<32x128xbf16>, vector<4x128xf32> -> vector<4x128xf32>
    %c0_57 = arith.constant 0 : index
    %c0_58 = arith.constant 0 : index
    %63 = vector.load %arg7[%c0_57, %c0_58] : memref<4x128xf32, #tpu.memory_space<vmem>>, vector<4x128xf32>
    %64 = arith.addf %63, %62 : vector<4x128xf32>
    %c0_59 = arith.constant 0 : index
    %c0_60 = arith.constant 0 : index
    %65 = vector.load %arg7[%c0_59, %c0_60] : memref<4x128xf32, #tpu.memory_space<vmem>>, vector<4x128xf32>
    tpu.vector_store %arg7[%c0_59, %c0_60], %64 {strides = array<i32>} : memref<4x128xf32, #tpu.memory_space<vmem>>, vector<4x128xf32>,
    %c1_i32_61 = arith.constant 1 : i32
    %66 = arith.addi %1, %c1_i32_61 : i32
    %c0_62 = arith.constant 0 : index
    %67 = arith.index_cast %66 : i32 to index
    %c3_63 = arith.constant 3 : index
    %c0_64 = arith.constant 0 : index
    %68 = vector.load %arg3[%c0_62, %67, %c3_63, %c0_64] : memref<1x3x6x32xbf16, #tpu.memory_space<vmem>>, vector<1x2x2x32xbf16>
    %69 = vector.shape_cast %68 : vector<1x2x2x32xbf16> to vector<2x2x32xbf16>
    %70 = vector.shape_cast %69 : vector<2x2x32xbf16> to vector<4x32xbf16>
    %c6 = arith.constant 6 : index
    %c0_65 = arith.constant 0 : index
    %c0_66 = arith.constant 0 : index
    %71 = vector.load %arg4[%c6, %c0_65, %c0_66] : memref<8x32x128xbf16, #tpu.memory_space<vmem>>, vector<1x32x128xbf16>
    %72 = vector.shape_cast %71 : vector<1x32x128xbf16> to vector<32x128xbf16>
    %cst_67 = arith.constant dense<0.000000e+00> : vector<4x128xf32>
    %73 = tpu.matmul %70, %72, %cst_67 {dimension_numbers = #tpu.dot_dimension_numbers<[1], [0], [0], [1], [0, 0, 1, 1], [], []>} : vector<4x32xbf16>, vector<32x128xbf16>, vector<4x128xf32> -> vector<4x128xf32>
    %c0_68 = arith.constant 0 : index
    %c0_69 = arith.constant 0 : index
    %74 = vector.load %arg7[%c0_68, %c0_69] : memref<4x128xf32, #tpu.memory_space<vmem>>, vector<4x128xf32>
    %75 = arith.addf %74, %73 : vector<4x128xf32>
    %c0_70 = arith.constant 0 : index
    %c0_71 = arith.constant 0 : index
    %76 = vector.load %arg7[%c0_70, %c0_71] : memref<4x128xf32, #tpu.memory_space<vmem>>, vector<4x128xf32>
    tpu.vector_store %arg7[%c0_70, %c0_71], %75 {strides = array<i32>} : memref<4x128xf32, #tpu.memory_space<vmem>>, vector<4x128xf32>,
    %c1_i32_72 = arith.constant 1 : i32
    %77 = arith.addi %1, %c1_i32_72 : i32
    %c0_73 = arith.constant 0 : index
    %78 = arith.index_cast %77 : i32 to index
    %c4_74 = arith.constant 4 : index
    %c0_75 = arith.constant 0 : index
    %79 = vector.load %arg3[%c0_73, %78, %c4_74, %c0_75] : memref<1x3x6x32xbf16, #tpu.memory_space<vmem>>, vector<1x2x2x32xbf16>
    %80 = vector.shape_cast %79 : vector<1x2x2x32xbf16> to vector<2x2x32xbf16>
    %81 = vector.shape_cast %80 : vector<2x2x32xbf16> to vector<4x32xbf16>
    %c7 = arith.constant 7 : index
    %c0_76 = arith.constant 0 : index
    %c0_77 = arith.constant 0 : index
    %82 = vector.load %arg4[%c7, %c0_76, %c0_77] : memref<8x32x128xbf16, #tpu.memory_space<vmem>>, vector<1x32x128xbf16>
    %83 = vector.shape_cast %82 : vector<1x32x128xbf16> to vector<32x128xbf16>
    %cst_78 = arith.constant dense<0.000000e+00> : vector<4x128xf32>
    %84 = tpu.matmul %81, %83, %cst_78 {dimension_numbers = #tpu.dot_dimension_numbers<[1], [0], [0], [1], [0, 0, 1, 1], [], []>} : vector<4x32xbf16>, vector<32x128xbf16>, vector<4x128xf32> -> vector<4x128xf32>
    %c0_79 = arith.constant 0 : index
    %c0_80 = arith.constant 0 : index
    %85 = vector.load %arg7[%c0_79, %c0_80] : memref<4x128xf32, #tpu.memory_space<vmem>>, vector<4x128xf32>
    %86 = arith.addf %85, %84 : vector<4x128xf32>
    %c0_81 = arith.constant 0 : index
    %c0_82 = arith.constant 0 : index
    %87 = vector.load %arg7[%c0_81, %c0_82] : memref<4x128xf32, #tpu.memory_space<vmem>>, vector<4x128xf32>
    tpu.vector_store %arg7[%c0_81, %c0_82], %86 {strides = array<i32>} : memref<4x128xf32, #tpu.memory_space<vmem>>, vector<4x128xf32>,
    %c0_83 = arith.constant 0 : index
    %c0_84 = arith.constant 0 : index
    %88 = vector.load %arg7[%c0_83, %c0_84] : memref<4x128xf32, #tpu.memory_space<vmem>>, vector<4x128xf32>
    %c0_85 = arith.constant 0 : index
    %c0_86 = arith.constant 0 : index
    %89 = vector.load %arg5[%c0_85, %c0_86] : memref<1x128xf32, #tpu.memory_space<vmem>>, vector<1x128xf32>
    %90 = vector.broadcast %89 : vector<1x128xf32> to vector<4x128xf32>
    %91 = arith.addf %88, %90 : vector<4x128xf32>
    %cst_87 = arith.constant dense<0.000000e+00> : vector<128xf32>
    %92 = vector.multi_reduction <add>, %91, %cst_87 [0] : vector<4x128xf32> to vector<128xf32>
    %93 = vector.shape_cast %92 : vector<128xf32> to vector<1x128xf32>
    %94 = arith.mulf %91, %91 : vector<4x128xf32>
    %cst_88 = arith.constant dense<0.000000e+00> : vector<128xf32>
    %95 = vector.multi_reduction <add>, %94, %cst_88 [0] : vector<4x128xf32> to vector<128xf32>
    %96 = vector.shape_cast %95 : vector<128xf32> to vector<1x128xf32>
    %cst_89 = arith.constant 2.500000e-01 : f32
    %97 = vector.broadcast %cst_89 : f32 to vector<1x128xf32>
    %98 = arith.mulf %93, %97 : vector<1x128xf32>
    %cst_90 = arith.constant 2.500000e-01 : f32
    %99 = vector.broadcast %cst_90 : f32 to vector<1x128xf32>
    %100 = arith.mulf %96, %99 : vector<1x128xf32>
    %101 = arith.mulf %98, %98 : vector<1x128xf32>
    %102 = arith.subf %100, %101 : vector<1x128xf32>
    %cst_91 = arith.constant 0.000000e+00 : f32
    %103 = vector.broadcast %cst_91 : f32 to vector<1x128xf32>
    %104 = arith.maximumf %102, %103 : vector<1x128xf32>
    %105 = vector.broadcast %98 : vector<1x128xf32> to vector<4x128xf32>
    %106 = arith.subf %91, %105 : vector<4x128xf32>
    %cst_92 = arith.constant 9.99999974E-6 : f32
    %107 = vector.broadcast %cst_92 : f32 to vector<1x128xf32>
    %108 = arith.addf %104, %107 : vector<1x128xf32>
    %109 = math.rsqrt %108 : vector<1x128xf32>
    %110 = vector.broadcast %109 : vector<1x128xf32> to vector<4x128xf32>
    %111 = arith.mulf %106, %110 : vector<4x128xf32>
    %cst_93 = arith.constant 0.000000e+00 : f32
    %112 = vector.broadcast %cst_93 : f32 to vector<4x128xf32>
    %113 = arith.cmpf ogt, %111, %112 : vector<4x128xf32>
    %cst_94 = arith.constant 2.000000e-01 : f32
    %114 = vector.broadcast %cst_94 : f32 to vector<4x128xf32>
    %115 = arith.mulf %114, %111 : vector<4x128xf32>
    %116 = arith.select %113, %111, %115 : vector<4x128xi1>, vector<4x128xf32>
    %117 = arith.truncf %116 : vector<4x128xf32> to vector<4x128xbf16>
    %c0_95 = arith.constant 0 : index
    %c0_96 = arith.constant 0 : index
    %c0_97 = arith.constant 0 : index
    %118 = vector.load %arg6[%c0_95, %c0_96, %c0_97] : memref<1x4x128xbf16, #tpu.memory_space<vmem>>, vector<1x4x128xbf16>
    %119 = vector.shape_cast %118 : vector<1x4x128xbf16> to vector<4x128xbf16>
    %120 = vector.shape_cast %117 : vector<4x128xbf16> to vector<1x4x128xbf16>
    tpu.vector_store %arg6[%c0_95, %c0_96, %c0_97], %120 {strides = array<i32>} : memref<1x4x128xbf16, #tpu.memory_space<vmem>>, vector<1x4x128xbf16>,
    return
  }
  func.func @transform_0(%arg0: i32, %arg1: i32, %arg2: i32) -> (i32, i32, i32, i32) {
    %c0_i32 = arith.constant 0 : i32
    %c0_i32_0 = arith.constant 0 : i32
    %c0_i32_1 = arith.constant 0 : i32
    %c0_i32_2 = arith.constant 0 : i32
    return %arg0, %c0_i32, %c0_i32_0, %c0_i32_1 : i32, i32, i32, i32
  }
  func.func @transform_1(%arg0: i32, %arg1: i32, %arg2: i32) -> (i32, i32, i32) {
    %c0_i32 = arith.constant 0 : i32
    %c0_i32_0 = arith.constant 0 : i32
    %c0_i32_1 = arith.constant 0 : i32
    return %c0_i32, %c0_i32_0, %arg1 : i32, i32, i32
  }
  func.func @transform_2(%arg0: i32, %arg1: i32, %arg2: i32) -> (i32, i32) {
    %c0_i32 = arith.constant 0 : i32
    %c0_i32_0 = arith.constant 0 : i32
    return %c0_i32, %arg1 : i32, i32
  }
  func.func @transform_3(%arg0: i32, %arg1: i32, %arg2: i32) -> (i32, i32, i32) {
    %c0_i32 = arith.constant 0 : i32
    return %arg0, %arg2, %arg1 : i32, i32, i32
  }
}

module attributes {stable_mosaic.version = 11 : i64} {
  func.func @_conv_block_kernel(%arg0: i32, %arg1: i32, %arg2: i32, %arg3: memref<1x4x4x32xbf16, #tpu.memory_space<vmem>>, %arg4: memref<16x32x128xbf16, #tpu.memory_space<vmem>>, %arg5: memref<1x128xf32, #tpu.memory_space<vmem>>, %arg6: memref<1x1x128xbf16, #tpu.memory_space<vmem>>, %arg7: memref<1x128xf32, #tpu.memory_space<vmem>>) attributes {dimension_semantics = [#tpu.dimension_semantics<parallel>, #tpu.dimension_semantics<parallel>, #tpu.dimension_semantics<parallel>], iteration_bounds = array<i64: 2, 1, 1>, scalar_prefetch = 0 : i64, scratch_operands = 1 : i64, tpu.core_type = #tpu.core_type<tc>, window_params = [{transform_indices = @transform_0, window_bounds = array<i64: 1, 4, 4, 32>}, {transform_indices = @transform_1, window_bounds = array<i64: 16, 32, 128>}, {transform_indices = @transform_2, window_bounds = array<i64: 1, 128>}, {transform_indices = @transform_3, window_bounds = array<i64: 1, 1, 128>}]} {
    %c1_i32 = arith.constant 1 : i32
    %0 = arith.muli %arg2, %c1_i32 : i32
    %1 = tpu.assume_multiple %0, 1 : i32
    %c0_i32 = arith.constant 0 : i32
    %2 = arith.addi %1, %c0_i32 : i32
    %c0 = arith.constant 0 : index
    %3 = arith.index_cast %2 : i32 to index
    %c0_0 = arith.constant 0 : index
    %c0_1 = arith.constant 0 : index
    %4 = vector.load %arg3[%c0, %3, %c0_0, %c0_1] : memref<1x4x4x32xbf16, #tpu.memory_space<vmem>>, vector<1x1x1x32xbf16>
    %5 = vector.shape_cast %4 : vector<1x1x1x32xbf16> to vector<1x1x32xbf16>
    %6 = vector.shape_cast %5 : vector<1x1x32xbf16> to vector<1x32xbf16>
    %c0_2 = arith.constant 0 : index
    %c0_3 = arith.constant 0 : index
    %c0_4 = arith.constant 0 : index
    %7 = vector.load %arg4[%c0_2, %c0_3, %c0_4] : memref<16x32x128xbf16, #tpu.memory_space<vmem>>, vector<1x32x128xbf16>
    %8 = vector.shape_cast %7 : vector<1x32x128xbf16> to vector<32x128xbf16>
    %cst = arith.constant dense<0.000000e+00> : vector<1x128xf32>
    %9 = tpu.matmul %6, %8, %cst {dimension_numbers = #tpu.dot_dimension_numbers<[1], [0], [0], [1], [0, 0, 1, 1], [], []>} : vector<1x32xbf16>, vector<32x128xbf16>, vector<1x128xf32> -> vector<1x128xf32>
    %c0_5 = arith.constant 0 : index
    %c0_6 = arith.constant 0 : index
    %10 = vector.load %arg7[%c0_5, %c0_6] : memref<1x128xf32, #tpu.memory_space<vmem>>, vector<1x128xf32>
    tpu.vector_store %arg7[%c0_5, %c0_6], %9 {strides = array<i32>} : memref<1x128xf32, #tpu.memory_space<vmem>>, vector<1x128xf32>,
    %c0_i32_7 = arith.constant 0 : i32
    %11 = arith.addi %1, %c0_i32_7 : i32
    %c0_8 = arith.constant 0 : index
    %12 = arith.index_cast %11 : i32 to index
    %c1 = arith.constant 1 : index
    %c0_9 = arith.constant 0 : index
    %13 = vector.load %arg3[%c0_8, %12, %c1, %c0_9] : memref<1x4x4x32xbf16, #tpu.memory_space<vmem>>, vector<1x1x1x32xbf16>
    %14 = vector.shape_cast %13 : vector<1x1x1x32xbf16> to vector<1x1x32xbf16>
    %15 = vector.shape_cast %14 : vector<1x1x32xbf16> to vector<1x32xbf16>
    %c1_10 = arith.constant 1 : index
    %c0_11 = arith.constant 0 : index
    %c0_12 = arith.constant 0 : index
    %16 = vector.load %arg4[%c1_10, %c0_11, %c0_12] : memref<16x32x128xbf16, #tpu.memory_space<vmem>>, vector<1x32x128xbf16>
    %17 = vector.shape_cast %16 : vector<1x32x128xbf16> to vector<32x128xbf16>
    %cst_13 = arith.constant dense<0.000000e+00> : vector<1x128xf32>
    %18 = tpu.matmul %15, %17, %cst_13 {dimension_numbers = #tpu.dot_dimension_numbers<[1], [0], [0], [1], [0, 0, 1, 1], [], []>} : vector<1x32xbf16>, vector<32x128xbf16>, vector<1x128xf32> -> vector<1x128xf32>
    %c0_14 = arith.constant 0 : index
    %c0_15 = arith.constant 0 : index
    %19 = vector.load %arg7[%c0_14, %c0_15] : memref<1x128xf32, #tpu.memory_space<vmem>>, vector<1x128xf32>
    %20 = arith.addf %19, %18 : vector<1x128xf32>
    %c0_16 = arith.constant 0 : index
    %c0_17 = arith.constant 0 : index
    %21 = vector.load %arg7[%c0_16, %c0_17] : memref<1x128xf32, #tpu.memory_space<vmem>>, vector<1x128xf32>
    tpu.vector_store %arg7[%c0_16, %c0_17], %20 {strides = array<i32>} : memref<1x128xf32, #tpu.memory_space<vmem>>, vector<1x128xf32>,
    %c0_i32_18 = arith.constant 0 : i32
    %22 = arith.addi %1, %c0_i32_18 : i32
    %c0_19 = arith.constant 0 : index
    %23 = arith.index_cast %22 : i32 to index
    %c2 = arith.constant 2 : index
    %c0_20 = arith.constant 0 : index
    %24 = vector.load %arg3[%c0_19, %23, %c2, %c0_20] : memref<1x4x4x32xbf16, #tpu.memory_space<vmem>>, vector<1x1x1x32xbf16>
    %25 = vector.shape_cast %24 : vector<1x1x1x32xbf16> to vector<1x1x32xbf16>
    %26 = vector.shape_cast %25 : vector<1x1x32xbf16> to vector<1x32xbf16>
    %c2_21 = arith.constant 2 : index
    %c0_22 = arith.constant 0 : index
    %c0_23 = arith.constant 0 : index
    %27 = vector.load %arg4[%c2_21, %c0_22, %c0_23] : memref<16x32x128xbf16, #tpu.memory_space<vmem>>, vector<1x32x128xbf16>
    %28 = vector.shape_cast %27 : vector<1x32x128xbf16> to vector<32x128xbf16>
    %cst_24 = arith.constant dense<0.000000e+00> : vector<1x128xf32>
    %29 = tpu.matmul %26, %28, %cst_24 {dimension_numbers = #tpu.dot_dimension_numbers<[1], [0], [0], [1], [0, 0, 1, 1], [], []>} : vector<1x32xbf16>, vector<32x128xbf16>, vector<1x128xf32> -> vector<1x128xf32>
    %c0_25 = arith.constant 0 : index
    %c0_26 = arith.constant 0 : index
    %30 = vector.load %arg7[%c0_25, %c0_26] : memref<1x128xf32, #tpu.memory_space<vmem>>, vector<1x128xf32>
    %31 = arith.addf %30, %29 : vector<1x128xf32>
    %c0_27 = arith.constant 0 : index
    %c0_28 = arith.constant 0 : index
    %32 = vector.load %arg7[%c0_27, %c0_28] : memref<1x128xf32, #tpu.memory_space<vmem>>, vector<1x128xf32>
    tpu.vector_store %arg7[%c0_27, %c0_28], %31 {strides = array<i32>} : memref<1x128xf32, #tpu.memory_space<vmem>>, vector<1x128xf32>,
    %c0_i32_29 = arith.constant 0 : i32
    %33 = arith.addi %1, %c0_i32_29 : i32
    %c0_30 = arith.constant 0 : index
    %34 = arith.index_cast %33 : i32 to index
    %c3 = arith.constant 3 : index
    %c0_31 = arith.constant 0 : index
    %35 = vector.load %arg3[%c0_30, %34, %c3, %c0_31] : memref<1x4x4x32xbf16, #tpu.memory_space<vmem>>, vector<1x1x1x32xbf16>
    %36 = vector.shape_cast %35 : vector<1x1x1x32xbf16> to vector<1x1x32xbf16>
    %37 = vector.shape_cast %36 : vector<1x1x32xbf16> to vector<1x32xbf16>
    %c3_32 = arith.constant 3 : index
    %c0_33 = arith.constant 0 : index
    %c0_34 = arith.constant 0 : index
    %38 = vector.load %arg4[%c3_32, %c0_33, %c0_34] : memref<16x32x128xbf16, #tpu.memory_space<vmem>>, vector<1x32x128xbf16>
    %39 = vector.shape_cast %38 : vector<1x32x128xbf16> to vector<32x128xbf16>
    %cst_35 = arith.constant dense<0.000000e+00> : vector<1x128xf32>
    %40 = tpu.matmul %37, %39, %cst_35 {dimension_numbers = #tpu.dot_dimension_numbers<[1], [0], [0], [1], [0, 0, 1, 1], [], []>} : vector<1x32xbf16>, vector<32x128xbf16>, vector<1x128xf32> -> vector<1x128xf32>
    %c0_36 = arith.constant 0 : index
    %c0_37 = arith.constant 0 : index
    %41 = vector.load %arg7[%c0_36, %c0_37] : memref<1x128xf32, #tpu.memory_space<vmem>>, vector<1x128xf32>
    %42 = arith.addf %41, %40 : vector<1x128xf32>
    %c0_38 = arith.constant 0 : index
    %c0_39 = arith.constant 0 : index
    %43 = vector.load %arg7[%c0_38, %c0_39] : memref<1x128xf32, #tpu.memory_space<vmem>>, vector<1x128xf32>
    tpu.vector_store %arg7[%c0_38, %c0_39], %42 {strides = array<i32>} : memref<1x128xf32, #tpu.memory_space<vmem>>, vector<1x128xf32>,
    %c1_i32_40 = arith.constant 1 : i32
    %44 = arith.addi %1, %c1_i32_40 : i32
    %c0_41 = arith.constant 0 : index
    %45 = arith.index_cast %44 : i32 to index
    %c0_42 = arith.constant 0 : index
    %c0_43 = arith.constant 0 : index
    %46 = vector.load %arg3[%c0_41, %45, %c0_42, %c0_43] : memref<1x4x4x32xbf16, #tpu.memory_space<vmem>>, vector<1x1x1x32xbf16>
    %47 = vector.shape_cast %46 : vector<1x1x1x32xbf16> to vector<1x1x32xbf16>
    %48 = vector.shape_cast %47 : vector<1x1x32xbf16> to vector<1x32xbf16>
    %c4 = arith.constant 4 : index
    %c0_44 = arith.constant 0 : index
    %c0_45 = arith.constant 0 : index
    %49 = vector.load %arg4[%c4, %c0_44, %c0_45] : memref<16x32x128xbf16, #tpu.memory_space<vmem>>, vector<1x32x128xbf16>
    %50 = vector.shape_cast %49 : vector<1x32x128xbf16> to vector<32x128xbf16>
    %cst_46 = arith.constant dense<0.000000e+00> : vector<1x128xf32>
    %51 = tpu.matmul %48, %50, %cst_46 {dimension_numbers = #tpu.dot_dimension_numbers<[1], [0], [0], [1], [0, 0, 1, 1], [], []>} : vector<1x32xbf16>, vector<32x128xbf16>, vector<1x128xf32> -> vector<1x128xf32>
    %c0_47 = arith.constant 0 : index
    %c0_48 = arith.constant 0 : index
    %52 = vector.load %arg7[%c0_47, %c0_48] : memref<1x128xf32, #tpu.memory_space<vmem>>, vector<1x128xf32>
    %53 = arith.addf %52, %51 : vector<1x128xf32>
    %c0_49 = arith.constant 0 : index
    %c0_50 = arith.constant 0 : index
    %54 = vector.load %arg7[%c0_49, %c0_50] : memref<1x128xf32, #tpu.memory_space<vmem>>, vector<1x128xf32>
    tpu.vector_store %arg7[%c0_49, %c0_50], %53 {strides = array<i32>} : memref<1x128xf32, #tpu.memory_space<vmem>>, vector<1x128xf32>,
    %c1_i32_51 = arith.constant 1 : i32
    %55 = arith.addi %1, %c1_i32_51 : i32
    %c0_52 = arith.constant 0 : index
    %56 = arith.index_cast %55 : i32 to index
    %c1_53 = arith.constant 1 : index
    %c0_54 = arith.constant 0 : index
    %57 = vector.load %arg3[%c0_52, %56, %c1_53, %c0_54] : memref<1x4x4x32xbf16, #tpu.memory_space<vmem>>, vector<1x1x1x32xbf16>
    %58 = vector.shape_cast %57 : vector<1x1x1x32xbf16> to vector<1x1x32xbf16>
    %59 = vector.shape_cast %58 : vector<1x1x32xbf16> to vector<1x32xbf16>
    %c5 = arith.constant 5 : index
    %c0_55 = arith.constant 0 : index
    %c0_56 = arith.constant 0 : index
    %60 = vector.load %arg4[%c5, %c0_55, %c0_56] : memref<16x32x128xbf16, #tpu.memory_space<vmem>>, vector<1x32x128xbf16>
    %61 = vector.shape_cast %60 : vector<1x32x128xbf16> to vector<32x128xbf16>
    %cst_57 = arith.constant dense<0.000000e+00> : vector<1x128xf32>
    %62 = tpu.matmul %59, %61, %cst_57 {dimension_numbers = #tpu.dot_dimension_numbers<[1], [0], [0], [1], [0, 0, 1, 1], [], []>} : vector<1x32xbf16>, vector<32x128xbf16>, vector<1x128xf32> -> vector<1x128xf32>
    %c0_58 = arith.constant 0 : index
    %c0_59 = arith.constant 0 : index
    %63 = vector.load %arg7[%c0_58, %c0_59] : memref<1x128xf32, #tpu.memory_space<vmem>>, vector<1x128xf32>
    %64 = arith.addf %63, %62 : vector<1x128xf32>
    %c0_60 = arith.constant 0 : index
    %c0_61 = arith.constant 0 : index
    %65 = vector.load %arg7[%c0_60, %c0_61] : memref<1x128xf32, #tpu.memory_space<vmem>>, vector<1x128xf32>
    tpu.vector_store %arg7[%c0_60, %c0_61], %64 {strides = array<i32>} : memref<1x128xf32, #tpu.memory_space<vmem>>, vector<1x128xf32>,
    %c1_i32_62 = arith.constant 1 : i32
    %66 = arith.addi %1, %c1_i32_62 : i32
    %c0_63 = arith.constant 0 : index
    %67 = arith.index_cast %66 : i32 to index
    %c2_64 = arith.constant 2 : index
    %c0_65 = arith.constant 0 : index
    %68 = vector.load %arg3[%c0_63, %67, %c2_64, %c0_65] : memref<1x4x4x32xbf16, #tpu.memory_space<vmem>>, vector<1x1x1x32xbf16>
    %69 = vector.shape_cast %68 : vector<1x1x1x32xbf16> to vector<1x1x32xbf16>
    %70 = vector.shape_cast %69 : vector<1x1x32xbf16> to vector<1x32xbf16>
    %c6 = arith.constant 6 : index
    %c0_66 = arith.constant 0 : index
    %c0_67 = arith.constant 0 : index
    %71 = vector.load %arg4[%c6, %c0_66, %c0_67] : memref<16x32x128xbf16, #tpu.memory_space<vmem>>, vector<1x32x128xbf16>
    %72 = vector.shape_cast %71 : vector<1x32x128xbf16> to vector<32x128xbf16>
    %cst_68 = arith.constant dense<0.000000e+00> : vector<1x128xf32>
    %73 = tpu.matmul %70, %72, %cst_68 {dimension_numbers = #tpu.dot_dimension_numbers<[1], [0], [0], [1], [0, 0, 1, 1], [], []>} : vector<1x32xbf16>, vector<32x128xbf16>, vector<1x128xf32> -> vector<1x128xf32>
    %c0_69 = arith.constant 0 : index
    %c0_70 = arith.constant 0 : index
    %74 = vector.load %arg7[%c0_69, %c0_70] : memref<1x128xf32, #tpu.memory_space<vmem>>, vector<1x128xf32>
    %75 = arith.addf %74, %73 : vector<1x128xf32>
    %c0_71 = arith.constant 0 : index
    %c0_72 = arith.constant 0 : index
    %76 = vector.load %arg7[%c0_71, %c0_72] : memref<1x128xf32, #tpu.memory_space<vmem>>, vector<1x128xf32>
    tpu.vector_store %arg7[%c0_71, %c0_72], %75 {strides = array<i32>} : memref<1x128xf32, #tpu.memory_space<vmem>>, vector<1x128xf32>,
    %c1_i32_73 = arith.constant 1 : i32
    %77 = arith.addi %1, %c1_i32_73 : i32
    %c0_74 = arith.constant 0 : index
    %78 = arith.index_cast %77 : i32 to index
    %c3_75 = arith.constant 3 : index
    %c0_76 = arith.constant 0 : index
    %79 = vector.load %arg3[%c0_74, %78, %c3_75, %c0_76] : memref<1x4x4x32xbf16, #tpu.memory_space<vmem>>, vector<1x1x1x32xbf16>
    %80 = vector.shape_cast %79 : vector<1x1x1x32xbf16> to vector<1x1x32xbf16>
    %81 = vector.shape_cast %80 : vector<1x1x32xbf16> to vector<1x32xbf16>
    %c7 = arith.constant 7 : index
    %c0_77 = arith.constant 0 : index
    %c0_78 = arith.constant 0 : index
    %82 = vector.load %arg4[%c7, %c0_77, %c0_78] : memref<16x32x128xbf16, #tpu.memory_space<vmem>>, vector<1x32x128xbf16>
    %83 = vector.shape_cast %82 : vector<1x32x128xbf16> to vector<32x128xbf16>
    %cst_79 = arith.constant dense<0.000000e+00> : vector<1x128xf32>
    %84 = tpu.matmul %81, %83, %cst_79 {dimension_numbers = #tpu.dot_dimension_numbers<[1], [0], [0], [1], [0, 0, 1, 1], [], []>} : vector<1x32xbf16>, vector<32x128xbf16>, vector<1x128xf32> -> vector<1x128xf32>
    %c0_80 = arith.constant 0 : index
    %c0_81 = arith.constant 0 : index
    %85 = vector.load %arg7[%c0_80, %c0_81] : memref<1x128xf32, #tpu.memory_space<vmem>>, vector<1x128xf32>
    %86 = arith.addf %85, %84 : vector<1x128xf32>
    %c0_82 = arith.constant 0 : index
    %c0_83 = arith.constant 0 : index
    %87 = vector.load %arg7[%c0_82, %c0_83] : memref<1x128xf32, #tpu.memory_space<vmem>>, vector<1x128xf32>
    tpu.vector_store %arg7[%c0_82, %c0_83], %86 {strides = array<i32>} : memref<1x128xf32, #tpu.memory_space<vmem>>, vector<1x128xf32>,
    %c2_i32 = arith.constant 2 : i32
    %88 = arith.addi %1, %c2_i32 : i32
    %c0_84 = arith.constant 0 : index
    %89 = arith.index_cast %88 : i32 to index
    %c0_85 = arith.constant 0 : index
    %c0_86 = arith.constant 0 : index
    %90 = vector.load %arg3[%c0_84, %89, %c0_85, %c0_86] : memref<1x4x4x32xbf16, #tpu.memory_space<vmem>>, vector<1x1x1x32xbf16>
    %91 = vector.shape_cast %90 : vector<1x1x1x32xbf16> to vector<1x1x32xbf16>
    %92 = vector.shape_cast %91 : vector<1x1x32xbf16> to vector<1x32xbf16>
    %c8 = arith.constant 8 : index
    %c0_87 = arith.constant 0 : index
    %c0_88 = arith.constant 0 : index
    %93 = vector.load %arg4[%c8, %c0_87, %c0_88] : memref<16x32x128xbf16, #tpu.memory_space<vmem>>, vector<1x32x128xbf16>
    %94 = vector.shape_cast %93 : vector<1x32x128xbf16> to vector<32x128xbf16>
    %cst_89 = arith.constant dense<0.000000e+00> : vector<1x128xf32>
    %95 = tpu.matmul %92, %94, %cst_89 {dimension_numbers = #tpu.dot_dimension_numbers<[1], [0], [0], [1], [0, 0, 1, 1], [], []>} : vector<1x32xbf16>, vector<32x128xbf16>, vector<1x128xf32> -> vector<1x128xf32>
    %c0_90 = arith.constant 0 : index
    %c0_91 = arith.constant 0 : index
    %96 = vector.load %arg7[%c0_90, %c0_91] : memref<1x128xf32, #tpu.memory_space<vmem>>, vector<1x128xf32>
    %97 = arith.addf %96, %95 : vector<1x128xf32>
    %c0_92 = arith.constant 0 : index
    %c0_93 = arith.constant 0 : index
    %98 = vector.load %arg7[%c0_92, %c0_93] : memref<1x128xf32, #tpu.memory_space<vmem>>, vector<1x128xf32>
    tpu.vector_store %arg7[%c0_92, %c0_93], %97 {strides = array<i32>} : memref<1x128xf32, #tpu.memory_space<vmem>>, vector<1x128xf32>,
    %c2_i32_94 = arith.constant 2 : i32
    %99 = arith.addi %1, %c2_i32_94 : i32
    %c0_95 = arith.constant 0 : index
    %100 = arith.index_cast %99 : i32 to index
    %c1_96 = arith.constant 1 : index
    %c0_97 = arith.constant 0 : index
    %101 = vector.load %arg3[%c0_95, %100, %c1_96, %c0_97] : memref<1x4x4x32xbf16, #tpu.memory_space<vmem>>, vector<1x1x1x32xbf16>
    %102 = vector.shape_cast %101 : vector<1x1x1x32xbf16> to vector<1x1x32xbf16>
    %103 = vector.shape_cast %102 : vector<1x1x32xbf16> to vector<1x32xbf16>
    %c9 = arith.constant 9 : index
    %c0_98 = arith.constant 0 : index
    %c0_99 = arith.constant 0 : index
    %104 = vector.load %arg4[%c9, %c0_98, %c0_99] : memref<16x32x128xbf16, #tpu.memory_space<vmem>>, vector<1x32x128xbf16>
    %105 = vector.shape_cast %104 : vector<1x32x128xbf16> to vector<32x128xbf16>
    %cst_100 = arith.constant dense<0.000000e+00> : vector<1x128xf32>
    %106 = tpu.matmul %103, %105, %cst_100 {dimension_numbers = #tpu.dot_dimension_numbers<[1], [0], [0], [1], [0, 0, 1, 1], [], []>} : vector<1x32xbf16>, vector<32x128xbf16>, vector<1x128xf32> -> vector<1x128xf32>
    %c0_101 = arith.constant 0 : index
    %c0_102 = arith.constant 0 : index
    %107 = vector.load %arg7[%c0_101, %c0_102] : memref<1x128xf32, #tpu.memory_space<vmem>>, vector<1x128xf32>
    %108 = arith.addf %107, %106 : vector<1x128xf32>
    %c0_103 = arith.constant 0 : index
    %c0_104 = arith.constant 0 : index
    %109 = vector.load %arg7[%c0_103, %c0_104] : memref<1x128xf32, #tpu.memory_space<vmem>>, vector<1x128xf32>
    tpu.vector_store %arg7[%c0_103, %c0_104], %108 {strides = array<i32>} : memref<1x128xf32, #tpu.memory_space<vmem>>, vector<1x128xf32>,
    %c2_i32_105 = arith.constant 2 : i32
    %110 = arith.addi %1, %c2_i32_105 : i32
    %c0_106 = arith.constant 0 : index
    %111 = arith.index_cast %110 : i32 to index
    %c2_107 = arith.constant 2 : index
    %c0_108 = arith.constant 0 : index
    %112 = vector.load %arg3[%c0_106, %111, %c2_107, %c0_108] : memref<1x4x4x32xbf16, #tpu.memory_space<vmem>>, vector<1x1x1x32xbf16>
    %113 = vector.shape_cast %112 : vector<1x1x1x32xbf16> to vector<1x1x32xbf16>
    %114 = vector.shape_cast %113 : vector<1x1x32xbf16> to vector<1x32xbf16>
    %c10 = arith.constant 10 : index
    %c0_109 = arith.constant 0 : index
    %c0_110 = arith.constant 0 : index
    %115 = vector.load %arg4[%c10, %c0_109, %c0_110] : memref<16x32x128xbf16, #tpu.memory_space<vmem>>, vector<1x32x128xbf16>
    %116 = vector.shape_cast %115 : vector<1x32x128xbf16> to vector<32x128xbf16>
    %cst_111 = arith.constant dense<0.000000e+00> : vector<1x128xf32>
    %117 = tpu.matmul %114, %116, %cst_111 {dimension_numbers = #tpu.dot_dimension_numbers<[1], [0], [0], [1], [0, 0, 1, 1], [], []>} : vector<1x32xbf16>, vector<32x128xbf16>, vector<1x128xf32> -> vector<1x128xf32>
    %c0_112 = arith.constant 0 : index
    %c0_113 = arith.constant 0 : index
    %118 = vector.load %arg7[%c0_112, %c0_113] : memref<1x128xf32, #tpu.memory_space<vmem>>, vector<1x128xf32>
    %119 = arith.addf %118, %117 : vector<1x128xf32>
    %c0_114 = arith.constant 0 : index
    %c0_115 = arith.constant 0 : index
    %120 = vector.load %arg7[%c0_114, %c0_115] : memref<1x128xf32, #tpu.memory_space<vmem>>, vector<1x128xf32>
    tpu.vector_store %arg7[%c0_114, %c0_115], %119 {strides = array<i32>} : memref<1x128xf32, #tpu.memory_space<vmem>>, vector<1x128xf32>,
    %c2_i32_116 = arith.constant 2 : i32
    %121 = arith.addi %1, %c2_i32_116 : i32
    %c0_117 = arith.constant 0 : index
    %122 = arith.index_cast %121 : i32 to index
    %c3_118 = arith.constant 3 : index
    %c0_119 = arith.constant 0 : index
    %123 = vector.load %arg3[%c0_117, %122, %c3_118, %c0_119] : memref<1x4x4x32xbf16, #tpu.memory_space<vmem>>, vector<1x1x1x32xbf16>
    %124 = vector.shape_cast %123 : vector<1x1x1x32xbf16> to vector<1x1x32xbf16>
    %125 = vector.shape_cast %124 : vector<1x1x32xbf16> to vector<1x32xbf16>
    %c11 = arith.constant 11 : index
    %c0_120 = arith.constant 0 : index
    %c0_121 = arith.constant 0 : index
    %126 = vector.load %arg4[%c11, %c0_120, %c0_121] : memref<16x32x128xbf16, #tpu.memory_space<vmem>>, vector<1x32x128xbf16>
    %127 = vector.shape_cast %126 : vector<1x32x128xbf16> to vector<32x128xbf16>
    %cst_122 = arith.constant dense<0.000000e+00> : vector<1x128xf32>
    %128 = tpu.matmul %125, %127, %cst_122 {dimension_numbers = #tpu.dot_dimension_numbers<[1], [0], [0], [1], [0, 0, 1, 1], [], []>} : vector<1x32xbf16>, vector<32x128xbf16>, vector<1x128xf32> -> vector<1x128xf32>
    %c0_123 = arith.constant 0 : index
    %c0_124 = arith.constant 0 : index
    %129 = vector.load %arg7[%c0_123, %c0_124] : memref<1x128xf32, #tpu.memory_space<vmem>>, vector<1x128xf32>
    %130 = arith.addf %129, %128 : vector<1x128xf32>
    %c0_125 = arith.constant 0 : index
    %c0_126 = arith.constant 0 : index
    %131 = vector.load %arg7[%c0_125, %c0_126] : memref<1x128xf32, #tpu.memory_space<vmem>>, vector<1x128xf32>
    tpu.vector_store %arg7[%c0_125, %c0_126], %130 {strides = array<i32>} : memref<1x128xf32, #tpu.memory_space<vmem>>, vector<1x128xf32>,
    %c3_i32 = arith.constant 3 : i32
    %132 = arith.addi %1, %c3_i32 : i32
    %c0_127 = arith.constant 0 : index
    %133 = arith.index_cast %132 : i32 to index
    %c0_128 = arith.constant 0 : index
    %c0_129 = arith.constant 0 : index
    %134 = vector.load %arg3[%c0_127, %133, %c0_128, %c0_129] : memref<1x4x4x32xbf16, #tpu.memory_space<vmem>>, vector<1x1x1x32xbf16>
    %135 = vector.shape_cast %134 : vector<1x1x1x32xbf16> to vector<1x1x32xbf16>
    %136 = vector.shape_cast %135 : vector<1x1x32xbf16> to vector<1x32xbf16>
    %c12 = arith.constant 12 : index
    %c0_130 = arith.constant 0 : index
    %c0_131 = arith.constant 0 : index
    %137 = vector.load %arg4[%c12, %c0_130, %c0_131] : memref<16x32x128xbf16, #tpu.memory_space<vmem>>, vector<1x32x128xbf16>
    %138 = vector.shape_cast %137 : vector<1x32x128xbf16> to vector<32x128xbf16>
    %cst_132 = arith.constant dense<0.000000e+00> : vector<1x128xf32>
    %139 = tpu.matmul %136, %138, %cst_132 {dimension_numbers = #tpu.dot_dimension_numbers<[1], [0], [0], [1], [0, 0, 1, 1], [], []>} : vector<1x32xbf16>, vector<32x128xbf16>, vector<1x128xf32> -> vector<1x128xf32>
    %c0_133 = arith.constant 0 : index
    %c0_134 = arith.constant 0 : index
    %140 = vector.load %arg7[%c0_133, %c0_134] : memref<1x128xf32, #tpu.memory_space<vmem>>, vector<1x128xf32>
    %141 = arith.addf %140, %139 : vector<1x128xf32>
    %c0_135 = arith.constant 0 : index
    %c0_136 = arith.constant 0 : index
    %142 = vector.load %arg7[%c0_135, %c0_136] : memref<1x128xf32, #tpu.memory_space<vmem>>, vector<1x128xf32>
    tpu.vector_store %arg7[%c0_135, %c0_136], %141 {strides = array<i32>} : memref<1x128xf32, #tpu.memory_space<vmem>>, vector<1x128xf32>,
    %c3_i32_137 = arith.constant 3 : i32
    %143 = arith.addi %1, %c3_i32_137 : i32
    %c0_138 = arith.constant 0 : index
    %144 = arith.index_cast %143 : i32 to index
    %c1_139 = arith.constant 1 : index
    %c0_140 = arith.constant 0 : index
    %145 = vector.load %arg3[%c0_138, %144, %c1_139, %c0_140] : memref<1x4x4x32xbf16, #tpu.memory_space<vmem>>, vector<1x1x1x32xbf16>
    %146 = vector.shape_cast %145 : vector<1x1x1x32xbf16> to vector<1x1x32xbf16>
    %147 = vector.shape_cast %146 : vector<1x1x32xbf16> to vector<1x32xbf16>
    %c13 = arith.constant 13 : index
    %c0_141 = arith.constant 0 : index
    %c0_142 = arith.constant 0 : index
    %148 = vector.load %arg4[%c13, %c0_141, %c0_142] : memref<16x32x128xbf16, #tpu.memory_space<vmem>>, vector<1x32x128xbf16>
    %149 = vector.shape_cast %148 : vector<1x32x128xbf16> to vector<32x128xbf16>
    %cst_143 = arith.constant dense<0.000000e+00> : vector<1x128xf32>
    %150 = tpu.matmul %147, %149, %cst_143 {dimension_numbers = #tpu.dot_dimension_numbers<[1], [0], [0], [1], [0, 0, 1, 1], [], []>} : vector<1x32xbf16>, vector<32x128xbf16>, vector<1x128xf32> -> vector<1x128xf32>
    %c0_144 = arith.constant 0 : index
    %c0_145 = arith.constant 0 : index
    %151 = vector.load %arg7[%c0_144, %c0_145] : memref<1x128xf32, #tpu.memory_space<vmem>>, vector<1x128xf32>
    %152 = arith.addf %151, %150 : vector<1x128xf32>
    %c0_146 = arith.constant 0 : index
    %c0_147 = arith.constant 0 : index
    %153 = vector.load %arg7[%c0_146, %c0_147] : memref<1x128xf32, #tpu.memory_space<vmem>>, vector<1x128xf32>
    tpu.vector_store %arg7[%c0_146, %c0_147], %152 {strides = array<i32>} : memref<1x128xf32, #tpu.memory_space<vmem>>, vector<1x128xf32>,
    %c3_i32_148 = arith.constant 3 : i32
    %154 = arith.addi %1, %c3_i32_148 : i32
    %c0_149 = arith.constant 0 : index
    %155 = arith.index_cast %154 : i32 to index
    %c2_150 = arith.constant 2 : index
    %c0_151 = arith.constant 0 : index
    %156 = vector.load %arg3[%c0_149, %155, %c2_150, %c0_151] : memref<1x4x4x32xbf16, #tpu.memory_space<vmem>>, vector<1x1x1x32xbf16>
    %157 = vector.shape_cast %156 : vector<1x1x1x32xbf16> to vector<1x1x32xbf16>
    %158 = vector.shape_cast %157 : vector<1x1x32xbf16> to vector<1x32xbf16>
    %c14 = arith.constant 14 : index
    %c0_152 = arith.constant 0 : index
    %c0_153 = arith.constant 0 : index
    %159 = vector.load %arg4[%c14, %c0_152, %c0_153] : memref<16x32x128xbf16, #tpu.memory_space<vmem>>, vector<1x32x128xbf16>
    %160 = vector.shape_cast %159 : vector<1x32x128xbf16> to vector<32x128xbf16>
    %cst_154 = arith.constant dense<0.000000e+00> : vector<1x128xf32>
    %161 = tpu.matmul %158, %160, %cst_154 {dimension_numbers = #tpu.dot_dimension_numbers<[1], [0], [0], [1], [0, 0, 1, 1], [], []>} : vector<1x32xbf16>, vector<32x128xbf16>, vector<1x128xf32> -> vector<1x128xf32>
    %c0_155 = arith.constant 0 : index
    %c0_156 = arith.constant 0 : index
    %162 = vector.load %arg7[%c0_155, %c0_156] : memref<1x128xf32, #tpu.memory_space<vmem>>, vector<1x128xf32>
    %163 = arith.addf %162, %161 : vector<1x128xf32>
    %c0_157 = arith.constant 0 : index
    %c0_158 = arith.constant 0 : index
    %164 = vector.load %arg7[%c0_157, %c0_158] : memref<1x128xf32, #tpu.memory_space<vmem>>, vector<1x128xf32>
    tpu.vector_store %arg7[%c0_157, %c0_158], %163 {strides = array<i32>} : memref<1x128xf32, #tpu.memory_space<vmem>>, vector<1x128xf32>,
    %c3_i32_159 = arith.constant 3 : i32
    %165 = arith.addi %1, %c3_i32_159 : i32
    %c0_160 = arith.constant 0 : index
    %166 = arith.index_cast %165 : i32 to index
    %c3_161 = arith.constant 3 : index
    %c0_162 = arith.constant 0 : index
    %167 = vector.load %arg3[%c0_160, %166, %c3_161, %c0_162] : memref<1x4x4x32xbf16, #tpu.memory_space<vmem>>, vector<1x1x1x32xbf16>
    %168 = vector.shape_cast %167 : vector<1x1x1x32xbf16> to vector<1x1x32xbf16>
    %169 = vector.shape_cast %168 : vector<1x1x32xbf16> to vector<1x32xbf16>
    %c15 = arith.constant 15 : index
    %c0_163 = arith.constant 0 : index
    %c0_164 = arith.constant 0 : index
    %170 = vector.load %arg4[%c15, %c0_163, %c0_164] : memref<16x32x128xbf16, #tpu.memory_space<vmem>>, vector<1x32x128xbf16>
    %171 = vector.shape_cast %170 : vector<1x32x128xbf16> to vector<32x128xbf16>
    %cst_165 = arith.constant dense<0.000000e+00> : vector<1x128xf32>
    %172 = tpu.matmul %169, %171, %cst_165 {dimension_numbers = #tpu.dot_dimension_numbers<[1], [0], [0], [1], [0, 0, 1, 1], [], []>} : vector<1x32xbf16>, vector<32x128xbf16>, vector<1x128xf32> -> vector<1x128xf32>
    %c0_166 = arith.constant 0 : index
    %c0_167 = arith.constant 0 : index
    %173 = vector.load %arg7[%c0_166, %c0_167] : memref<1x128xf32, #tpu.memory_space<vmem>>, vector<1x128xf32>
    %174 = arith.addf %173, %172 : vector<1x128xf32>
    %c0_168 = arith.constant 0 : index
    %c0_169 = arith.constant 0 : index
    %175 = vector.load %arg7[%c0_168, %c0_169] : memref<1x128xf32, #tpu.memory_space<vmem>>, vector<1x128xf32>
    tpu.vector_store %arg7[%c0_168, %c0_169], %174 {strides = array<i32>} : memref<1x128xf32, #tpu.memory_space<vmem>>, vector<1x128xf32>,
    %c0_170 = arith.constant 0 : index
    %c0_171 = arith.constant 0 : index
    %176 = vector.load %arg7[%c0_170, %c0_171] : memref<1x128xf32, #tpu.memory_space<vmem>>, vector<1x128xf32>
    %c0_172 = arith.constant 0 : index
    %c0_173 = arith.constant 0 : index
    %177 = vector.load %arg5[%c0_172, %c0_173] : memref<1x128xf32, #tpu.memory_space<vmem>>, vector<1x128xf32>
    %178 = arith.addf %176, %177 : vector<1x128xf32>
    %179 = arith.truncf %178 : vector<1x128xf32> to vector<1x128xbf16>
    %c0_174 = arith.constant 0 : index
    %c0_175 = arith.constant 0 : index
    %c0_176 = arith.constant 0 : index
    %180 = vector.load %arg6[%c0_174, %c0_175, %c0_176] : memref<1x1x128xbf16, #tpu.memory_space<vmem>>, vector<1x1x128xbf16>
    %181 = vector.shape_cast %180 : vector<1x1x128xbf16> to vector<1x128xbf16>
    %182 = vector.shape_cast %179 : vector<1x128xbf16> to vector<1x1x128xbf16>
    tpu.vector_store %arg6[%c0_174, %c0_175, %c0_176], %182 {strides = array<i32>} : memref<1x1x128xbf16, #tpu.memory_space<vmem>>, vector<1x1x128xbf16>,
    return
  }
  func.func @transform_0(%arg0: i32, %arg1: i32, %arg2: i32) -> (i32, i32, i32, i32) {
    %c0_i32 = arith.constant 0 : i32
    %c0_i32_0 = arith.constant 0 : i32
    %c0_i32_1 = arith.constant 0 : i32
    %c0_i32_2 = arith.constant 0 : i32
    return %arg0, %c0_i32, %c0_i32_0, %c0_i32_1 : i32, i32, i32, i32
  }
  func.func @transform_1(%arg0: i32, %arg1: i32, %arg2: i32) -> (i32, i32, i32) {
    %c0_i32 = arith.constant 0 : i32
    %c0_i32_0 = arith.constant 0 : i32
    %c0_i32_1 = arith.constant 0 : i32
    return %c0_i32, %c0_i32_0, %arg1 : i32, i32, i32
  }
  func.func @transform_2(%arg0: i32, %arg1: i32, %arg2: i32) -> (i32, i32) {
    %c0_i32 = arith.constant 0 : i32
    %c0_i32_0 = arith.constant 0 : i32
    return %c0_i32, %arg1 : i32, i32
  }
  func.func @transform_3(%arg0: i32, %arg1: i32, %arg2: i32) -> (i32, i32, i32) {
    %c0_i32 = arith.constant 0 : i32
    return %arg0, %arg2, %arg1 : i32, i32, i32
  }
}

</mosaic_0001>

<llo_original>
// kernel: _lambda_.4
$region0: #{_lambda_.4}
  #allocation0 [shape = 'u32[]', space=smem, size = 0x4, offset = 0x4, fixed_abs, tag = 'smem constant byte address 0x4 - core index']
  #allocation1 [shape = 'u32[144,128]{1,0:T(1,128)}', space=vmem, size = 0x12000, scoped, tag = 'internal scratch']
  #allocation2 [shape = 'f32[64,128]{1,0:T(8,128)}', space=vmem, size = 0x8000, scoped, tag = 'scratch operand']
  %s0 = inlined_call_operand.vmem [shape: bf16[2,8,8,48], index: 0, kind: input, shape index: {}]
  %s1 = inlined_call_operand.vmem [shape: bf16[1,48,128], index: 1, kind: input, shape index: {}]
  %s2 = inlined_call_operand.vmem [shape: f32[1,128], index: 2, kind: input, shape index: {}]
  %s3 = inlined_call_operand.vmem [shape: bf16[2,64,128], index: 3, kind: output, shape index: {}]
  %s4 = sld [smem:[#allocation0]]
  $region45: #{_lambda_.4} parent=0
    _
  %s6 = ssub.s32 1, %s4
  %s7 = scalar_select 0, %s6, %s4
  loop: start=0, step=1, limit=4
  $region2: #{_lambda_.4} parent=0 // loop_pre_header
    _
  $region3: #{_lambda_.4} parent=0 // loop_header
    %s9 = sphi 0, %s13
    %p10 = scmp.ge.s32.totalorder %s9, 4
    %s16 = sphi 0, %s35
    %s17 = sphi 0, %s31
    %s18 = sphi 0, %s27
    %s19 = sphi 0, %s16
    %s20 = sphi 0, %s17
    %s21 = sphi 0, %s18
    %s22 = sphi 0, %s19
    %s23 = sphi 0, %s20
    %s24 = sphi 0, %s21
    %s38 = sphi 0, %s40
    %s41 = sphi 0, %s38
    %s42 = sphi 0, %s41
    %s58 = sphi 0, %s42
    %s64 = sphi 0, %s66
    %s67 = sphi 0, %s64
    %s68 = sphi 0, %s67
    %s84 = sphi 0, %s68
    %s90 = sphi 0, %s92
    %s93 = sphi 0, %s90
    %s94 = sphi 0, %s93
    %s110 = sphi 0, %s94
    %s120 = sphi 0, %s122
    %s123 = sphi 0, %s120
    %s124 = sphi 0, %s123
    %s140 = sphi 0, %s124
  $region4: #{_lambda_.4} parent=0 // loop_header_branch
    %12 = sbr.rel (%p10) target = $region8
  $region5: #{_lambda_.4} parent=0 // loop_body
    %s14 = ssub.s32 %s9, 1
    %s15 = ssub.s32 %s9, 2
    %s25 = sadd.s32 1, %s18
    %p26 = scmp.ge.s32.totalorder %s25, 1
    %s27 = scalar_select %p26, 0, %s25
    %s28 = sadd.s32 1, %s17
    %s29 = scalar_select %p26, %s28, %s17
    %p30 = scmp.ge.s32.totalorder %s29, 1
    %s31 = scalar_select %p30, 0, %s29
    %s32 = sadd.s32 1, %s16
    %s33 = scalar_select %p30, %s32, %s16
    %p34 = scmp.ge.s32.totalorder %s33, 2
    %s35 = scalar_select %p34, 0, %s33
    %s36 = ssub.s32 %s16, %s35
    %p37 = scmp.eq.s32.totalorder %s36, 0
    %s39 = sadd.s32 %s38, 1
    %s40 = scalar_select %p37, %s38, %s39
    %p43 = pneg %p37
    %p44 = scmp.eq.s32.totalorder %s9, 1
    %p45 = por %p43, %p44
    %p46 = scmp.ne.s32.totalorder %s38, %s41
    %p47 = scmp.eq.s32.totalorder %s9, 0
    %p48 = por %p46, %p47
    %p49 = scmp.ne.s32.totalorder %s38, %s41
    %p50 = scmp.eq.s32.totalorder %s14, 1
    %p51 = por %p49, %p50
    %p52 = scmp.ne.s32.totalorder %s41, %s42
    %p53 = scmp.eq.s32.totalorder %s14, 0
    %p54 = por %p52, %p53
    %p55 = scmp.ne.s32.totalorder %s41, %s42
    %p56 = scmp.eq.s32.totalorder %s15, 1
    %p57 = por %p55, %p56
    %p59 = scmp.ne.s32.totalorder %s42, %s58
    %p60 = scmp.eq.s32.totalorder %s15, 0
    %p61 = por %p59, %p60
    %s62 = ssub.s32 %s17, %s31
    %p63 = scmp.eq.s32.totalorder %s62, 0
    %s65 = sadd.s32 %s64, 1
    %s66 = scalar_select %p63, %s64, %s65
    %p69 = pneg %p63
    %p70 = scmp.eq.s32.totalorder %s9, 1
    %p71 = por %p69, %p70
    %p72 = scmp.ne.s32.totalorder %s64, %s67
    %p73 = scmp.eq.s32.totalorder %s9, 0
    %p74 = por %p72, %p73
    %p75 = scmp.ne.s32.totalorder %s64, %s67
    %p76 = scmp.eq.s32.totalorder %s14, 1
    %p77 = por %p75, %p76
    %p78 = scmp.ne.s32.totalorder %s67, %s68
    %p79 = scmp.eq.s32.totalorder %s14, 0
    %p80 = por %p78, %p79
    %p81 = scmp.ne.s32.totalorder %s67, %s68
    %p82 = scmp.eq.s32.totalorder %s15, 1
    %p83 = por %p81, %p82
    %p85 = scmp.ne.s32.totalorder %s68, %s84
    %p86 = scmp.eq.s32.totalorder %s15, 0
    %p87 = por %p85, %p86
    %s88 = ssub.s32 %s17, %s31
    %p89 = scmp.eq.s32.totalorder %s88, 0
    %s91 = sadd.s32 %s90, 1
    %s92 = scalar_select %p89, %s90, %s91
    %p95 = pneg %p89
    %p96 = scmp.eq.s32.totalorder %s9, 1
    %p97 = por %p95, %p96
    %p98 = scmp.ne.s32.totalorder %s90, %s93
    %p99 = scmp.eq.s32.totalorder %s9, 0
    %p100 = por %p98, %p99
    %p101 = scmp.ne.s32.totalorder %s90, %s93
    %p102 = scmp.eq.s32.totalorder %s14, 1
    %p103 = por %p101, %p102
    %p104 = scmp.ne.s32.totalorder %s93, %s94
    %p105 = scmp.eq.s32.totalorder %s14, 0
    %p106 = por %p104, %p105
    %p107 = scmp.ne.s32.totalorder %s93, %s94
    %p108 = scmp.eq.s32.totalorder %s15, 1
    %p109 = por %p107, %p108
    %p111 = scmp.ne.s32.totalorder %s94, %s110
    %p112 = scmp.eq.s32.totalorder %s15, 0
    %p113 = por %p111, %p112
    %s114 = ssub.s32 %s16, %s35
    %s115 = ssub.s32 %s18, %s27
    %s116 = sor.u32 %s114, %s115
    %s117 = ssub.s32 %s17, %s31
    %s118 = sor.u32 %s116, %s117
    %p119 = scmp.eq.s32.totalorder %s118, 0
    %s121 = sadd.s32 %s120, 1
    %s122 = scalar_select %p119, %s120, %s121
    %p125 = pneg %p119
    %p126 = scmp.eq.s32.totalorder %s9, 1
    %p127 = por %p125, %p126
    %p128 = scmp.ne.s32.totalorder %s120, %s123
    %p129 = scmp.eq.s32.totalorder %s9, 0
    %p130 = por %p128, %p129
    %p131 = scmp.ne.s32.totalorder %s120, %s123
    %p132 = scmp.eq.s32.totalorder %s14, 1
    %p133 = por %p131, %p132
    %p134 = scmp.ne.s32.totalorder %s123, %s124
    %p135 = scmp.eq.s32.totalorder %s14, 0
    %p136 = por %p134, %p135
    %p137 = scmp.ne.s32.totalorder %s123, %s124
    %p138 = scmp.eq.s32.totalorder %s15, 1
    %p139 = por %p137, %p138
    %p141 = scmp.ne.s32.totalorder %s124, %s140
    %p142 = scmp.eq.s32.totalorder %s15, 0
    %p143 = por %p141, %p142
    %p144 = scmp.le.s32.totalorder 1, %s9
    %p145 = scmp.lt.s32.totalorder %s9, 3
    %p146 = pnand %p144, %p145
    %p147 = pneg %p146
    // Predicated region
    $region9: #{_lambda_.4} parent=5 // pred_check
      _
    $region10: #{_lambda_.4} parent=5 // pred_check_branch
      %149 = sbr.rel (%p146) target = $region12
    $region11: #{_lambda_.4} parent=5 // pred_region
      %s150 = ssub.s32 %s9, 1
      // Predicated region
      $region13: #{_lambda_.4} parent=11 // pred_check
        %p151 = pneg %p80
      $region14: #{_lambda_.4} parent=11 // pred_check_branch
        %153 = sbr.rel (%p151) target = $region16
      $region15: #{_lambda_.4} parent=11 // pred_region
        %p154 = scmp.lt.s32.totalorder %s20, 0
        %s155 = scalar_select %p154, %s20, 0
        %s156 = smul.addr %s155, 4
        %s157 = scalar_lea.vmem %s1, %s156
      $region16: #{_lambda_.4} parent=11 // pred_fallthru
        _
      // Predicated region
      $region17: #{_lambda_.4} parent=11 // pred_check
        %p158 = pneg %p106
      $region18: #{_lambda_.4} parent=11 // pred_check_branch
        %160 = sbr.rel (%p158) target = $region20
      $region19: #{_lambda_.4} parent=11 // pred_region
        %p161 = scmp.lt.s32.totalorder %s20, 0
        %s162 = scalar_select %p161, %s20, 0
        %s163 = scalar_lea.vmem %s2, %s162
      $region20: #{_lambda_.4} parent=11 // pred_fallthru
        _
    $region12: #{_lambda_.4} parent=5 // pred_fallthru
      _
    %p164 = scmp.lt.s32.totalorder %s9, 2
    // Predicated region
    $region21: #{_lambda_.4} parent=5 // pred_check
      %p165 = pneg %p164
    $region22: #{_lambda_.4} parent=5 // pred_check_branch
      %167 = sbr.rel (%p165) target = $region24
    $region23: #{_lambda_.4} parent=5 // pred_region
      // Predicated region
      $region25: #{_lambda_.4} parent=23 // pred_check
        %p168 = pneg %p48
      $region26: #{_lambda_.4} parent=23 // pred_check_branch
        %170 = sbr.rel (%p168) target = $region28
      $region27: #{_lambda_.4} parent=23 // pred_region
        %p171 = scmp.lt.s32.totalorder %s16, 1
        %s172 = scalar_select %p171, %s16, 1
        %s173 = smul.addr %s172, 8
        %s174 = smul.addr %s173, 4
        %s175 = scalar_lea.vmem %s0, %s174
      $region28: #{_lambda_.4} parent=23 // pred_fallthru
        _
    $region24: #{_lambda_.4} parent=5 // pred_fallthru
      _
    %p176 = scmp.le.s32.totalorder 1, %s9
    %p177 = scmp.lt.s32.totalorder %s9, 3
    %p178 = pnand %p176, %p177
    %p179 = pneg %p178
    // Predicated region
    $region29: #{_lambda_.4} parent=5 // pred_check
      _
    $region30: #{_lambda_.4} parent=5 // pred_check_branch
      %181 = sbr.rel (%p178) target = $region32
    $region31: #{_lambda_.4} parent=5 // pred_region
      %s182 = ssub.s32 %s9, 1
      %p183 = scmp.lt.s32.totalorder %s19, 1
      %s184 = scalar_select %p183, %s19, 1
      %s185 = smul.addr %s184, 8
      %s186 = smul.addr %s185, 4
      %s187 = scalar_lea.vmem %s0, %s186
      %p188 = pneg %p54
      %p189 = pneg %p51
      %p190 = scmp.lt.s32.totalorder %s20, 0
      %s191 = scalar_select %p190, %s20, 0
      %s192 = smul.addr %s191, 4
      %s193 = scalar_lea.vmem %s1, %s192
      %p194 = pneg %p80
      %p195 = pneg %p77
      %p196 = scmp.lt.s32.totalorder %s20, 0
      %s197 = scalar_select %p196, %s20, 0
      %s198 = scalar_lea.vmem %s2, %s197
      %p199 = pneg %p106
      %p200 = pneg %p103
      %p201 = pneg %p136
      %p202 = pneg %p133
      %s203 = smul.u32 8, %s21
      %p204 = scmp.lt.s32.totalorder %s19, 1
      %s205 = scalar_select %p204, %s19, 1
      %p206 = scmp.lt.s32.totalorder %s203, 7
      %s207 = scalar_select %p206, %s203, 7
      %p208 = scmp.lt.s32.totalorder %s20, 0
      %s209 = scalar_select %p208, %s20, 0
      %s210 = sadd.s32 %s209, %s207
      %s211 = smul.addr %s205, 8
      %s212 = sadd.s32 %s210, %s211
      %s213 = smul.addr %s212, 4
      %s214 = scalar_lea.vmem %s3, %s213
      %p215 = scmp.lt.s32.totalorder %s19, 1
      %s216 = scalar_select %p215, %s19, 1
      %s217 = smul.addr %s216, 8
      %s218 = smul.addr %s217, 4
      %s219 = scalar_lea.vmem %s0, %s218
      %p220 = scmp.lt.s32.totalorder %s20, 0
      %s221 = scalar_select %p220, %s20, 0
      %s222 = smul.addr %s221, 4
      %s223 = scalar_lea.vmem %s1, %s222
      %p224 = scmp.lt.s32.totalorder %s20, 0
      %s225 = scalar_select %p224, %s20, 0
      %s226 = scalar_lea.vmem %s2, %s225
      %s227 = smul.u32 8, %s21
      %p228 = scmp.lt.s32.totalorder %s19, 1
      %s229 = scalar_select %p228, %s19, 1
      %p230 = scmp.lt.s32.totalorder %s227, 7
      %s231 = scalar_select %p230, %s227, 7
      %p232 = scmp.lt.s32.totalorder %s20, 0
      %s233 = scalar_select %p232, %s20, 0
      %s234 = sadd.s32 %s233, %s231
      %s235 = smul.addr %s229, 8
      %s236 = sadd.s32 %s234, %s235
      %s237 = smul.addr %s236, 4
      %s238 = scalar_lea.vmem %s3, %s237
      %s239 = smul.u32 8, %s21
      %s241 = smul.u32 %s21, 8
      %s242 = smul.addr %s241, 4
      %s243 = scalar_lea.vmem %s219, %s242
      %v244 = vld [vmem:[%s243] sm:$0xf]
      %v245 = vld [vmem:[%s243 + $0x4] sm:$0xf]
      %v246 = vld [vmem:[%s243 + $0x8] sm:$0xf]
      %v247 = vld [vmem:[%s243 + $0xc] sm:$0xf]
      %v248 = vld [vmem:[%s243 + $0x10] sm:$0xf]
      %v249 = vld [vmem:[%s243 + $0x14] sm:$0xf]
      %v250 = vld [vmem:[%s243 + $0x18] sm:$0xf]
      %v251 = vld [vmem:[%s243 + $0x1c] sm:$0xf]
      %v252 = vld [vmem:[%s223] sm:$0xf]
      %v253 = vld [vmem:[%s223 + $0x4] sm:$0xf]
      %v254 = vld [vmem:[%s223 + $0x8] sm:$0xf]
      %v255 = vld [vmem:[%s223 + $0xc] sm:$0xf]
      %v256 = vld [vmem:[%s223 + $0x10] sm:$0xf]
      %v257 = vld [vmem:[%s223 + $0x14] sm:$0xf]
      %v266 = vunpack.c.l.b16 %v244
      %v267 = vunpack.c.l.b16 %v245
      %v268 = vunpack.c.l.b16 %v246
      %v269 = vunpack.c.l.b16 %v247
      %v270 = vunpack.c.l.b16 %v248
      %v271 = vunpack.c.l.b16 %v249
      %v272 = vunpack.c.l.b16 %v250
      %v273 = vunpack.c.l.b16 %v251
      %v274 = vpack.c.b16 %v267, %v266
      %v275 = vpack.c.b16 %v269, %v268
      %v276 = vpack.c.b16 %v271, %v270
      %v277 = vpack.c.b16 %v273, %v272
      %v284 = vunpack.c.l.b16 %v252
      %v285 = vunpack.c.l.b16 %v253
      %v286 = vunpack.c.l.b16 %v254
      %v287 = vunpack.c.l.b16 %v255
      %v288 = vunpack.c.l.b16 %v256
      %v289 = vunpack.c.l.b16 %v257
      %v290 = vpack.c.b16 %v285, %v284
      %v291 = vpack.c.b16 %v287, %v286
      %v292 = vpack.c.b16 %v289, %v288
      %vm296 = vcmask 392192
      %v298 = vsel %vm296, %v274, 0
      %v301 = vsel %vm296, %v275, 0
      %v304 = vsel %vm296, %v276, 0
      %v307 = vsel %vm296, %v277, 0
      %309 = vmatprep.subr.bf16.mxu0 0
      %310 = vmatpush1.bf16.msra.mxu0 %v290
      %311 = vmatprep.subr.bf16.mxu0 0
      %312 = vmatpush1.bf16.msra.mxu0 %v291
      %313 = vmatprep.subr.bf16.mxu0 0
      %314 = vmatpush1.bf16.msra.mxu0 %v292
      %315 = vmatprep.subr.bf16.mxu0 0
      %316 = vmatpush1.bf16.msra.mxu0 0
      %317 = vmatprep.subr.bf16.mxu0 0
      %318 = vmatpush1.bf16.msra.mxu0 0
      %319 = vmatprep.subr.bf16.mxu0 0
      %320 = vmatpush1.bf16.msra.mxu0 0
      %321 = vmatprep.subr.bf16.mxu0 0
      %322 = vmatpush1.bf16.msra.mxu0 0
      %323 = vmatprep.subr.bf16.mxu0 0
      %324 = vmatpush1.bf16.msra.mxu0 0
      %325 = vmatprep.subr.bf16.mxu0 0
      %326 = vmatpush1.bf16.msra.mxu0 0
      %327 = vmatprep.subr.bf16.mxu0 0
      %328 = vmatpush1.bf16.msra.mxu0 0
      %329 = vmatprep.subr.bf16.mxu0 0
      %330 = vmatpush1.bf16.msra.mxu0 0
      %331 = vmatprep.subr.bf16.mxu0 0
      %332 = vmatpush1.bf16.msra.mxu0 0
      %333 = vmatprep.subr.bf16.mxu0 0
      %334 = vmatpush1.bf16.msra.mxu0 0
      %335 = vmatprep.subr.bf16.mxu0 0
      %336 = vmatpush1.bf16.msra.mxu0 0
      %337 = vmatprep.subr.bf16.mxu0 0
      %338 = vmatpush1.bf16.msra.mxu0 0
      %339 = vmatprep.subr.bf16.mxu0 0
      %340 = vmatpush1.bf16.msra.mxu0 0
      %341 = vmatprep.mubr.bf16.mxu0 0
      %342 = vmatmul.mubr.bf16.gmra.mrb[0].mxu0 %v298
      %v343 = vpop.f32.mrb[0].mxu0
      %v344 = vadd.f32 0.0, %v343
      %v345 = vpop.f32.mrb[0].mxu0
      %v346 = vpop.f32.mrb[0].mxu0
      %v347 = vadd.f32 0.0, %v346
      %v348 = vpop.f32.mrb[0].mxu0
      %349 = vmatprep.mubr.bf16.mxu0 0
      %350 = vmatmul.mubr.bf16.gmra.mrb[0].mxu0 %v301
      %v351 = vpop.f32.mrb[0].mxu0
      %v352 = vadd.f32 0.0, %v351
      %v353 = vpop.f32.mrb[0].mxu0
      %v354 = vpop.f32.mrb[0].mxu0
      %v355 = vadd.f32 0.0, %v354
      %v356 = vpop.f32.mrb[0].mxu0
      %357 = vmatprep.mubr.bf16.mxu0 0
      %358 = vmatmul.mubr.bf16.gmra.mrb[0].mxu0 %v304
      %v359 = vpop.f32.mrb[0].mxu0
      %v360 = vadd.f32 0.0, %v359
      %v361 = vpop.f32.mrb[0].mxu0
      %v362 = vpop.f32.mrb[0].mxu0
      %v363 = vadd.f32 0.0, %v362
      %v364 = vpop.f32.mrb[0].mxu0
      %365 = vmatprep.mubr.bf16.mxu0 0
      %366 = vmatmul.mubr.bf16.gmra.mrb[0].mxu0 %v307
      %v367 = vpop.f32.mrb[0].mxu0
      %v368 = vadd.f32 0.0, %v367
      %v369 = vpop.f32.mrb[0].mxu0
      %v370 = vpop.f32.mrb[0].mxu0
      %v371 = vadd.f32 0.0, %v370
      %v372 = vpop.f32.mrb[0].mxu0
      %373 = vdwg.mxu0
      %374 = vst [vmem:[#allocation2] sm:$0xff] %v344
      %375 = vst [vmem:[#allocation2 + $0x8] sm:$0xff] %v347
      %376 = vst [vmem:[#allocation2 + $0x10] sm:$0xff] %v352
      %377 = vst [vmem:[#allocation2 + $0x18] sm:$0xff] %v355
      %378 = vst [vmem:[#allocation2 + $0x20] sm:$0xff] %v360
      %379 = vst [vmem:[#allocation2 + $0x28] sm:$0xff] %v363
      %380 = vst [vmem:[#allocation2 + $0x30] sm:$0xff] %v368
      %381 = vst [vmem:[#allocation2 + $0x38] sm:$0xff] %v371
      %v382 = vld [vmem:[#allocation2] sm:$0xff]
      %v383 = vld [vmem:[#allocation2 + $0x8] sm:$0xff]
      %v384 = vld [vmem:[#allocation2 + $0x10] sm:$0xff]
      %v385 = vld [vmem:[#allocation2 + $0x18] sm:$0xff]
      %v386 = vld [vmem:[#allocation2 + $0x20] sm:$0xff]
      %v387 = vld [vmem:[#allocation2 + $0x28] sm:$0xff]
      %v388 = vld [vmem:[#allocation2 + $0x30] sm:$0xff]
      %v389 = vld [vmem:[#allocation2 + $0x38] sm:$0xff]
      %v390 = vld [vmem:[%s226] sm:$0x1]
      %v392 = vlaneseq
      %v393 = vshrl.u32 %v392, 7
      %v394 = vsub.s32 0, %v393
      %v395 = vrot.slane %v390, %v394
      %v397 = vadd.f32 %v382, %v395
      %v398 = vadd.f32 %v383, %v395
      %v399 = vadd.f32 %v384, %v395
      %v400 = vadd.f32 %v385, %v395
      %v401 = vadd.f32 %v386, %v395
      %v402 = vadd.f32 %v387, %v395
      %v403 = vadd.f32 %v388, %v395
      %v404 = vadd.f32 %v389, %v395
      %vm405 = vcmp.gt.f32.partialorder %v397, 0.0
      %vm406 = vcmp.gt.f32.partialorder %v398, 0.0
      %vm407 = vcmp.gt.f32.partialorder %v399, 0.0
      %vm408 = vcmp.gt.f32.partialorder %v400, 0.0
      %vm409 = vcmp.gt.f32.partialorder %v401, 0.0
      %vm410 = vcmp.gt.f32.partialorder %v402, 0.0
      %vm411 = vcmp.gt.f32.partialorder %v403, 0.0
      %vm412 = vcmp.gt.f32.partialorder %v404, 0.0
      %v413 = vmul.f32 %v397, 0.2
      %v414 = vmul.f32 %v398, 0.2
      %v415 = vmul.f32 %v399, 0.2
      %v416 = vmul.f32 %v400, 0.2
      %v417 = vmul.f32 %v401, 0.2
      %v418 = vmul.f32 %v402, 0.2
      %v419 = vmul.f32 %v403, 0.2
      %v420 = vmul.f32 %v404, 0.2
      %v421 = vsel %vm405, %v397, %v413
      %v422 = vsel %vm406, %v398, %v414
      %v423 = vsel %vm407, %v399, %v415
      %v424 = vsel %vm408, %v400, %v416
      %v425 = vsel %vm409, %v401, %v417
      %v426 = vsel %vm410, %v402, %v418
      %v427 = vsel %vm411, %v403, %v419
      %v428 = vsel %vm412, %v404, %v420
      %v429 = vpack.c.bf16 %v422, %v421
      %v430 = vpack.c.bf16 %v424, %v423
      %v431 = vpack.c.bf16 %v426, %v425
      %v432 = vpack.c.bf16 %v428, %v427
      %v437 = vunpack.c.l.b16 %v429
      %v438 = vunpack.c.h.b16 %v429
      %v439 = vunpack.c.l.b16 %v430
      %v440 = vunpack.c.h.b16 %v430
      %v441 = vunpack.c.l.b16 %v431
      %v442 = vunpack.c.h.b16 %v431
      %v443 = vunpack.c.l.b16 %v432
      %v444 = vunpack.c.h.b16 %v432
      %v445 = vpack.c.b16 %v437, %v437
      %v446 = vpack.c.b16 %v438, %v438
      %v447 = vpack.c.b16 %v439, %v439
      %v448 = vpack.c.b16 %v440, %v440
      %v449 = vpack.c.b16 %v441, %v441
      %v450 = vpack.c.b16 %v442, %v442
      %v451 = vpack.c.b16 %v443, %v443
      %v452 = vpack.c.b16 %v444, %v444
      %461 = vst [vmem:[%s238] sm:$0xf] %v445
      %462 = vst [vmem:[%s238 + $0x4] sm:$0xf] %v446
      %463 = vst [vmem:[%s238 + $0x8] sm:$0xf] %v447
      %464 = vst [vmem:[%s238 + $0xc] sm:$0xf] %v448
      %465 = vst [vmem:[%s238 + $0x10] sm:$0xf] %v449
      %466 = vst [vmem:[%s238 + $0x14] sm:$0xf] %v450
      %467 = vst [vmem:[%s238 + $0x18] sm:$0xf] %v451
      %468 = vst [vmem:[%s238 + $0x1c] sm:$0xf] %v452
      %s469 = smul.u32 8, %s21
      %p470 = scmp.lt.s32.totalorder %s19, 1
      %s471 = scalar_select %p470, %s19, 1
      %p472 = scmp.lt.s32.totalorder %s469, 7
      %s473 = scalar_select %p472, %s469, 7
      %p474 = scmp.lt.s32.totalorder %s20, 0
      %s475 = scalar_select %p474, %s20, 0
      %s476 = sadd.s32 %s475, %s473
      %s477 = smul.addr %s471, 8
      %s478 = sadd.s32 %s476, %s477
      %s479 = smul.addr %s478, 4
      %s480 = scalar_lea.vmem %s3, %s479
      // Predicated region
      $region33: #{_lambda_.4} parent=31 // pred_check
        %p481 = pneg %p133
      $region34: #{_lambda_.4} parent=31 // pred_check_branch
        %483 = sbr.rel (%p481) target = $region36
      $region35: #{_lambda_.4} parent=31 // pred_region
        %s484 = smul.u32 8, %s21
      $region36: #{_lambda_.4} parent=31 // pred_fallthru
        _
    $region32: #{_lambda_.4} parent=5 // pred_fallthru
      _
    %p485 = scmp.le.s32.totalorder 2, %s9
    // Predicated region
    $region37: #{_lambda_.4} parent=5 // pred_check
      %p486 = pneg %p485
    $region38: #{_lambda_.4} parent=5 // pred_check_branch
      %488 = sbr.rel (%p486) target = $region40
    $region39: #{_lambda_.4} parent=5 // pred_region
      %s489 = ssub.s32 %s9, 2
      // Predicated region
      $region41: #{_lambda_.4} parent=39 // pred_check
        %p490 = pneg %p139
      $region42: #{_lambda_.4} parent=39 // pred_check_branch
        %492 = sbr.rel (%p490) target = $region44
      $region43: #{_lambda_.4} parent=39 // pred_region
        %s493 = smul.u32 8, %s24
        %p494 = scmp.lt.s32.totalorder %s22, 1
        %s495 = scalar_select %p494, %s22, 1
        %p496 = scmp.lt.s32.totalorder %s493, 7
        %s497 = scalar_select %p496, %s493, 7
        %p498 = scmp.lt.s32.totalorder %s23, 0
        %s499 = scalar_select %p498, %s23, 0
        %s500 = sadd.s32 %s499, %s497
        %s501 = smul.addr %s495, 8
        %s502 = sadd.s32 %s500, %s501
        %s503 = smul.addr %s502, 4
        %s504 = scalar_lea.vmem %s3, %s503
      $region44: #{_lambda_.4} parent=39 // pred_fallthru
        _
    $region40: #{_lambda_.4} parent=5 // pred_fallthru
      _
  $region6: #{_lambda_.4} parent=0 // loop_footer
    %s13 = sadd.s32 1, %s9
  $region7: #{_lambda_.4} parent=0 // loop_footer_branch
    %8 = sbr.rel target = $region3
  $region8: #{_lambda_.4} parent=0 // loop_exit
    _

// kernel: _lambda_.6
$region0: #{_lambda_.6}
  #allocation0 [shape = 'u32[]', space=smem, size = 0x4, offset = 0x4, fixed_abs, tag = 'smem constant byte address 0x4 - core index']
  #allocation1 [shape = 'u32[144,128]{1,0:T(1,128)}', space=vmem, size = 0x12000, scoped, tag = 'internal scratch']
  #allocation2 [shape = 'f32[4,128]{1,0:T(4,128)}', space=vmem, size = 0x800, scoped, tag = 'scratch operand']
  %s0 = inlined_call_operand.vmem [shape: bf16[2,3,6,32], index: 0, kind: input, shape index: {}]
  %s1 = inlined_call_operand.vmem [shape: bf16[8,32,128], index: 1, kind: input, shape index: {}]
  %s2 = inlined_call_operand.vmem [shape: f32[1,128], index: 2, kind: input, shape index: {}]
  %s3 = inlined_call_operand.vmem [shape: bf16[2,4,128], index: 3, kind: output, shape index: {}]
  %s4 = sld [smem:[#allocation0]]
  $region45: #{_lambda_.6} parent=0
    _
  %s6 = ssub.s32 1, %s4
  %s7 = scalar_select 0, %s6, %s4
  loop: start=0, step=1, limit=4
  $region2: #{_lambda_.6} parent=0 // loop_pre_header
    _
  $region3: #{_lambda_.6} parent=0 // loop_header
    %s9 = sphi 0, %s13
    %p10 = scmp.ge.s32.totalorder %s9, 4
    %s16 = sphi 0, %s35
    %s17 = sphi 0, %s31
    %s18 = sphi 0, %s27
    %s19 = sphi 0, %s16
    %s20 = sphi 0, %s17
    %s21 = sphi 0, %s18
    %s22 = sphi 0, %s19
    %s23 = sphi 0, %s20
    %s24 = sphi 0, %s21
    %s38 = sphi 0, %s40
    %s41 = sphi 0, %s38
    %s42 = sphi 0, %s41
    %s58 = sphi 0, %s42
    %s64 = sphi 0, %s66
    %s67 = sphi 0, %s64
    %s68 = sphi 0, %s67
    %s84 = sphi 0, %s68
    %s90 = sphi 0, %s92
    %s93 = sphi 0, %s90
    %s94 = sphi 0, %s93
    %s110 = sphi 0, %s94
    %s120 = sphi 0, %s122
    %s123 = sphi 0, %s120
    %s124 = sphi 0, %s123
    %s140 = sphi 0, %s124
  $region4: #{_lambda_.6} parent=0 // loop_header_branch
    %12 = sbr.rel (%p10) target = $region8
  $region5: #{_lambda_.6} parent=0 // loop_body
    %s14 = ssub.s32 %s9, 1
    %s15 = ssub.s32 %s9, 2
    %s25 = sadd.s32 1, %s18
    %p26 = scmp.ge.s32.totalorder %s25, 1
    %s27 = scalar_select %p26, 0, %s25
    %s28 = sadd.s32 1, %s17
    %s29 = scalar_select %p26, %s28, %s17
    %p30 = scmp.ge.s32.totalorder %s29, 1
    %s31 = scalar_select %p30, 0, %s29
    %s32 = sadd.s32 1, %s16
    %s33 = scalar_select %p30, %s32, %s16
    %p34 = scmp.ge.s32.totalorder %s33, 2
    %s35 = scalar_select %p34, 0, %s33
    %s36 = ssub.s32 %s16, %s35
    %p37 = scmp.eq.s32.totalorder %s36, 0
    %s39 = sadd.s32 %s38, 1
    %s40 = scalar_select %p37, %s38, %s39
    %p43 = pneg %p37
    %p44 = scmp.eq.s32.totalorder %s9, 1
    %p45 = por %p43, %p44
    %p46 = scmp.ne.s32.totalorder %s38, %s41
    %p47 = scmp.eq.s32.totalorder %s9, 0
    %p48 = por %p46, %p47
    %p49 = scmp.ne.s32.totalorder %s38, %s41
    %p50 = scmp.eq.s32.totalorder %s14, 1
    %p51 = por %p49, %p50
    %p52 = scmp.ne.s32.totalorder %s41, %s42
    %p53 = scmp.eq.s32.totalorder %s14, 0
    %p54 = por %p52, %p53
    %p55 = scmp.ne.s32.totalorder %s41, %s42
    %p56 = scmp.eq.s32.totalorder %s15, 1
    %p57 = por %p55, %p56
    %p59 = scmp.ne.s32.totalorder %s42, %s58
    %p60 = scmp.eq.s32.totalorder %s15, 0
    %p61 = por %p59, %p60
    %s62 = ssub.s32 %s17, %s31
    %p63 = scmp.eq.s32.totalorder %s62, 0
    %s65 = sadd.s32 %s64, 1
    %s66 = scalar_select %p63, %s64, %s65
    %p69 = pneg %p63
    %p70 = scmp.eq.s32.totalorder %s9, 1
    %p71 = por %p69, %p70
    %p72 = scmp.ne.s32.totalorder %s64, %s67
    %p73 = scmp.eq.s32.totalorder %s9, 0
    %p74 = por %p72, %p73
    %p75 = scmp.ne.s32.totalorder %s64, %s67
    %p76 = scmp.eq.s32.totalorder %s14, 1
    %p77 = por %p75, %p76
    %p78 = scmp.ne.s32.totalorder %s67, %s68
    %p79 = scmp.eq.s32.totalorder %s14, 0
    %p80 = por %p78, %p79
    %p81 = scmp.ne.s32.totalorder %s67, %s68
    %p82 = scmp.eq.s32.totalorder %s15, 1
    %p83 = por %p81, %p82
    %p85 = scmp.ne.s32.totalorder %s68, %s84
    %p86 = scmp.eq.s32.totalorder %s15, 0
    %p87 = por %p85, %p86
    %s88 = ssub.s32 %s17, %s31
    %p89 = scmp.eq.s32.totalorder %s88, 0
    %s91 = sadd.s32 %s90, 1
    %s92 = scalar_select %p89, %s90, %s91
    %p95 = pneg %p89
    %p96 = scmp.eq.s32.totalorder %s9, 1
    %p97 = por %p95, %p96
    %p98 = scmp.ne.s32.totalorder %s90, %s93
    %p99 = scmp.eq.s32.totalorder %s9, 0
    %p100 = por %p98, %p99
    %p101 = scmp.ne.s32.totalorder %s90, %s93
    %p102 = scmp.eq.s32.totalorder %s14, 1
    %p103 = por %p101, %p102
    %p104 = scmp.ne.s32.totalorder %s93, %s94
    %p105 = scmp.eq.s32.totalorder %s14, 0
    %p106 = por %p104, %p105
    %p107 = scmp.ne.s32.totalorder %s93, %s94
    %p108 = scmp.eq.s32.totalorder %s15, 1
    %p109 = por %p107, %p108
    %p111 = scmp.ne.s32.totalorder %s94, %s110
    %p112 = scmp.eq.s32.totalorder %s15, 0
    %p113 = por %p111, %p112
    %s114 = ssub.s32 %s16, %s35
    %s115 = ssub.s32 %s18, %s27
    %s116 = sor.u32 %s114, %s115
    %s117 = ssub.s32 %s17, %s31
    %s118 = sor.u32 %s116, %s117
    %p119 = scmp.eq.s32.totalorder %s118, 0
    %s121 = sadd.s32 %s120, 1
    %s122 = scalar_select %p119, %s120, %s121
    %p125 = pneg %p119
    %p126 = scmp.eq.s32.totalorder %s9, 1
    %p127 = por %p125, %p126
    %p128 = scmp.ne.s32.totalorder %s120, %s123
    %p129 = scmp.eq.s32.totalorder %s9, 0
    %p130 = por %p128, %p129
    %p131 = scmp.ne.s32.totalorder %s120, %s123
    %p132 = scmp.eq.s32.totalorder %s14, 1
    %p133 = por %p131, %p132
    %p134 = scmp.ne.s32.totalorder %s123, %s124
    %p135 = scmp.eq.s32.totalorder %s14, 0
    %p136 = por %p134, %p135
    %p137 = scmp.ne.s32.totalorder %s123, %s124
    %p138 = scmp.eq.s32.totalorder %s15, 1
    %p139 = por %p137, %p138
    %p141 = scmp.ne.s32.totalorder %s124, %s140
    %p142 = scmp.eq.s32.totalorder %s15, 0
    %p143 = por %p141, %p142
    %p144 = scmp.le.s32.totalorder 1, %s9
    %p145 = scmp.lt.s32.totalorder %s9, 3
    %p146 = pnand %p144, %p145
    %p147 = pneg %p146
    // Predicated region
    $region9: #{_lambda_.6} parent=5 // pred_check
      _
    $region10: #{_lambda_.6} parent=5 // pred_check_branch
      %149 = sbr.rel (%p146) target = $region12
    $region11: #{_lambda_.6} parent=5 // pred_region
      %s150 = ssub.s32 %s9, 1
      // Predicated region
      $region13: #{_lambda_.6} parent=11 // pred_check
        %p151 = pneg %p80
      $region14: #{_lambda_.6} parent=11 // pred_check_branch
        %153 = sbr.rel (%p151) target = $region16
      $region15: #{_lambda_.6} parent=11 // pred_region
        %p154 = scmp.lt.s32.totalorder %s20, 0
        %s155 = scalar_select %p154, %s20, 0
        %s156 = smul.addr %s155, 4
        %s157 = scalar_lea.vmem %s1, %s156
      $region16: #{_lambda_.6} parent=11 // pred_fallthru
        _
      // Predicated region
      $region17: #{_lambda_.6} parent=11 // pred_check
        %p158 = pneg %p106
      $region18: #{_lambda_.6} parent=11 // pred_check_branch
        %160 = sbr.rel (%p158) target = $region20
      $region19: #{_lambda_.6} parent=11 // pred_region
        %p161 = scmp.lt.s32.totalorder %s20, 0
        %s162 = scalar_select %p161, %s20, 0
        %s163 = scalar_lea.vmem %s2, %s162
      $region20: #{_lambda_.6} parent=11 // pred_fallthru
        _
    $region12: #{_lambda_.6} parent=5 // pred_fallthru
      _
    %p164 = scmp.lt.s32.totalorder %s9, 2
    // Predicated region
    $region21: #{_lambda_.6} parent=5 // pred_check
      %p165 = pneg %p164
    $region22: #{_lambda_.6} parent=5 // pred_check_branch
      %167 = sbr.rel (%p165) target = $region24
    $region23: #{_lambda_.6} parent=5 // pred_region
      // Predicated region
      $region25: #{_lambda_.6} parent=23 // pred_check
        %p168 = pneg %p48
      $region26: #{_lambda_.6} parent=23 // pred_check_branch
        %170 = sbr.rel (%p168) target = $region28
      $region27: #{_lambda_.6} parent=23 // pred_region
        %p171 = scmp.lt.s32.totalorder %s16, 1
        %s172 = scalar_select %p171, %s16, 1
        %s173 = smul.addr %s172, 3
        %s174 = smul.addr %s173, 4
        %s175 = scalar_lea.vmem %s0, %s174
      $region28: #{_lambda_.6} parent=23 // pred_fallthru
        _
    $region24: #{_lambda_.6} parent=5 // pred_fallthru
      _
    %p176 = scmp.le.s32.totalorder 1, %s9
    %p177 = scmp.lt.s32.totalorder %s9, 3
    %p178 = pnand %p176, %p177
    %p179 = pneg %p178
    // Predicated region
    $region29: #{_lambda_.6} parent=5 // pred_check
      _
    $region30: #{_lambda_.6} parent=5 // pred_check_branch
      %181 = sbr.rel (%p178) target = $region32
    $region31: #{_lambda_.6} parent=5 // pred_region
      %s182 = ssub.s32 %s9, 1
      %p183 = scmp.lt.s32.totalorder %s19, 1
      %s184 = scalar_select %p183, %s19, 1
      %s185 = smul.addr %s184, 3
      %s186 = smul.addr %s185, 4
      %s187 = scalar_lea.vmem %s0, %s186
      %p188 = pneg %p54
      %p189 = pneg %p51
      %p190 = scmp.lt.s32.totalorder %s20, 0
      %s191 = scalar_select %p190, %s20, 0
      %s192 = smul.addr %s191, 4
      %s193 = scalar_lea.vmem %s1, %s192
      %p194 = pneg %p80
      %p195 = pneg %p77
      %p196 = scmp.lt.s32.totalorder %s20, 0
      %s197 = scalar_select %p196, %s20, 0
      %s198 = scalar_lea.vmem %s2, %s197
      %p199 = pneg %p106
      %p200 = pneg %p103
      %p201 = pneg %p136
      %p202 = pneg %p133
      %p203 = scmp.lt.s32.totalorder %s19, 1
      %s204 = scalar_select %p203, %s19, 1
      %p205 = scmp.lt.s32.totalorder %s21, 0
      %s206 = scalar_select %p205, %s21, 0
      %p207 = scmp.lt.s32.totalorder %s20, 0
      %s208 = scalar_select %p207, %s20, 0
      %s209 = sadd.s32 %s208, %s206
      %s210 = sadd.s32 %s209, %s204
      %s211 = smul.addr %s210, 2
      %s212 = scalar_lea.vmem %s3, %s211
      %p213 = scmp.lt.s32.totalorder %s19, 1
      %s214 = scalar_select %p213, %s19, 1
      %s215 = smul.addr %s214, 3
      %s216 = smul.addr %s215, 4
      %s217 = scalar_lea.vmem %s0, %s216
      %p218 = scmp.lt.s32.totalorder %s20, 0
      %s219 = scalar_select %p218, %s20, 0
      %s220 = smul.addr %s219, 4
      %s221 = scalar_lea.vmem %s1, %s220
      %p222 = scmp.lt.s32.totalorder %s20, 0
      %s223 = scalar_select %p222, %s20, 0
      %s224 = scalar_lea.vmem %s2, %s223
      %p225 = scmp.lt.s32.totalorder %s19, 1
      %s226 = scalar_select %p225, %s19, 1
      %p227 = scmp.lt.s32.totalorder %s21, 0
      %s228 = scalar_select %p227, %s21, 0
      %p229 = scmp.lt.s32.totalorder %s20, 0
      %s230 = scalar_select %p229, %s20, 0
      %s231 = sadd.s32 %s230, %s228
      %s232 = sadd.s32 %s231, %s226
      %s233 = smul.addr %s232, 2
      %s234 = scalar_lea.vmem %s3, %s233
      %s236 = smul.u32 %s21, 2
      %s237 = smul.addr %s236, 4
      %s238 = scalar_lea.vmem %s217, %s237
      %v239 = vld [vmem:[%s238] sm:$0x1]
      %v240 = vld [vmem:[%s238 + $0x4] sm:$0x1]
      %v241 = vld [vmem:[%s221] sm:$0xf]
      %v242 = vld [vmem:[%s221 + $0x4] sm:$0xf]
      %v243 = vld [vmem:[%s221 + $0x8] sm:$0xf]
      %v244 = vld [vmem:[%s221 + $0xc] sm:$0xf]
      %v247 = vcombine.low %v239, %v240
      %v249 = vunpack.c.l.s4 1966171168
      %v250 = vunpack.c.0.s8 %v249
      %v251 = vlaneseq
      %v252 = vshrl.u32 %v251, 7
      %v253 = vsub.s32 %v250, %v252
      %v254 = vrot.slane %v247, %v253
      %v256 = vunpack.c.l.s4 1966171168
      %v257 = vunpack.c.0.s8 %v256
      %v258 = vlaneseq
      %v259 = vshrl.u32 %v258, 7
      %v260 = vsub.s32 %v257, %v259
      %v261 = vrot.slane %v254, %v260
      %v266 = vunpack.c.l.b16 %v241
      %v267 = vunpack.c.l.b16 %v242
      %v268 = vunpack.c.l.b16 %v243
      %v269 = vunpack.c.l.b16 %v244
      %v270 = vpack.c.b16 %v267, %v266
      %v271 = vpack.c.b16 %v269, %v268
      %vm274 = vcmask 261120
      %v276 = vsel %vm274, %v261, 0
      %278 = vmatprep.subr.bf16.mxu0 0
      %279 = vmatpush1.bf16.msra.mxu0 %v270
      %280 = vmatprep.subr.bf16.mxu0 0
      %281 = vmatpush1.bf16.msra.mxu0 %v271
      %282 = vmatprep.subr.bf16.mxu0 0
      %283 = vmatpush1.bf16.msra.mxu0 0
      %284 = vmatprep.subr.bf16.mxu0 0
      %285 = vmatpush1.bf16.msra.mxu0 0
      %286 = vmatprep.subr.bf16.mxu0 0
      %287 = vmatpush1.bf16.msra.mxu0 0
      %288 = vmatprep.subr.bf16.mxu0 0
      %289 = vmatpush1.bf16.msra.mxu0 0
      %290 = vmatprep.subr.bf16.mxu0 0
      %291 = vmatpush1.bf16.msra.mxu0 0
      %292 = vmatprep.subr.bf16.mxu0 0
      %293 = vmatpush1.bf16.msra.mxu0 0
      %294 = vmatprep.subr.bf16.mxu0 0
      %295 = vmatpush1.bf16.msra.mxu0 0
      %296 = vmatprep.subr.bf16.mxu0 0
      %297 = vmatpush1.bf16.msra.mxu0 0
      %298 = vmatprep.subr.bf16.mxu0 0
      %299 = vmatpush1.bf16.msra.mxu0 0
      %300 = vmatprep.subr.bf16.mxu0 0
      %301 = vmatpush1.bf16.msra.mxu0 0
      %302 = vmatprep.subr.bf16.mxu0 0
      %303 = vmatpush1.bf16.msra.mxu0 0
      %304 = vmatprep.subr.bf16.mxu0 0
      %305 = vmatpush1.bf16.msra.mxu0 0
      %306 = vmatprep.subr.bf16.mxu0 0
      %307 = vmatpush1.bf16.msra.mxu0 0
      %308 = vmatprep.subr.bf16.mxu0 0
      %309 = vmatpush1.bf16.msra.mxu0 0
      %310 = vmatprep.mubr.bf16.mxu0 0
      %311 = vmatmul.mubr.bf16.gmra.mrb[0].mxu0 %v276
      %v312 = vpop.f32.mrb[0].mxu0
      %v313 = vadd.f32 0.0, %v312
      %v314 = vpop.f32.mrb[0].mxu0
      %v315 = vpop.f32.mrb[0].mxu0
      %v316 = vpop.f32.mrb[0].mxu0
      %317 = vdwg.mxu0
      %318 = vst [vmem:[#allocation2] sm:$0xf] %v313
      %v319 = vld [vmem:[%s238] sm:$0x3]
      %v320 = vld [vmem:[%s238 + $0x4] sm:$0x3]
      %v324 = vunpack.c.l.s4 1966171168
      %v325 = vunpack.c.0.s8 %v324
      %v326 = vlaneseq
      %v327 = vshrl.u32 %v326, 7
      %v328 = vsub.s32 %v325, %v327
      %v329 = vrot.slane %v319, %v328
      %v330 = vcombine.high %v329, %v329
      %v332 = vunpack.c.l.s4 1966171168
      %v333 = vunpack.c.0.s8 %v332
      %v334 = vlaneseq
      %v335 = vshrl.u32 %v334, 7
      %v336 = vsub.s32 %v333, %v335
      %v337 = vrot.slane %v329, %v336
      %v339 = vunpack.c.l.s4 1966171168
      %v340 = vunpack.c.0.s8 %v339
      %v341 = vlaneseq
      %v342 = vshrl.u32 %v341, 7
      %v343 = vsub.s32 %v340, %v342
      %v344 = vrot.slane %v330, %v343
      %v346 = vunpack.c.l.s4 1966171168
      %v347 = vunpack.c.0.s8 %v346
      %v348 = vlaneseq
      %v349 = vshrl.u32 %v348, 7
      %v350 = vsub.s32 %v347, %v349
      %v351 = vrot.slane %v320, %v350
      %v352 = vcombine.high %v351, %v351
      %v354 = vunpack.c.l.s4 1966171168
      %v355 = vunpack.c.0.s8 %v354
      %v356 = vlaneseq
      %v357 = vshrl.u32 %v356, 7
      %v358 = vsub.s32 %v355, %v357
      %v359 = vrot.slane %v351, %v358
      %v361 = vunpack.c.l.s4 1966171168
      %v362 = vunpack.c.0.s8 %v361
      %v363 = vlaneseq
      %v364 = vshrl.u32 %v363, 7
      %v365 = vsub.s32 %v362, %v364
      %v366 = vrot.slane %v352, %v365
      %vm367 = vsmask.f32 256
      %vm368 = vsmask.f32 1284
      %vm369 = vmor %vm367, %vm368
      %vm370 = vsmask.f32 2312
      %vm371 = vmor %vm369, %vm370
      %vm372 = vsmask.f32 3340
      %vm373 = vmor %vm371, %vm372
      %vm374 = vsmask.f32 4368
      %vm375 = vmor %vm373, %vm374
      %vm376 = vsmask.f32 5396
      %vm377 = vmor %vm375, %vm376
      %vm378 = vsmask.f32 6424
      %vm379 = vmor %vm377, %vm378
      %vm380 = vsmask.f32 7452
      %vm381 = vmor %vm379, %vm380
      %v383 = vshrl.u32 %v337, 16
      %v385 = vrot.slane %v383, 7
      %v386 = vrot.slane %v385, 1
      %v388 = vshll.u32 %v344, 16
      %v390 = vsel %vm381, %v386, %v388
      %v392 = vshrl.u32 %v359, 16
      %v394 = vrot.slane %v392, 7
      %v395 = vrot.slane %v394, 1
      %v397 = vshll.u32 %v366, 16
      %v399 = vsel %vm381, %v395, %v397
      %s400 = scalar_lea.vmem %s221, 16
      %v401 = vld [vmem:[%s400] sm:$0xf]
      %v402 = vld [vmem:[%s400 + $0x4] sm:$0xf]
      %v403 = vld [vmem:[%s400 + $0x8] sm:$0xf]
      %v404 = vld [vmem:[%s400 + $0xc] sm:$0xf]
      %v405 = vcombine.low %v390, %v399
      %v407 = vunpack.c.l.s4 1966171168
      %v408 = vunpack.c.0.s8 %v407
      %v409 = vlaneseq
      %v410 = vshrl.u32 %v409, 7
      %v411 = vsub.s32 %v408, %v410
      %v412 = vrot.slane %v405, %v411
      %v414 = vunpack.c.l.s4 1966171168
      %v415 = vunpack.c.0.s8 %v414
      %v416 = vlaneseq
      %v417 = vshrl.u32 %v416, 7
      %v418 = vsub.s32 %v415, %v417
      %v419 = vrot.slane %v412, %v418
      %v424 = vunpack.c.l.b16 %v401
      %v425 = vunpack.c.l.b16 %v402
      %v426 = vunpack.c.l.b16 %v403
      %v427 = vunpack.c.l.b16 %v404
      %v428 = vpack.c.b16 %v425, %v424
      %v429 = vpack.c.b16 %v427, %v426
      %v433 = vsel %vm274, %v419, 0
      %435 = vmatprep.subr.bf16.mxu0 0
      %436 = vmatpush1.bf16.msra.mxu0 %v428
      %437 = vmatprep.subr.bf16.mxu0 0
      %438 = vmatpush1.bf16.msra.mxu0 %v429
      %439 = vmatprep.subr.bf16.mxu0 0
      %440 = vmatpush1.bf16.msra.mxu0 0
      %441 = vmatprep.subr.bf16.mxu0 0
      %442 = vmatpush1.bf16.msra.mxu0 0
      %443 = vmatprep.subr.bf16.mxu0 0
      %444 = vmatpush1.bf16.msra.mxu0 0
      %445 = vmatprep.subr.bf16.mxu0 0
      %446 = vmatpush1.bf16.msra.mxu0 0
      %447 = vmatprep.subr.bf16.mxu0 0
      %448 = vmatpush1.bf16.msra.mxu0 0
      %449 = vmatprep.subr.bf16.mxu0 0
      %450 = vmatpush1.bf16.msra.mxu0 0
      %451 = vmatprep.subr.bf16.mxu0 0
      %452 = vmatpush1.bf16.msra.mxu0 0
      %453 = vmatprep.subr.bf16.mxu0 0
      %454 = vmatpush1.bf16.msra.mxu0 0
      %455 = vmatprep.subr.bf16.mxu0 0
      %456 = vmatpush1.bf16.msra.mxu0 0
      %457 = vmatprep.subr.bf16.mxu0 0
      %458 = vmatpush1.bf16.msra.mxu0 0
      %459 = vmatprep.subr.bf16.mxu0 0
      %460 = vmatpush1.bf16.msra.mxu0 0
      %461 = vmatprep.subr.bf16.mxu0 0
      %462 = vmatpush1.bf16.msra.mxu0 0
      %463 = vmatprep.subr.bf16.mxu0 0
      %464 = vmatpush1.bf16.msra.mxu0 0
      %465 = vmatprep.subr.bf16.mxu0 0
      %466 = vmatpush1.bf16.msra.mxu0 0
      %467 = vmatprep.mubr.bf16.mxu0 0
      %468 = vmatmul.mubr.bf16.gmra.mrb[0].mxu0 %v433
      %v469 = vpop.f32.mrb[0].mxu0
      %v470 = vadd.f32 0.0, %v469
      %v471 = vpop.f32.mrb[0].mxu0
      %v472 = vpop.f32.mrb[0].mxu0
      %v473 = vpop.f32.mrb[0].mxu0
      %474 = vdwg.mxu0
      %v475 = vld [vmem:[#allocation2] sm:$0xf]
      %v476 = vadd.f32 %v475, %v470
      %477 = vst [vmem:[#allocation2] sm:$0xf] %v476
      %v478 = vld [vmem:[%s238] sm:$0x6]
      %v479 = vld [vmem:[%s238 + $0x4] sm:$0x6]
      %v483 = vunpack.c.l.s4 1966171168
      %v484 = vunpack.c.0.s8 %v483
      %v485 = vlaneseq
      %v486 = vshrl.u32 %v485, 7
      %v487 = vsub.s32 %v484, %v486
      %v488 = vrot.slane %v478, %v487
      %v489 = vcombine.high %v488, %v488
      %v491 = vunpack.c.l.s4 1966171168
      %v492 = vunpack.c.0.s8 %v491
      %v493 = vlaneseq
      %v494 = vshrl.u32 %v493, 7
      %v495 = vsub.s32 %v492, %v494
      %v496 = vrot.slane %v488, %v495
      %v498 = vunpack.c.l.s4 1966171168
      %v499 = vunpack.c.0.s8 %v498
      %v500 = vlaneseq
      %v501 = vshrl.u32 %v500, 7
      %v502 = vsub.s32 %v499, %v501
      %v503 = vrot.slane %v489, %v502
      %v504 = vcombine.high %v496, %v496
      %v506 = vunpack.c.l.s4 1966171168
      %v507 = vunpack.c.0.s8 %v506
      %v508 = vlaneseq
      %v509 = vshrl.u32 %v508, 7
      %v510 = vsub.s32 %v507, %v509
      %v511 = vrot.slane %v479, %v510
      %v512 = vcombine.high %v511, %v511
      %v514 = vunpack.c.l.s4 1966171168
      %v515 = vunpack.c.0.s8 %v514
      %v516 = vlaneseq
      %v517 = vshrl.u32 %v516, 7
      %v518 = vsub.s32 %v515, %v517
      %v519 = vrot.slane %v511, %v518
      %v521 = vunpack.c.l.s4 1966171168
      %v522 = vunpack.c.0.s8 %v521
      %v523 = vlaneseq
      %v524 = vshrl.u32 %v523, 7
      %v525 = vsub.s32 %v522, %v524
      %v526 = vrot.slane %v512, %v525
      %v527 = vcombine.high %v519, %v519
      %v529 = vshrl.u32 %v503, 16
      %v531 = vrot.slane %v529, 7
      %v532 = vrot.slane %v531, 1
      %v534 = vshll.u32 %v504, 16
      %v536 = vsel %vm381, %v532, %v534
      %v538 = vshrl.u32 %v526, 16
      %v540 = vrot.slane %v538, 7
      %v541 = vrot.slane %v540, 1
      %v543 = vshll.u32 %v527, 16
      %v545 = vsel %vm381, %v541, %v543
      %s546 = scalar_lea.vmem %s221, 32
      %v547 = vld [vmem:[%s546] sm:$0xf]
      %v548 = vld [vmem:[%s546 + $0x4] sm:$0xf]
      %v549 = vld [vmem:[%s546 + $0x8] sm:$0xf]
      %v550 = vld [vmem:[%s546 + $0xc] sm:$0xf]
      %v551 = vcombine.low %v536, %v545
      %v553 = vunpack.c.l.s4 1966171168
      %v554 = vunpack.c.0.s8 %v553
      %v555 = vlaneseq
      %v556 = vshrl.u32 %v555, 7
      %v557 = vsub.s32 %v554, %v556
      %v558 = vrot.slane %v551, %v557
      %v560 = vunpack.c.l.s4 1966171168
      %v561 = vunpack.c.0.s8 %v560
      %v562 = vlaneseq
      %v563 = vshrl.u32 %v562, 7
      %v564 = vsub.s32 %v561, %v563
      %v565 = vrot.slane %v558, %v564
      %v570 = vunpack.c.l.b16 %v547
      %v571 = vunpack.c.l.b16 %v548
      %v572 = vunpack.c.l.b16 %v549
      %v573 = vunpack.c.l.b16 %v550
      %v574 = vpack.c.b16 %v571, %v570
      %v575 = vpack.c.b16 %v573, %v572
      %v579 = vsel %vm274, %v565, 0
      %581 = vmatprep.subr.bf16.mxu0 0
      %582 = vmatpush1.bf16.msra.mxu0 %v574
      %583 = vmatprep.subr.bf16.mxu0 0
      %584 = vmatpush1.bf16.msra.mxu0 %v575
      %585 = vmatprep.subr.bf16.mxu0 0
      %586 = vmatpush1.bf16.msra.mxu0 0
      %587 = vmatprep.subr.bf16.mxu0 0
      %588 = vmatpush1.bf16.msra.mxu0 0
      %589 = vmatprep.subr.bf16.mxu0 0
      %590 = vmatpush1.bf16.msra.mxu0 0
      %591 = vmatprep.subr.bf16.mxu0 0
      %592 = vmatpush1.bf16.msra.mxu0 0
      %593 = vmatprep.subr.bf16.mxu0 0
      %594 = vmatpush1.bf16.msra.mxu0 0
      %595 = vmatprep.subr.bf16.mxu0 0
      %596 = vmatpush1.bf16.msra.mxu0 0
      %597 = vmatprep.subr.bf16.mxu0 0
      %598 = vmatpush1.bf16.msra.mxu0 0
      %599 = vmatprep.subr.bf16.mxu0 0
      %600 = vmatpush1.bf16.msra.mxu0 0
      %601 = vmatprep.subr.bf16.mxu0 0
      %602 = vmatpush1.bf16.msra.mxu0 0
      %603 = vmatprep.subr.bf16.mxu0 0
      %604 = vmatpush1.bf16.msra.mxu0 0
      %605 = vmatprep.subr.bf16.mxu0 0
      %606 = vmatpush1.bf16.msra.mxu0 0
      %607 = vmatprep.subr.bf16.mxu0 0
      %608 = vmatpush1.bf16.msra.mxu0 0
      %609 = vmatprep.subr.bf16.mxu0 0
      %610 = vmatpush1.bf16.msra.mxu0 0
      %611 = vmatprep.subr.bf16.mxu0 0
      %612 = vmatpush1.bf16.msra.mxu0 0
      %613 = vmatprep.mubr.bf16.mxu0 0
      %614 = vmatmul.mubr.bf16.gmra.mrb[0].mxu0 %v579
      %v615 = vpop.f32.mrb[0].mxu0
      %v616 = vadd.f32 0.0, %v615
      %v617 = vpop.f32.mrb[0].mxu0
      %v618 = vpop.f32.mrb[0].mxu0
      %v619 = vpop.f32.mrb[0].mxu0
      %620 = vdwg.mxu0
      %v621 = vld [vmem:[#allocation2] sm:$0xf]
      %v622 = vadd.f32 %v621, %v616
      %623 = vst [vmem:[#allocation2] sm:$0xf] %v622
      %v624 = vld [vmem:[%s238] sm:$0x4]
      %v625 = vld [vmem:[%s238 + $0x4] sm:$0x4]
      %v629 = vunpack.c.l.s4 1966171168
      %v630 = vunpack.c.0.s8 %v629
      %v631 = vlaneseq
      %v632 = vshrl.u32 %v631, 7
      %v633 = vsub.s32 %v630, %v632
      %v634 = vrot.slane %v624, %v633
      %v636 = vunpack.c.l.s4 1966171168
      %v637 = vunpack.c.0.s8 %v636
      %v638 = vlaneseq
      %v639 = vshrl.u32 %v638, 7
      %v640 = vsub.s32 %v637, %v639
      %v641 = vrot.slane %v634, %v640
      %v642 = vcombine.high %v641, %v641
      %v644 = vunpack.c.l.s4 1966171168
      %v645 = vunpack.c.0.s8 %v644
      %v646 = vlaneseq
      %v647 = vshrl.u32 %v646, 7
      %v648 = vsub.s32 %v645, %v647
      %v649 = vrot.slane %v625, %v648
      %v651 = vunpack.c.l.s4 1966171168
      %v652 = vunpack.c.0.s8 %v651
      %v653 = vlaneseq
      %v654 = vshrl.u32 %v653, 7
      %v655 = vsub.s32 %v652, %v654
      %v656 = vrot.slane %v649, %v655
      %v657 = vcombine.high %v656, %v656
      %s658 = scalar_lea.vmem %s221, 48
      %v659 = vld [vmem:[%s658] sm:$0xf]
      %v660 = vld [vmem:[%s658 + $0x4] sm:$0xf]
      %v661 = vld [vmem:[%s658 + $0x8] sm:$0xf]
      %v662 = vld [vmem:[%s658 + $0xc] sm:$0xf]
      %v663 = vcombine.low %v642, %v657
      %v665 = vunpack.c.l.s4 1966171168
      %v666 = vunpack.c.0.s8 %v665
      %v667 = vlaneseq
      %v668 = vshrl.u32 %v667, 7
      %v669 = vsub.s32 %v666, %v668
      %v670 = vrot.slane %v663, %v669
      %v672 = vunpack.c.l.s4 1966171168
      %v673 = vunpack.c.0.s8 %v672
      %v674 = vlaneseq
      %v675 = vshrl.u32 %v674, 7
      %v676 = vsub.s32 %v673, %v675
      %v677 = vrot.slane %v670, %v676
      %v682 = vunpack.c.l.b16 %v659
      %v683 = vunpack.c.l.b16 %v660
      %v684 = vunpack.c.l.b16 %v661
      %v685 = vunpack.c.l.b16 %v662
      %v686 = vpack.c.b16 %v683, %v682
      %v687 = vpack.c.b16 %v685, %v684
      %v691 = vsel %vm274, %v677, 0
      %693 = vmatprep.subr.bf16.mxu0 0
      %694 = vmatpush1.bf16.msra.mxu0 %v686
      %695 = vmatprep.subr.bf16.mxu0 0
      %696 = vmatpush1.bf16.msra.mxu0 %v687
      %697 = vmatprep.subr.bf16.mxu0 0
      %698 = vmatpush1.bf16.msra.mxu0 0
      %699 = vmatprep.subr.bf16.mxu0 0
      %700 = vmatpush1.bf16.msra.mxu0 0
      %701 = vmatprep.subr.bf16.mxu0 0
      %702 = vmatpush1.bf16.msra.mxu0 0
      %703 = vmatprep.subr.bf16.mxu0 0
      %704 = vmatpush1.bf16.msra.mxu0 0
      %705 = vmatprep.subr.bf16.mxu0 0
      %706 = vmatpush1.bf16.msra.mxu0 0
      %707 = vmatprep.subr.bf16.mxu0 0
      %708 = vmatpush1.bf16.msra.mxu0 0
      %709 = vmatprep.subr.bf16.mxu0 0
      %710 = vmatpush1.bf16.msra.mxu0 0
      %711 = vmatprep.subr.bf16.mxu0 0
      %712 = vmatpush1.bf16.msra.mxu0 0
      %713 = vmatprep.subr.bf16.mxu0 0
      %714 = vmatpush1.bf16.msra.mxu0 0
      %715 = vmatprep.subr.bf16.mxu0 0
      %716 = vmatpush1.bf16.msra.mxu0 0
      %717 = vmatprep.subr.bf16.mxu0 0
      %718 = vmatpush1.bf16.msra.mxu0 0
      %719 = vmatprep.subr.bf16.mxu0 0
      %720 = vmatpush1.bf16.msra.mxu0 0
      %721 = vmatprep.subr.bf16.mxu0 0
      %722 = vmatpush1.bf16.msra.mxu0 0
      %723 = vmatprep.subr.bf16.mxu0 0
      %724 = vmatpush1.bf16.msra.mxu0 0
      %725 = vmatprep.mubr.bf16.mxu0 0
      %726 = vmatmul.mubr.bf16.gmra.mrb[0].mxu0 %v691
      %v727 = vpop.f32.mrb[0].mxu0
      %v728 = vadd.f32 0.0, %v727
      %v729 = vpop.f32.mrb[0].mxu0
      %v730 = vpop.f32.mrb[0].mxu0
      %v731 = vpop.f32.mrb[0].mxu0
      %732 = vdwg.mxu0
      %v733 = vld [vmem:[#allocation2] sm:$0xf]
      %v734 = vadd.f32 %v733, %v728
      %735 = vst [vmem:[#allocation2] sm:$0xf] %v734
      %s736 = sadd.s32 %s236, 1
      %s737 = smul.addr %s736, 4
      %s738 = scalar_lea.vmem %s217, %s737
      %v739 = vld [vmem:[%s738] sm:$0x1]
      %v740 = vld [vmem:[%s738 + $0x4] sm:$0x1]
      %s741 = scalar_lea.vmem %s221, 64
      %v742 = vld [vmem:[%s741] sm:$0xf]
      %v743 = vld [vmem:[%s741 + $0x4] sm:$0xf]
      %v744 = vld [vmem:[%s741 + $0x8] sm:$0xf]
      %v745 = vld [vmem:[%s741 + $0xc] sm:$0xf]
      %v748 = vcombine.low %v739, %v740
      %v750 = vunpack.c.l.s4 1966171168
      %v751 = vunpack.c.0.s8 %v750
      %v752 = vlaneseq
      %v753 = vshrl.u32 %v752, 7
      %v754 = vsub.s32 %v751, %v753
      %v755 = vrot.slane %v748, %v754
      %v757 = vunpack.c.l.s4 1966171168
      %v758 = vunpack.c.0.s8 %v757
      %v759 = vlaneseq
      %v760 = vshrl.u32 %v759, 7
      %v761 = vsub.s32 %v758, %v760
      %v762 = vrot.slane %v755, %v761
      %v767 = vunpack.c.l.b16 %v742
      %v768 = vunpack.c.l.b16 %v743
      %v769 = vunpack.c.l.b16 %v744
      %v770 = vunpack.c.l.b16 %v745
      %v771 = vpack.c.b16 %v768, %v767
      %v772 = vpack.c.b16 %v770, %v769
      %v776 = vsel %vm274, %v762, 0
      %778 = vmatprep.subr.bf16.mxu0 0
      %779 = vmatpush1.bf16.msra.mxu0 %v771
      %780 = vmatprep.subr.bf16.mxu0 0
      %781 = vmatpush1.bf16.msra.mxu0 %v772
      %782 = vmatprep.subr.bf16.mxu0 0
      %783 = vmatpush1.bf16.msra.mxu0 0
      %784 = vmatprep.subr.bf16.mxu0 0
      %785 = vmatpush1.bf16.msra.mxu0 0
      %786 = vmatprep.subr.bf16.mxu0 0
      %787 = vmatpush1.bf16.msra.mxu0 0
      %788 = vmatprep.subr.bf16.mxu0 0
      %789 = vmatpush1.bf16.msra.mxu0 0
      %790 = vmatprep.subr.bf16.mxu0 0
      %791 = vmatpush1.bf16.msra.mxu0 0
      %792 = vmatprep.subr.bf16.mxu0 0
      %793 = vmatpush1.bf16.msra.mxu0 0
      %794 = vmatprep.subr.bf16.mxu0 0
      %795 = vmatpush1.bf16.msra.mxu0 0
      %796 = vmatprep.subr.bf16.mxu0 0
      %797 = vmatpush1.bf16.msra.mxu0 0
      %798 = vmatprep.subr.bf16.mxu0 0
      %799 = vmatpush1.bf16.msra.mxu0 0
      %800 = vmatprep.subr.bf16.mxu0 0
      %801 = vmatpush1.bf16.msra.mxu0 0
      %802 = vmatprep.subr.bf16.mxu0 0
      %803 = vmatpush1.bf16.msra.mxu0 0
      %804 = vmatprep.subr.bf16.mxu0 0
      %805 = vmatpush1.bf16.msra.mxu0 0
      %806 = vmatprep.subr.bf16.mxu0 0
      %807 = vmatpush1.bf16.msra.mxu0 0
      %808 = vmatprep.subr.bf16.mxu0 0
      %809 = vmatpush1.bf16.msra.mxu0 0
      %810 = vmatprep.mubr.bf16.mxu0 0
      %811 = vmatmul.mubr.bf16.gmra.mrb[0].mxu0 %v776
      %v812 = vpop.f32.mrb[0].mxu0
      %v813 = vadd.f32 0.0, %v812
      %v814 = vpop.f32.mrb[0].mxu0
      %v815 = vpop.f32.mrb[0].mxu0
      %v816 = vpop.f32.mrb[0].mxu0
      %817 = vdwg.mxu0
      %v818 = vld [vmem:[#allocation2] sm:$0xf]
      %v819 = vadd.f32 %v818, %v813
      %820 = vst [vmem:[#allocation2] sm:$0xf] %v819
      %v821 = vld [vmem:[%s738] sm:$0x3]
      %v822 = vld [vmem:[%s738 + $0x4] sm:$0x3]
      %v826 = vunpack.c.l.s4 1966171168
      %v827 = vunpack.c.0.s8 %v826
      %v828 = vlaneseq
      %v829 = vshrl.u32 %v828, 7
      %v830 = vsub.s32 %v827, %v829
      %v831 = vrot.slane %v821, %v830
      %v832 = vcombine.high %v831, %v831
      %v834 = vunpack.c.l.s4 1966171168
      %v835 = vunpack.c.0.s8 %v834
      %v836 = vlaneseq
      %v837 = vshrl.u32 %v836, 7
      %v838 = vsub.s32 %v835, %v837
      %v839 = vrot.slane %v831, %v838
      %v841 = vunpack.c.l.s4 1966171168
      %v842 = vunpack.c.0.s8 %v841
      %v843 = vlaneseq
      %v844 = vshrl.u32 %v843, 7
      %v845 = vsub.s32 %v842, %v844
      %v846 = vrot.slane %v832, %v845
      %v848 = vunpack.c.l.s4 1966171168
      %v849 = vunpack.c.0.s8 %v848
      %v850 = vlaneseq
      %v851 = vshrl.u32 %v850, 7
      %v852 = vsub.s32 %v849, %v851
      %v853 = vrot.slane %v822, %v852
      %v854 = vcombine.high %v853, %v853
      %v856 = vunpack.c.l.s4 1966171168
      %v857 = vunpack.c.0.s8 %v856
      %v858 = vlaneseq
      %v859 = vshrl.u32 %v858, 7
      %v860 = vsub.s32 %v857, %v859
      %v861 = vrot.slane %v853, %v860
      %v863 = vunpack.c.l.s4 1966171168
      %v864 = vunpack.c.0.s8 %v863
      %v865 = vlaneseq
      %v866 = vshrl.u32 %v865, 7
      %v867 = vsub.s32 %v864, %v866
      %v868 = vrot.slane %v854, %v867
      %v870 = vshrl.u32 %v839, 16
      %v872 = vrot.slane %v870, 7
      %v873 = vrot.slane %v872, 1
      %v875 = vshll.u32 %v846, 16
      %v877 = vsel %vm381, %v873, %v875
      %v879 = vshrl.u32 %v861, 16
      %v881 = vrot.slane %v879, 7
      %v882 = vrot.slane %v881, 1
      %v884 = vshll.u32 %v868, 16
      %v886 = vsel %vm381, %v882, %v884
      %s887 = scalar_lea.vmem %s221, 80
      %v888 = vld [vmem:[%s887] sm:$0xf]
      %v889 = vld [vmem:[%s887 + $0x4] sm:$0xf]
      %v890 = vld [vmem:[%s887 + $0x8] sm:$0xf]
      %v891 = vld [vmem:[%s887 + $0xc] sm:$0xf]
      %v892 = vcombine.low %v877, %v886
      %v894 = vunpack.c.l.s4 1966171168
      %v895 = vunpack.c.0.s8 %v894
      %v896 = vlaneseq
      %v897 = vshrl.u32 %v896, 7
      %v898 = vsub.s32 %v895, %v897
      %v899 = vrot.slane %v892, %v898
      %v901 = vunpack.c.l.s4 1966171168
      %v902 = vunpack.c.0.s8 %v901
      %v903 = vlaneseq
      %v904 = vshrl.u32 %v903, 7
      %v905 = vsub.s32 %v902, %v904
      %v906 = vrot.slane %v899, %v905
      %v911 = vunpack.c.l.b16 %v888
      %v912 = vunpack.c.l.b16 %v889
      %v913 = vunpack.c.l.b16 %v890
      %v914 = vunpack.c.l.b16 %v891
      %v915 = vpack.c.b16 %v912, %v911
      %v916 = vpack.c.b16 %v914, %v913
      %v920 = vsel %vm274, %v906, 0
      %922 = vmatprep.subr.bf16.mxu0 0
      %923 = vmatpush1.bf16.msra.mxu0 %v915
      %924 = vmatprep.subr.bf16.mxu0 0
      %925 = vmatpush1.bf16.msra.mxu0 %v916
      %926 = vmatprep.subr.bf16.mxu0 0
      %927 = vmatpush1.bf16.msra.mxu0 0
      %928 = vmatprep.subr.bf16.mxu0 0
      %929 = vmatpush1.bf16.msra.mxu0 0
      %930 = vmatprep.subr.bf16.mxu0 0
      %931 = vmatpush1.bf16.msra.mxu0 0
      %932 = vmatprep.subr.bf16.mxu0 0
      %933 = vmatpush1.bf16.msra.mxu0 0
      %934 = vmatprep.subr.bf16.mxu0 0
      %935 = vmatpush1.bf16.msra.mxu0 0
      %936 = vmatprep.subr.bf16.mxu0 0
      %937 = vmatpush1.bf16.msra.mxu0 0
      %938 = vmatprep.subr.bf16.mxu0 0
      %939 = vmatpush1.bf16.msra.mxu0 0
      %940 = vmatprep.subr.bf16.mxu0 0
      %941 = vmatpush1.bf16.msra.mxu0 0
      %942 = vmatprep.subr.bf16.mxu0 0
      %943 = vmatpush1.bf16.msra.mxu0 0
      %944 = vmatprep.subr.bf16.mxu0 0
      %945 = vmatpush1.bf16.msra.mxu0 0
      %946 = vmatprep.subr.bf16.mxu0 0
      %947 = vmatpush1.bf16.msra.mxu0 0
      %948 = vmatprep.subr.bf16.mxu0 0
      %949 = vmatpush1.bf16.msra.mxu0 0
      %950 = vmatprep.subr.bf16.mxu0 0
      %951 = vmatpush1.bf16.msra.mxu0 0
      %952 = vmatprep.subr.bf16.mxu0 0
      %953 = vmatpush1.bf16.msra.mxu0 0
      %954 = vmatprep.mubr.bf16.mxu0 0
      %955 = vmatmul.mubr.bf16.gmra.mrb[0].mxu0 %v920
      %v956 = vpop.f32.mrb[0].mxu0
      %v957 = vadd.f32 0.0, %v956
      %v958 = vpop.f32.mrb[0].mxu0
      %v959 = vpop.f32.mrb[0].mxu0
      %v960 = vpop.f32.mrb[0].mxu0
      %961 = vdwg.mxu0
      %v962 = vld [vmem:[#allocation2] sm:$0xf]
      %v963 = vadd.f32 %v962, %v957
      %964 = vst [vmem:[#allocation2] sm:$0xf] %v963
      %v965 = vld [vmem:[%s738] sm:$0x6]
      %v966 = vld [vmem:[%s738 + $0x4] sm:$0x6]
      %v970 = vunpack.c.l.s4 1966171168
      %v971 = vunpack.c.0.s8 %v970
      %v972 = vlaneseq
      %v973 = vshrl.u32 %v972, 7
      %v974 = vsub.s32 %v971, %v973
      %v975 = vrot.slane %v965, %v974
      %v976 = vcombine.high %v975, %v975
      %v978 = vunpack.c.l.s4 1966171168
      %v979 = vunpack.c.0.s8 %v978
      %v980 = vlaneseq
      %v981 = vshrl.u32 %v980, 7
      %v982 = vsub.s32 %v979, %v981
      %v983 = vrot.slane %v975, %v982
      %v985 = vunpack.c.l.s4 1966171168
      %v986 = vunpack.c.0.s8 %v985
      %v987 = vlaneseq
      %v988 = vshrl.u32 %v987, 7
      %v989 = vsub.s32 %v986, %v988
      %v990 = vrot.slane %v976, %v989
      %v991 = vcombine.high %v983, %v983
      %v993 = vunpack.c.l.s4 1966171168
      %v994 = vunpack.c.0.s8 %v993
      %v995 = vlaneseq
      %v996 = vshrl.u32 %v995, 7
      %v997 = vsub.s32 %v994, %v996
      %v998 = vrot.slane %v966, %v997
      %v999 = vcombine.high %v998, %v998
      %v1001 = vunpack.c.l.s4 1966171168
      %v1002 = vunpack.c.0.s8 %v1001
      %v1003 = vlaneseq
      %v1004 = vshrl.u32 %v1003, 7
      %v1005 = vsub.s32 %v1002, %v1004
      %v1006 = vrot.slane %v998, %v1005
      %v1008 = vunpack.c.l.s4 1966171168
      %v1009 = vunpack.c.0.s8 %v1008
      %v1010 = vlaneseq
      %v1011 = vshrl.u32 %v1010, 7
      %v1012 = vsub.s32 %v1009, %v1011
      %v1013 = vrot.slane %v999, %v1012
      %v1014 = vcombine.high %v1006, %v1006
      %v1016 = vshrl.u32 %v990, 16
      %v1018 = vrot.slane %v1016, 7
      %v1019 = vrot.slane %v1018, 1
      %v1021 = vshll.u32 %v991, 16
      %v1023 = vsel %vm381, %v1019, %v1021
      %v1025 = vshrl.u32 %v1013, 16
      %v1027 = vrot.slane %v1025, 7
      %v1028 = vrot.slane %v1027, 1
      %v1030 = vshll.u32 %v1014, 16
      %v1032 = vsel %vm381, %v1028, %v1030
      %s1033 = scalar_lea.vmem %s221, 96
      %v1034 = vld [vmem:[%s1033] sm:$0xf]
      %v1035 = vld [vmem:[%s1033 + $0x4] sm:$0xf]
      %v1036 = vld [vmem:[%s1033 + $0x8] sm:$0xf]
      %v1037 = vld [vmem:[%s1033 + $0xc] sm:$0xf]
      %v1038 = vcombine.low %v1023, %v1032
      %v1040 = vunpack.c.l.s4 1966171168
      %v1041 = vunpack.c.0.s8 %v1040
      %v1042 = vlaneseq
      %v1043 = vshrl.u32 %v1042, 7
      %v1044 = vsub.s32 %v1041, %v1043
      %v1045 = vrot.slane %v1038, %v1044
      %v1047 = vunpack.c.l.s4 1966171168
      %v1048 = vunpack.c.0.s8 %v1047
      %v1049 = vlaneseq
      %v1050 = vshrl.u32 %v1049, 7
      %v1051 = vsub.s32 %v1048, %v1050
      %v1052 = vrot.slane %v1045, %v1051
      %v1057 = vunpack.c.l.b16 %v1034
      %v1058 = vunpack.c.l.b16 %v1035
      %v1059 = vunpack.c.l.b16 %v1036
      %v1060 = vunpack.c.l.b16 %v1037
      %v1061 = vpack.c.b16 %v1058, %v1057
      %v1062 = vpack.c.b16 %v1060, %v1059
      %v1066 = vsel %vm274, %v1052, 0
      %1068 = vmatprep.subr.bf16.mxu0 0
      %1069 = vmatpush1.bf16.msra.mxu0 %v1061
      %1070 = vmatprep.subr.bf16.mxu0 0
      %1071 = vmatpush1.bf16.msra.mxu0 %v1062
      %1072 = vmatprep.subr.bf16.mxu0 0
      %1073 = vmatpush1.bf16.msra.mxu0 0
      %1074 = vmatprep.subr.bf16.mxu0 0
      %1075 = vmatpush1.bf16.msra.mxu0 0
      %1076 = vmatprep.subr.bf16.mxu0 0
      %1077 = vmatpush1.bf16.msra.mxu0 0
      %1078 = vmatprep.subr.bf16.mxu0 0
      %1079 = vmatpush1.bf16.msra.mxu0 0
      %1080 = vmatprep.subr.bf16.mxu0 0
      %1081 = vmatpush1.bf16.msra.mxu0 0
      %1082 = vmatprep.subr.bf16.mxu0 0
      %1083 = vmatpush1.bf16.msra.mxu0 0
      %1084 = vmatprep.subr.bf16.mxu0 0
      %1085 = vmatpush1.bf16.msra.mxu0 0
      %1086 = vmatprep.subr.bf16.mxu0 0
      %1087 = vmatpush1.bf16.msra.mxu0 0
      %1088 = vmatprep.subr.bf16.mxu0 0
      %1089 = vmatpush1.bf16.msra.mxu0 0
      %1090 = vmatprep.subr.bf16.mxu0 0
      %1091 = vmatpush1.bf16.msra.mxu0 0
      %1092 = vmatprep.subr.bf16.mxu0 0
      %1093 = vmatpush1.bf16.msra.mxu0 0
      %1094 = vmatprep.subr.bf16.mxu0 0
      %1095 = vmatpush1.bf16.msra.mxu0 0
      %1096 = vmatprep.subr.bf16.mxu0 0
      %1097 = vmatpush1.bf16.msra.mxu0 0
      %1098 = vmatprep.subr.bf16.mxu0 0
      %1099 = vmatpush1.bf16.msra.mxu0 0
      %1100 = vmatprep.mubr.bf16.mxu0 0
      %1101 = vmatmul.mubr.bf16.gmra.mrb[0].mxu0 %v1066
      %v1102 = vpop.f32.mrb[0].mxu0
      %v1103 = vadd.f32 0.0, %v1102
      %v1104 = vpop.f32.mrb[0].mxu0
      %v1105 = vpop.f32.mrb[0].mxu0
      %v1106 = vpop.f32.mrb[0].mxu0
      %1107 = vdwg.mxu0
      %v1108 = vld [vmem:[#allocation2] sm:$0xf]
      %v1109 = vadd.f32 %v1108, %v1103
      %1110 = vst [vmem:[#allocation2] sm:$0xf] %v1109
      %v1111 = vld [vmem:[%s738] sm:$0x4]
      %v1112 = vld [vmem:[%s738 + $0x4] sm:$0x4]
      %v1116 = vunpack.c.l.s4 1966171168
      %v1117 = vunpack.c.0.s8 %v1116
      %v1118 = vlaneseq
      %v1119 = vshrl.u32 %v1118, 7
      %v1120 = vsub.s32 %v1117, %v1119
      %v1121 = vrot.slane %v1111, %v1120
      %v1123 = vunpack.c.l.s4 1966171168
      %v1124 = vunpack.c.0.s8 %v1123
      %v1125 = vlaneseq
      %v1126 = vshrl.u32 %v1125, 7
      %v1127 = vsub.s32 %v1124, %v1126
      %v1128 = vrot.slane %v1121, %v1127
      %v1129 = vcombine.high %v1128, %v1128
      %v1131 = vunpack.c.l.s4 1966171168
      %v1132 = vunpack.c.0.s8 %v1131
      %v1133 = vlaneseq
      %v1134 = vshrl.u32 %v1133, 7
      %v1135 = vsub.s32 %v1132, %v1134
      %v1136 = vrot.slane %v1112, %v1135
      %v1138 = vunpack.c.l.s4 1966171168
      %v1139 = vunpack.c.0.s8 %v1138
      %v1140 = vlaneseq
      %v1141 = vshrl.u32 %v1140, 7
      %v1142 = vsub.s32 %v1139, %v1141
      %v1143 = vrot.slane %v1136, %v1142
      %v1144 = vcombine.high %v1143, %v1143
      %s1145 = scalar_lea.vmem %s221, 112
      %v1146 = vld [vmem:[%s1145] sm:$0xf]
      %v1147 = vld [vmem:[%s1145 + $0x4] sm:$0xf]
      %v1148 = vld [vmem:[%s1145 + $0x8] sm:$0xf]
      %v1149 = vld [vmem:[%s1145 + $0xc] sm:$0xf]
      %v1150 = vcombine.low %v1129, %v1144
      %v1152 = vunpack.c.l.s4 1966171168
      %v1153 = vunpack.c.0.s8 %v1152
      %v1154 = vlaneseq
      %v1155 = vshrl.u32 %v1154, 7
      %v1156 = vsub.s32 %v1153, %v1155
      %v1157 = vrot.slane %v1150, %v1156
      %v1159 = vunpack.c.l.s4 1966171168
      %v1160 = vunpack.c.0.s8 %v1159
      %v1161 = vlaneseq
      %v1162 = vshrl.u32 %v1161, 7
      %v1163 = vsub.s32 %v1160, %v1162
      %v1164 = vrot.slane %v1157, %v1163
      %v1169 = vunpack.c.l.b16 %v1146
      %v1170 = vunpack.c.l.b16 %v1147
      %v1171 = vunpack.c.l.b16 %v1148
      %v1172 = vunpack.c.l.b16 %v1149
      %v1173 = vpack.c.b16 %v1170, %v1169
      %v1174 = vpack.c.b16 %v1172, %v1171
      %v1178 = vsel %vm274, %v1164, 0
      %1180 = vmatprep.subr.bf16.mxu0 0
      %1181 = vmatpush1.bf16.msra.mxu0 %v1173
      %1182 = vmatprep.subr.bf16.mxu0 0
      %1183 = vmatpush1.bf16.msra.mxu0 %v1174
      %1184 = vmatprep.subr.bf16.mxu0 0
      %1185 = vmatpush1.bf16.msra.mxu0 0
      %1186 = vmatprep.subr.bf16.mxu0 0
      %1187 = vmatpush1.bf16.msra.mxu0 0
      %1188 = vmatprep.subr.bf16.mxu0 0
      %1189 = vmatpush1.bf16.msra.mxu0 0
      %1190 = vmatprep.subr.bf16.mxu0 0
      %1191 = vmatpush1.bf16.msra.mxu0 0
      %1192 = vmatprep.subr.bf16.mxu0 0
      %1193 = vmatpush1.bf16.msra.mxu0 0
      %1194 = vmatprep.subr.bf16.mxu0 0
      %1195 = vmatpush1.bf16.msra.mxu0 0
      %1196 = vmatprep.subr.bf16.mxu0 0
      %1197 = vmatpush1.bf16.msra.mxu0 0
      %1198 = vmatprep.subr.bf16.mxu0 0
      %1199 = vmatpush1.bf16.msra.mxu0 0
      %1200 = vmatprep.subr.bf16.mxu0 0
      %1201 = vmatpush1.bf16.msra.mxu0 0
      %1202 = vmatprep.subr.bf16.mxu0 0
      %1203 = vmatpush1.bf16.msra.mxu0 0
      %1204 = vmatprep.subr.bf16.mxu0 0
      %1205 = vmatpush1.bf16.msra.mxu0 0
      %1206 = vmatprep.subr.bf16.mxu0 0
      %1207 = vmatpush1.bf16.msra.mxu0 0
      %1208 = vmatprep.subr.bf16.mxu0 0
      %1209 = vmatpush1.bf16.msra.mxu0 0
      %1210 = vmatprep.subr.bf16.mxu0 0
      %1211 = vmatpush1.bf16.msra.mxu0 0
      %1212 = vmatprep.mubr.bf16.mxu0 0
      %1213 = vmatmul.mubr.bf16.gmra.mrb[0].mxu0 %v1178
      %v1214 = vpop.f32.mrb[0].mxu0
      %v1215 = vadd.f32 0.0, %v1214
      %v1216 = vpop.f32.mrb[0].mxu0
      %v1217 = vpop.f32.mrb[0].mxu0
      %v1218 = vpop.f32.mrb[0].mxu0
      %1219 = vdwg.mxu0
      %v1220 = vld [vmem:[#allocation2] sm:$0xf]
      %v1221 = vadd.f32 %v1220, %v1215
      %1222 = vst [vmem:[#allocation2] sm:$0xf] %v1221
      %v1223 = vld [vmem:[#allocation2] sm:$0xf]
      %v1224 = vld [vmem:[%s224] sm:$0x1]
      %v1226 = vlaneseq
      %v1227 = vshrl.u32 %v1226, 7
      %v1228 = vsub.s32 0, %v1227
      %v1229 = vrot.slane %v1224, %v1228
      %v1231 = vadd.f32 %v1223, %v1229
      %vm1232 = vcmask 1043456
      %v1233 = vsel %vm1232, %v1231, 0.0
      %v1234 = vrot.slane %v1233, 4
      %v1235 = vadd.f32 %v1233, %v1234
      %v1236 = vrot.slane %v1235, 2
      %v1237 = vadd.f32 %v1235, %v1236
      %v1238 = vrot.slane %v1237, 1
      %v1239 = vadd.f32 %v1237, %v1238
      %v1240 = vmul.f32 %v1231, %v1231
      %v1241 = vsel %vm1232, %v1240, 0.0
      %v1242 = vrot.slane %v1241, 4
      %v1243 = vadd.f32 %v1241, %v1242
      %v1244 = vrot.slane %v1243, 2
      %v1245 = vadd.f32 %v1243, %v1244
      %v1246 = vrot.slane %v1245, 1
      %v1247 = vadd.f32 %v1245, %v1246
      %v1248 = vmul.f32 %v1239, 0.25
      %v1249 = vmul.f32 %v1247, 0.25
      %v1250 = vmul.f32 %v1248, %v1248
      %v1251 = vsub.f32 %v1249, %v1250
      %v1252 = vmax.f32 %v1251, 0.0
      %v1253 = vsub.f32 %v1231, %v1248
      %v1254 = vadd.f32 %v1252, 1e-05
      %v1255 = vrsqrt.pop %v1254
      %v1256 = vmul.f32 %v1253, %v1255
      %vm1257 = vcmp.gt.f32.partialorder %v1256, 0.0
      %v1258 = vmul.f32 %v1256, 0.2
      %v1259 = vsel %vm1257, %v1256, %v1258
      %v1260 = vpack.c.bf16 %v1259, %v1259
      %1261 = vst [vmem:[%s234] sm:$0x3] %v1260
      %p1262 = scmp.lt.s32.totalorder %s19, 1
      %s1263 = scalar_select %p1262, %s19, 1
      %p1264 = scmp.lt.s32.totalorder %s21, 0
      %s1265 = scalar_select %p1264, %s21, 0
      %p1266 = scmp.lt.s32.totalorder %s20, 0
      %s1267 = scalar_select %p1266, %s20, 0
      %s1268 = sadd.s32 %s1267, %s1265
      %s1269 = sadd.s32 %s1268, %s1263
      %s1270 = smul.addr %s1269, 2
      %s1271 = scalar_lea.vmem %s3, %s1270
      // Predicated region
      $region33: #{_lambda_.6} parent=31 // pred_check
        %p1272 = pneg %p133
      $region34: #{_lambda_.6} parent=31 // pred_check_branch
        %1274 = sbr.rel (%p1272) target = $region36
      $region35: #{_lambda_.6} parent=31 // pred_region
        _
      $region36: #{_lambda_.6} parent=31 // pred_fallthru
        _
    $region32: #{_lambda_.6} parent=5 // pred_fallthru
      _
    %p1275 = scmp.le.s32.totalorder 2, %s9
    // Predicated region
    $region37: #{_lambda_.6} parent=5 // pred_check
      %p1276 = pneg %p1275
    $region38: #{_lambda_.6} parent=5 // pred_check_branch
      %1278 = sbr.rel (%p1276) target = $region40
    $region39: #{_lambda_.6} parent=5 // pred_region
      %s1279 = ssub.s32 %s9, 2
      // Predicated region
      $region41: #{_lambda_.6} parent=39 // pred_check
        %p1280 = pneg %p139
      $region42: #{_lambda_.6} parent=39 // pred_check_branch
        %1282 = sbr.rel (%p1280) target = $region44
      $region43: #{_lambda_.6} parent=39 // pred_region
        %p1283 = scmp.lt.s32.totalorder %s22, 1
        %s1284 = scalar_select %p1283, %s22, 1
        %p1285 = scmp.lt.s32.totalorder %s24, 0
        %s1286 = scalar_select %p1285, %s24, 0
        %p1287 = scmp.lt.s32.totalorder %s23, 0
        %s1288 = scalar_select %p1287, %s23, 0
        %s1289 = sadd.s32 %s1288, %s1286
        %s1290 = sadd.s32 %s1289, %s1284
        %s1291 = smul.addr %s1290, 2
        %s1292 = scalar_lea.vmem %s3, %s1291
      $region44: #{_lambda_.6} parent=39 // pred_fallthru
        _
    $region40: #{_lambda_.6} parent=5 // pred_fallthru
      _
  $region6: #{_lambda_.6} parent=0 // loop_footer
    %s13 = sadd.s32 1, %s9
  $region7: #{_lambda_.6} parent=0 // loop_footer_branch
    %8 = sbr.rel target = $region3
  $region8: #{_lambda_.6} parent=0 // loop_exit
    _

// kernel: _lambda_.5
$region0: #{_lambda_.5}
  #allocation0 [shape = 'u32[]', space=smem, size = 0x4, offset = 0x4, fixed_abs, tag = 'smem constant byte address 0x4 - core index']
  #allocation1 [shape = 'u32[144,128]{1,0:T(1,128)}', space=vmem, size = 0x12000, scoped, tag = 'internal scratch']
  #allocation2 [shape = 'f32[16,128]{1,0:T(8,128)}', space=vmem, size = 0x2000, scoped, tag = 'scratch operand']
  %s0 = inlined_call_operand.vmem [shape: bf16[2,5,10,16], index: 0, kind: input, shape index: {}]
  %s1 = inlined_call_operand.vmem [shape: bf16[8,16,128], index: 1, kind: input, shape index: {}]
  %s2 = inlined_call_operand.vmem [shape: f32[1,128], index: 2, kind: input, shape index: {}]
  %s3 = inlined_call_operand.vmem [shape: bf16[2,16,128], index: 3, kind: output, shape index: {}]
  %s4 = sld [smem:[#allocation0]]
  $region45: #{_lambda_.5} parent=0
    _
  %s6 = ssub.s32 1, %s4
  %s7 = scalar_select 0, %s6, %s4
  loop: start=0, step=1, limit=4
  $region2: #{_lambda_.5} parent=0 // loop_pre_header
    _
  $region3: #{_lambda_.5} parent=0 // loop_header
    %s9 = sphi 0, %s13
    %p10 = scmp.ge.s32.totalorder %s9, 4
    %s16 = sphi 0, %s35
    %s17 = sphi 0, %s31
    %s18 = sphi 0, %s27
    %s19 = sphi 0, %s16
    %s20 = sphi 0, %s17
    %s21 = sphi 0, %s18
    %s22 = sphi 0, %s19
    %s23 = sphi 0, %s20
    %s24 = sphi 0, %s21
    %s38 = sphi 0, %s40
    %s41 = sphi 0, %s38
    %s42 = sphi 0, %s41
    %s58 = sphi 0, %s42
    %s64 = sphi 0, %s66
    %s67 = sphi 0, %s64
    %s68 = sphi 0, %s67
    %s84 = sphi 0, %s68
    %s90 = sphi 0, %s92
    %s93 = sphi 0, %s90
    %s94 = sphi 0, %s93
    %s110 = sphi 0, %s94
    %s120 = sphi 0, %s122
    %s123 = sphi 0, %s120
    %s124 = sphi 0, %s123
    %s140 = sphi 0, %s124
  $region4: #{_lambda_.5} parent=0 // loop_header_branch
    %12 = sbr.rel (%p10) target = $region8
  $region5: #{_lambda_.5} parent=0 // loop_body
    %s14 = ssub.s32 %s9, 1
    %s15 = ssub.s32 %s9, 2
    %s25 = sadd.s32 1, %s18
    %p26 = scmp.ge.s32.totalorder %s25, 1
    %s27 = scalar_select %p26, 0, %s25
    %s28 = sadd.s32 1, %s17
    %s29 = scalar_select %p26, %s28, %s17
    %p30 = scmp.ge.s32.totalorder %s29, 1
    %s31 = scalar_select %p30, 0, %s29
    %s32 = sadd.s32 1, %s16
    %s33 = scalar_select %p30, %s32, %s16
    %p34 = scmp.ge.s32.totalorder %s33, 2
    %s35 = scalar_select %p34, 0, %s33
    %s36 = ssub.s32 %s16, %s35
    %p37 = scmp.eq.s32.totalorder %s36, 0
    %s39 = sadd.s32 %s38, 1
    %s40 = scalar_select %p37, %s38, %s39
    %p43 = pneg %p37
    %p44 = scmp.eq.s32.totalorder %s9, 1
    %p45 = por %p43, %p44
    %p46 = scmp.ne.s32.totalorder %s38, %s41
    %p47 = scmp.eq.s32.totalorder %s9, 0
    %p48 = por %p46, %p47
    %p49 = scmp.ne.s32.totalorder %s38, %s41
    %p50 = scmp.eq.s32.totalorder %s14, 1
    %p51 = por %p49, %p50
    %p52 = scmp.ne.s32.totalorder %s41, %s42
    %p53 = scmp.eq.s32.totalorder %s14, 0
    %p54 = por %p52, %p53
    %p55 = scmp.ne.s32.totalorder %s41, %s42
    %p56 = scmp.eq.s32.totalorder %s15, 1
    %p57 = por %p55, %p56
    %p59 = scmp.ne.s32.totalorder %s42, %s58
    %p60 = scmp.eq.s32.totalorder %s15, 0
    %p61 = por %p59, %p60
    %s62 = ssub.s32 %s17, %s31
    %p63 = scmp.eq.s32.totalorder %s62, 0
    %s65 = sadd.s32 %s64, 1
    %s66 = scalar_select %p63, %s64, %s65
    %p69 = pneg %p63
    %p70 = scmp.eq.s32.totalorder %s9, 1
    %p71 = por %p69, %p70
    %p72 = scmp.ne.s32.totalorder %s64, %s67
    %p73 = scmp.eq.s32.totalorder %s9, 0
    %p74 = por %p72, %p73
    %p75 = scmp.ne.s32.totalorder %s64, %s67
    %p76 = scmp.eq.s32.totalorder %s14, 1
    %p77 = por %p75, %p76
    %p78 = scmp.ne.s32.totalorder %s67, %s68
    %p79 = scmp.eq.s32.totalorder %s14, 0
    %p80 = por %p78, %p79
    %p81 = scmp.ne.s32.totalorder %s67, %s68
    %p82 = scmp.eq.s32.totalorder %s15, 1
    %p83 = por %p81, %p82
    %p85 = scmp.ne.s32.totalorder %s68, %s84
    %p86 = scmp.eq.s32.totalorder %s15, 0
    %p87 = por %p85, %p86
    %s88 = ssub.s32 %s17, %s31
    %p89 = scmp.eq.s32.totalorder %s88, 0
    %s91 = sadd.s32 %s90, 1
    %s92 = scalar_select %p89, %s90, %s91
    %p95 = pneg %p89
    %p96 = scmp.eq.s32.totalorder %s9, 1
    %p97 = por %p95, %p96
    %p98 = scmp.ne.s32.totalorder %s90, %s93
    %p99 = scmp.eq.s32.totalorder %s9, 0
    %p100 = por %p98, %p99
    %p101 = scmp.ne.s32.totalorder %s90, %s93
    %p102 = scmp.eq.s32.totalorder %s14, 1
    %p103 = por %p101, %p102
    %p104 = scmp.ne.s32.totalorder %s93, %s94
    %p105 = scmp.eq.s32.totalorder %s14, 0
    %p106 = por %p104, %p105
    %p107 = scmp.ne.s32.totalorder %s93, %s94
    %p108 = scmp.eq.s32.totalorder %s15, 1
    %p109 = por %p107, %p108
    %p111 = scmp.ne.s32.totalorder %s94, %s110
    %p112 = scmp.eq.s32.totalorder %s15, 0
    %p113 = por %p111, %p112
    %s114 = ssub.s32 %s16, %s35
    %s115 = ssub.s32 %s18, %s27
    %s116 = sor.u32 %s114, %s115
    %s117 = ssub.s32 %s17, %s31
    %s118 = sor.u32 %s116, %s117
    %p119 = scmp.eq.s32.totalorder %s118, 0
    %s121 = sadd.s32 %s120, 1
    %s122 = scalar_select %p119, %s120, %s121
    %p125 = pneg %p119
    %p126 = scmp.eq.s32.totalorder %s9, 1
    %p127 = por %p125, %p126
    %p128 = scmp.ne.s32.totalorder %s120, %s123
    %p129 = scmp.eq.s32.totalorder %s9, 0
    %p130 = por %p128, %p129
    %p131 = scmp.ne.s32.totalorder %s120, %s123
    %p132 = scmp.eq.s32.totalorder %s14, 1
    %p133 = por %p131, %p132
    %p134 = scmp.ne.s32.totalorder %s123, %s124
    %p135 = scmp.eq.s32.totalorder %s14, 0
    %p136 = por %p134, %p135
    %p137 = scmp.ne.s32.totalorder %s123, %s124
    %p138 = scmp.eq.s32.totalorder %s15, 1
    %p139 = por %p137, %p138
    %p141 = scmp.ne.s32.totalorder %s124, %s140
    %p142 = scmp.eq.s32.totalorder %s15, 0
    %p143 = por %p141, %p142
    %p144 = scmp.le.s32.totalorder 1, %s9
    %p145 = scmp.lt.s32.totalorder %s9, 3
    %p146 = pnand %p144, %p145
    %p147 = pneg %p146
    // Predicated region
    $region9: #{_lambda_.5} parent=5 // pred_check
      _
    $region10: #{_lambda_.5} parent=5 // pred_check_branch
      %149 = sbr.rel (%p146) target = $region12
    $region11: #{_lambda_.5} parent=5 // pred_region
      %s150 = ssub.s32 %s9, 1
      // Predicated region
      $region13: #{_lambda_.5} parent=11 // pred_check
        %p151 = pneg %p80
      $region14: #{_lambda_.5} parent=11 // pred_check_branch
        %153 = sbr.rel (%p151) target = $region16
      $region15: #{_lambda_.5} parent=11 // pred_region
        %p154 = scmp.lt.s32.totalorder %s20, 0
        %s155 = scalar_select %p154, %s20, 0
        %s156 = smul.addr %s155, 4
        %s157 = scalar_lea.vmem %s1, %s156
      $region16: #{_lambda_.5} parent=11 // pred_fallthru
        _
      // Predicated region
      $region17: #{_lambda_.5} parent=11 // pred_check
        %p158 = pneg %p106
      $region18: #{_lambda_.5} parent=11 // pred_check_branch
        %160 = sbr.rel (%p158) target = $region20
      $region19: #{_lambda_.5} parent=11 // pred_region
        %p161 = scmp.lt.s32.totalorder %s20, 0
        %s162 = scalar_select %p161, %s20, 0
        %s163 = scalar_lea.vmem %s2, %s162
      $region20: #{_lambda_.5} parent=11 // pred_fallthru
        _
    $region12: #{_lambda_.5} parent=5 // pred_fallthru
      _
    %p164 = scmp.lt.s32.totalorder %s9, 2
    // Predicated region
    $region21: #{_lambda_.5} parent=5 // pred_check
      %p165 = pneg %p164
    $region22: #{_lambda_.5} parent=5 // pred_check_branch
      %167 = sbr.rel (%p165) target = $region24
    $region23: #{_lambda_.5} parent=5 // pred_region
      // Predicated region
      $region25: #{_lambda_.5} parent=23 // pred_check
        %p168 = pneg %p48
      $region26: #{_lambda_.5} parent=23 // pred_check_branch
        %170 = sbr.rel (%p168) target = $region28
      $region27: #{_lambda_.5} parent=23 // pred_region
        %p171 = scmp.lt.s32.totalorder %s16, 1
        %s172 = scalar_select %p171, %s16, 1
        %s173 = smul.addr %s172, 10
        %s174 = smul.addr %s173, 4
        %s175 = scalar_lea.vmem %s0, %s174
      $region28: #{_lambda_.5} parent=23 // pred_fallthru
        _
    $region24: #{_lambda_.5} parent=5 // pred_fallthru
      _
    %p176 = scmp.le.s32.totalorder 1, %s9
    %p177 = scmp.lt.s32.totalorder %s9, 3
    %p178 = pnand %p176, %p177
    %p179 = pneg %p178
    // Predicated region
    $region29: #{_lambda_.5} parent=5 // pred_check
      _
    $region30: #{_lambda_.5} parent=5 // pred_check_branch
      %181 = sbr.rel (%p178) target = $region32
    $region31: #{_lambda_.5} parent=5 // pred_region
      %s182 = ssub.s32 %s9, 1
      %p183 = scmp.lt.s32.totalorder %s19, 1
      %s184 = scalar_select %p183, %s19, 1
      %s185 = smul.addr %s184, 10
      %s186 = smul.addr %s185, 4
      %s187 = scalar_lea.vmem %s0, %s186
      %p188 = pneg %p54
      %p189 = pneg %p51
      %p190 = scmp.lt.s32.totalorder %s20, 0
      %s191 = scalar_select %p190, %s20, 0
      %s192 = smul.addr %s191, 4
      %s193 = scalar_lea.vmem %s1, %s192
      %p194 = pneg %p80
      %p195 = pneg %p77
      %p196 = scmp.lt.s32.totalorder %s20, 0
      %s197 = scalar_select %p196, %s20, 0
      %s198 = scalar_lea.vmem %s2, %s197
      %p199 = pneg %p106
      %p200 = pneg %p103
      %p201 = pneg %p136
      %p202 = pneg %p133
      %s203 = smul.u32 2, %s21
      %p204 = scmp.lt.s32.totalorder %s19, 1
      %s205 = scalar_select %p204, %s19, 1
      %p206 = scmp.lt.s32.totalorder %s203, 1
      %s207 = scalar_select %p206, %s203, 1
      %p208 = scmp.lt.s32.totalorder %s20, 0
      %s209 = scalar_select %p208, %s20, 0
      %s210 = sadd.s32 %s209, %s207
      %s211 = smul.addr %s205, 2
      %s212 = sadd.s32 %s210, %s211
      %s213 = smul.addr %s212, 4
      %s214 = scalar_lea.vmem %s3, %s213
      %p215 = scmp.lt.s32.totalorder %s19, 1
      %s216 = scalar_select %p215, %s19, 1
      %s217 = smul.addr %s216, 10
      %s218 = smul.addr %s217, 4
      %s219 = scalar_lea.vmem %s0, %s218
      %p220 = scmp.lt.s32.totalorder %s20, 0
      %s221 = scalar_select %p220, %s20, 0
      %s222 = smul.addr %s221, 4
      %s223 = scalar_lea.vmem %s1, %s222
      %p224 = scmp.lt.s32.totalorder %s20, 0
      %s225 = scalar_select %p224, %s20, 0
      %s226 = scalar_lea.vmem %s2, %s225
      %s227 = smul.u32 2, %s21
      %p228 = scmp.lt.s32.totalorder %s19, 1
      %s229 = scalar_select %p228, %s19, 1
      %p230 = scmp.lt.s32.totalorder %s227, 1
      %s231 = scalar_select %p230, %s227, 1
      %p232 = scmp.lt.s32.totalorder %s20, 0
      %s233 = scalar_select %p232, %s20, 0
      %s234 = sadd.s32 %s233, %s231
      %s235 = smul.addr %s229, 2
      %s236 = sadd.s32 %s234, %s235
      %s237 = smul.addr %s236, 4
      %s238 = scalar_lea.vmem %s3, %s237
      %s239 = smul.u32 2, %s21
      %s241 = smul.u32 %s21, 4
      %s242 = smul.u32 %s241, 2
      %s243 = smul.addr %s242, 4
      %s244 = scalar_lea.vmem %s219, %s243
      %v245 = vld [vmem:[%s244] sm:$0x3]
      %v246 = vld [vmem:[%s244 + $0x8] sm:$0x3]
      %v247 = vld [vmem:[%s244 + $0x10] sm:$0x3]
      %v248 = vld [vmem:[%s244 + $0x18] sm:$0x3]
      %v249 = vld [vmem:[%s223] sm:$0xf]
      %v250 = vld [vmem:[%s223 + $0x4] sm:$0xf]
      %v255 = vcombine.low %v245, %v246
      %v256 = vcombine.low %v247, %v248
      %v258 = vunpack.c.l.s4 1983009808
      %v259 = vunpack.c.0.s8 %v258
      %v260 = vlaneseq
      %v261 = vshrl.u32 %v260, 7
      %v262 = vsub.s32 %v259, %v261
      %v263 = vrot.slane %v255, %v262
      %v265 = vunpack.c.l.s4 1983009808
      %v266 = vunpack.c.0.s8 %v265
      %v267 = vlaneseq
      %v268 = vshrl.u32 %v267, 7
      %v269 = vsub.s32 %v266, %v268
      %v270 = vrot.slane %v256, %v269
      %v271 = vcombine.low %v263, %v270
      %v274 = vunpack.c.l.b16 %v249
      %v275 = vunpack.c.l.b16 %v250
      %v276 = vpack.c.b16 %v275, %v274
      %vm278 = vcmask 130048
      %v280 = vsel %vm278, %v271, 0
      %282 = vmatprep.subr.bf16.mxu0 0
      %283 = vmatpush1.bf16.msra.mxu0 %v276
      %284 = vmatprep.subr.bf16.mxu0 0
      %285 = vmatpush1.bf16.msra.mxu0 0
      %286 = vmatprep.subr.bf16.mxu0 0
      %287 = vmatpush1.bf16.msra.mxu0 0
      %288 = vmatprep.subr.bf16.mxu0 0
      %289 = vmatpush1.bf16.msra.mxu0 0
      %290 = vmatprep.subr.bf16.mxu0 0
      %291 = vmatpush1.bf16.msra.mxu0 0
      %292 = vmatprep.subr.bf16.mxu0 0
      %293 = vmatpush1.bf16.msra.mxu0 0
      %294 = vmatprep.subr.bf16.mxu0 0
      %295 = vmatpush1.bf16.msra.mxu0 0
      %296 = vmatprep.subr.bf16.mxu0 0
      %297 = vmatpush1.bf16.msra.mxu0 0
      %298 = vmatprep.subr.bf16.mxu0 0
      %299 = vmatpush1.bf16.msra.mxu0 0
      %300 = vmatprep.subr.bf16.mxu0 0
      %301 = vmatpush1.bf16.msra.mxu0 0
      %302 = vmatprep.subr.bf16.mxu0 0
      %303 = vmatpush1.bf16.msra.mxu0 0
      %304 = vmatprep.subr.bf16.mxu0 0
      %305 = vmatpush1.bf16.msra.mxu0 0
      %306 = vmatprep.subr.bf16.mxu0 0
      %307 = vmatpush1.bf16.msra.mxu0 0
      %308 = vmatprep.subr.bf16.mxu0 0
      %309 = vmatpush1.bf16.msra.mxu0 0
      %310 = vmatprep.subr.bf16.mxu0 0
      %311 = vmatpush1.bf16.msra.mxu0 0
      %312 = vmatprep.subr.bf16.mxu0 0
      %313 = vmatpush1.bf16.msra.mxu0 0
      %314 = vmatprep.mubr.bf16.mxu0 0
      %315 = vmatmul.mubr.bf16.gmra.mrb[0].mxu0 %v280
      %v316 = vpop.f32.mrb[0].mxu0
      %v317 = vadd.f32 0.0, %v316
      %v318 = vpop.f32.mrb[0].mxu0
      %v319 = vpop.f32.mrb[0].mxu0
      %v320 = vadd.f32 0.0, %v319
      %v321 = vpop.f32.mrb[0].mxu0
      %322 = vdwg.mxu0
      %323 = vst [vmem:[#allocation2] sm:$0xff] %v317
      %324 = vst [vmem:[#allocation2 + $0x8] sm:$0xff] %v320
      %v325 = vld [vmem:[%s244] sm:$0x7]
      %v326 = vld [vmem:[%s244 + $0x8] sm:$0x7]
      %v327 = vld [vmem:[%s244 + $0x10] sm:$0x7]
      %v328 = vld [vmem:[%s244 + $0x18] sm:$0x7]
      %v334 = vunpack.c.l.s4 1983009808
      %v335 = vunpack.c.0.s8 %v334
      %v336 = vlaneseq
      %v337 = vshrl.u32 %v336, 7
      %v338 = vsub.s32 %v335, %v337
      %v339 = vrot.slane %v325, %v338
      %v340 = vcombine.high %v339, %v339
      %v342 = vunpack.c.l.s4 1983009808
      %v343 = vunpack.c.0.s8 %v342
      %v344 = vlaneseq
      %v345 = vshrl.u32 %v344, 7
      %v346 = vsub.s32 %v343, %v345
      %v347 = vrot.slane %v326, %v346
      %v348 = vcombine.high %v347, %v347
      %v350 = vunpack.c.l.s4 1983009808
      %v351 = vunpack.c.0.s8 %v350
      %v352 = vlaneseq
      %v353 = vshrl.u32 %v352, 7
      %v354 = vsub.s32 %v351, %v353
      %v355 = vrot.slane %v327, %v354
      %v356 = vcombine.high %v355, %v355
      %v358 = vunpack.c.l.s4 1983009808
      %v359 = vunpack.c.0.s8 %v358
      %v360 = vlaneseq
      %v361 = vshrl.u32 %v360, 7
      %v362 = vsub.s32 %v359, %v361
      %v363 = vrot.slane %v328, %v362
      %v364 = vcombine.high %v363, %v363
      %vm365 = vsmask.f32 1280
      %vm366 = vsmask.f32 3336
      %vm367 = vmor %vm365, %vm366
      %vm368 = vsmask.f32 5392
      %vm369 = vmor %vm367, %vm368
      %vm370 = vsmask.f32 7448
      %vm371 = vmor %vm369, %vm370
      %v373 = vshrl.u32 %v339, 16
      %v375 = vrot.slane %v373, 6
      %v376 = vshll.u32 %v339, 16
      %v378 = vrot.slane %v376, 7
      %v379 = vor.u32 %v375, %v378
      %v380 = vrot.slane %v379, 2
      %v382 = vshll.u32 %v340, 16
      %v384 = vrot.slane %v382, 7
      %v385 = vsel %vm371, %v380, %v384
      %v387 = vshrl.u32 %v347, 16
      %v389 = vrot.slane %v387, 6
      %v390 = vshll.u32 %v347, 16
      %v392 = vrot.slane %v390, 7
      %v393 = vor.u32 %v389, %v392
      %v394 = vrot.slane %v393, 2
      %v396 = vshll.u32 %v348, 16
      %v398 = vrot.slane %v396, 7
      %v399 = vsel %vm371, %v394, %v398
      %v401 = vshrl.u32 %v355, 16
      %v403 = vrot.slane %v401, 6
      %v404 = vshll.u32 %v355, 16
      %v406 = vrot.slane %v404, 7
      %v407 = vor.u32 %v403, %v406
      %v408 = vrot.slane %v407, 2
      %v410 = vshll.u32 %v356, 16
      %v412 = vrot.slane %v410, 7
      %v413 = vsel %vm371, %v408, %v412
      %v415 = vshrl.u32 %v363, 16
      %v417 = vrot.slane %v415, 6
      %v418 = vshll.u32 %v363, 16
      %v420 = vrot.slane %v418, 7
      %v421 = vor.u32 %v417, %v420
      %v422 = vrot.slane %v421, 2
      %v424 = vshll.u32 %v364, 16
      %v426 = vrot.slane %v424, 7
      %v427 = vsel %vm371, %v422, %v426
      %s428 = scalar_lea.vmem %s223, 8
      %v429 = vld [vmem:[%s428] sm:$0xf]
      %v430 = vld [vmem:[%s428 + $0x4] sm:$0xf]
      %v431 = vcombine.low %v385, %v399
      %v432 = vcombine.low %v413, %v427
      %v434 = vunpack.c.l.s4 1983009808
      %v435 = vunpack.c.0.s8 %v434
      %v436 = vlaneseq
      %v437 = vshrl.u32 %v436, 7
      %v438 = vsub.s32 %v435, %v437
      %v439 = vrot.slane %v431, %v438
      %v441 = vunpack.c.l.s4 1983009808
      %v442 = vunpack.c.0.s8 %v441
      %v443 = vlaneseq
      %v444 = vshrl.u32 %v443, 7
      %v445 = vsub.s32 %v442, %v444
      %v446 = vrot.slane %v432, %v445
      %v447 = vcombine.low %v439, %v446
      %v450 = vunpack.c.l.b16 %v429
      %v451 = vunpack.c.l.b16 %v430
      %v452 = vpack.c.b16 %v451, %v450
      %v455 = vsel %vm278, %v447, 0
      %457 = vmatprep.subr.bf16.mxu0 0
      %458 = vmatpush1.bf16.msra.mxu0 %v452
      %459 = vmatprep.subr.bf16.mxu0 0
      %460 = vmatpush1.bf16.msra.mxu0 0
      %461 = vmatprep.subr.bf16.mxu0 0
      %462 = vmatpush1.bf16.msra.mxu0 0
      %463 = vmatprep.subr.bf16.mxu0 0
      %464 = vmatpush1.bf16.msra.mxu0 0
      %465 = vmatprep.subr.bf16.mxu0 0
      %466 = vmatpush1.bf16.msra.mxu0 0
      %467 = vmatprep.subr.bf16.mxu0 0
      %468 = vmatpush1.bf16.msra.mxu0 0
      %469 = vmatprep.subr.bf16.mxu0 0
      %470 = vmatpush1.bf16.msra.mxu0 0
      %471 = vmatprep.subr.bf16.mxu0 0
      %472 = vmatpush1.bf16.msra.mxu0 0
      %473 = vmatprep.subr.bf16.mxu0 0
      %474 = vmatpush1.bf16.msra.mxu0 0
      %475 = vmatprep.subr.bf16.mxu0 0
      %476 = vmatpush1.bf16.msra.mxu0 0
      %477 = vmatprep.subr.bf16.mxu0 0
      %478 = vmatpush1.bf16.msra.mxu0 0
      %479 = vmatprep.subr.bf16.mxu0 0
      %480 = vmatpush1.bf16.msra.mxu0 0
      %481 = vmatprep.subr.bf16.mxu0 0
      %482 = vmatpush1.bf16.msra.mxu0 0
      %483 = vmatprep.subr.bf16.mxu0 0
      %484 = vmatpush1.bf16.msra.mxu0 0
      %485 = vmatprep.subr.bf16.mxu0 0
      %486 = vmatpush1.bf16.msra.mxu0 0
      %487 = vmatprep.subr.bf16.mxu0 0
      %488 = vmatpush1.bf16.msra.mxu0 0
      %489 = vmatprep.mubr.bf16.mxu0 0
      %490 = vmatmul.mubr.bf16.gmra.mrb[0].mxu0 %v455
      %v491 = vpop.f32.mrb[0].mxu0
      %v492 = vadd.f32 0.0, %v491
      %v493 = vpop.f32.mrb[0].mxu0
      %v494 = vpop.f32.mrb[0].mxu0
      %v495 = vadd.f32 0.0, %v494
      %v496 = vpop.f32.mrb[0].mxu0
      %497 = vdwg.mxu0
      %v498 = vld [vmem:[#allocation2] sm:$0xff]
      %v499 = vld [vmem:[#allocation2 + $0x8] sm:$0xff]
      %v500 = vadd.f32 %v498, %v492
      %v501 = vadd.f32 %v499, %v495
      %502 = vst [vmem:[#allocation2] sm:$0xff] %v500
      %503 = vst [vmem:[#allocation2 + $0x8] sm:$0xff] %v501
      %v504 = vld [vmem:[%s244] sm:$0xc]
      %v505 = vld [vmem:[%s244 + $0x4] sm:$0x1]
      %v506 = vld [vmem:[%s244 + $0x8] sm:$0xc]
      %v507 = vld [vmem:[%s244 + $0xc] sm:$0x1]
      %v508 = vld [vmem:[%s244 + $0x10] sm:$0xc]
      %v509 = vld [vmem:[%s244 + $0x14] sm:$0x1]
      %v510 = vld [vmem:[%s244 + $0x18] sm:$0xc]
      %v511 = vld [vmem:[%s244 + $0x1c] sm:$0x1]
      %v521 = vunpack.c.l.s4 1983009808
      %v522 = vunpack.c.0.s8 %v521
      %v523 = vlaneseq
      %v524 = vshrl.u32 %v523, 7
      %v525 = vsub.s32 %v522, %v524
      %v526 = vrot.slane %v504, %v525
      %v527 = vcombine.high %v526, %v526
      %v529 = vunpack.c.l.s4 1983009808
      %v530 = vunpack.c.0.s8 %v529
      %v531 = vlaneseq
      %v532 = vshrl.u32 %v531, 7
      %v533 = vsub.s32 %v530, %v532
      %v534 = vrot.slane %v505, %v533
      %v536 = vunpack.c.l.s4 1983009808
      %v537 = vunpack.c.0.s8 %v536
      %v538 = vlaneseq
      %v539 = vshrl.u32 %v538, 7
      %v540 = vsub.s32 %v537, %v539
      %v541 = vrot.slane %v506, %v540
      %v542 = vcombine.high %v541, %v541
      %v544 = vunpack.c.l.s4 1983009808
      %v545 = vunpack.c.0.s8 %v544
      %v546 = vlaneseq
      %v547 = vshrl.u32 %v546, 7
      %v548 = vsub.s32 %v545, %v547
      %v549 = vrot.slane %v507, %v548
      %v551 = vunpack.c.l.s4 1983009808
      %v552 = vunpack.c.0.s8 %v551
      %v553 = vlaneseq
      %v554 = vshrl.u32 %v553, 7
      %v555 = vsub.s32 %v552, %v554
      %v556 = vrot.slane %v508, %v555
      %v557 = vcombine.high %v556, %v556
      %v559 = vunpack.c.l.s4 1983009808
      %v560 = vunpack.c.0.s8 %v559
      %v561 = vlaneseq
      %v562 = vshrl.u32 %v561, 7
      %v563 = vsub.s32 %v560, %v562
      %v564 = vrot.slane %v509, %v563
      %v566 = vunpack.c.l.s4 1983009808
      %v567 = vunpack.c.0.s8 %v566
      %v568 = vlaneseq
      %v569 = vshrl.u32 %v568, 7
      %v570 = vsub.s32 %v567, %v569
      %v571 = vrot.slane %v510, %v570
      %v572 = vcombine.high %v571, %v571
      %v574 = vunpack.c.l.s4 1983009808
      %v575 = vunpack.c.0.s8 %v574
      %v576 = vlaneseq
      %v577 = vshrl.u32 %v576, 7
      %v578 = vsub.s32 %v575, %v577
      %v579 = vrot.slane %v511, %v578
      %v581 = vshrl.u32 %v527, 16
      %v583 = vrot.slane %v581, 6
      %v584 = vshll.u32 %v527, 16
      %v586 = vrot.slane %v584, 7
      %v587 = vor.u32 %v583, %v586
      %v588 = vrot.slane %v587, 2
      %v590 = vshll.u32 %v534, 16
      %v592 = vrot.slane %v590, 7
      %v593 = vsel %vm371, %v588, %v592
      %v595 = vshrl.u32 %v542, 16
      %v597 = vrot.slane %v595, 6
      %v598 = vshll.u32 %v542, 16
      %v600 = vrot.slane %v598, 7
      %v601 = vor.u32 %v597, %v600
      %v602 = vrot.slane %v601, 2
      %v604 = vshll.u32 %v549, 16
      %v606 = vrot.slane %v604, 7
      %v607 = vsel %vm371, %v602, %v606
      %v609 = vshrl.u32 %v557, 16
      %v611 = vrot.slane %v609, 6
      %v612 = vshll.u32 %v557, 16
      %v614 = vrot.slane %v612, 7
      %v615 = vor.u32 %v611, %v614
      %v616 = vrot.slane %v615, 2
      %v618 = vshll.u32 %v564, 16
      %v620 = vrot.slane %v618, 7
      %v621 = vsel %vm371, %v616, %v620
      %v623 = vshrl.u32 %v572, 16
      %v625 = vrot.slane %v623, 6
      %v626 = vshll.u32 %v572, 16
      %v628 = vrot.slane %v626, 7
      %v629 = vor.u32 %v625, %v628
      %v630 = vrot.slane %v629, 2
      %v632 = vshll.u32 %v579, 16
      %v634 = vrot.slane %v632, 7
      %v635 = vsel %vm371, %v630, %v634
      %s636 = scalar_lea.vmem %s223, 16
      %v637 = vld [vmem:[%s636] sm:$0xf]
      %v638 = vld [vmem:[%s636 + $0x4] sm:$0xf]
      %v639 = vcombine.low %v593, %v607
      %v640 = vcombine.low %v621, %v635
      %v642 = vunpack.c.l.s4 1983009808
      %v643 = vunpack.c.0.s8 %v642
      %v644 = vlaneseq
      %v645 = vshrl.u32 %v644, 7
      %v646 = vsub.s32 %v643, %v645
      %v647 = vrot.slane %v639, %v646
      %v649 = vunpack.c.l.s4 1983009808
      %v650 = vunpack.c.0.s8 %v649
      %v651 = vlaneseq
      %v652 = vshrl.u32 %v651, 7
      %v653 = vsub.s32 %v650, %v652
      %v654 = vrot.slane %v640, %v653
      %v655 = vcombine.low %v647, %v654
      %v658 = vunpack.c.l.b16 %v637
      %v659 = vunpack.c.l.b16 %v638
      %v660 = vpack.c.b16 %v659, %v658
      %v663 = vsel %vm278, %v655, 0
      %665 = vmatprep.subr.bf16.mxu0 0
      %666 = vmatpush1.bf16.msra.mxu0 %v660
      %667 = vmatprep.subr.bf16.mxu0 0
      %668 = vmatpush1.bf16.msra.mxu0 0
      %669 = vmatprep.subr.bf16.mxu0 0
      %670 = vmatpush1.bf16.msra.mxu0 0
      %671 = vmatprep.subr.bf16.mxu0 0
      %672 = vmatpush1.bf16.msra.mxu0 0
      %673 = vmatprep.subr.bf16.mxu0 0
      %674 = vmatpush1.bf16.msra.mxu0 0
      %675 = vmatprep.subr.bf16.mxu0 0
      %676 = vmatpush1.bf16.msra.mxu0 0
      %677 = vmatprep.subr.bf16.mxu0 0
      %678 = vmatpush1.bf16.msra.mxu0 0
      %679 = vmatprep.subr.bf16.mxu0 0
      %680 = vmatpush1.bf16.msra.mxu0 0
      %681 = vmatprep.subr.bf16.mxu0 0
      %682 = vmatpush1.bf16.msra.mxu0 0
      %683 = vmatprep.subr.bf16.mxu0 0
      %684 = vmatpush1.bf16.msra.mxu0 0
      %685 = vmatprep.subr.bf16.mxu0 0
      %686 = vmatpush1.bf16.msra.mxu0 0
      %687 = vmatprep.subr.bf16.mxu0 0
      %688 = vmatpush1.bf16.msra.mxu0 0
      %689 = vmatprep.subr.bf16.mxu0 0
      %690 = vmatpush1.bf16.msra.mxu0 0
      %691 = vmatprep.subr.bf16.mxu0 0
      %692 = vmatpush1.bf16.msra.mxu0 0
      %693 = vmatprep.subr.bf16.mxu0 0
      %694 = vmatpush1.bf16.msra.mxu0 0
      %695 = vmatprep.subr.bf16.mxu0 0
      %696 = vmatpush1.bf16.msra.mxu0 0
      %697 = vmatprep.mubr.bf16.mxu0 0
      %698 = vmatmul.mubr.bf16.gmra.mrb[0].mxu0 %v663
      %v699 = vpop.f32.mrb[0].mxu0
      %v700 = vadd.f32 0.0, %v699
      %v701 = vpop.f32.mrb[0].mxu0
      %v702 = vpop.f32.mrb[0].mxu0
      %v703 = vadd.f32 0.0, %v702
      %v704 = vpop.f32.mrb[0].mxu0
      %705 = vdwg.mxu0
      %v706 = vld [vmem:[#allocation2] sm:$0xff]
      %v707 = vld [vmem:[#allocation2 + $0x8] sm:$0xff]
      %v708 = vadd.f32 %v706, %v700
      %v709 = vadd.f32 %v707, %v703
      %710 = vst [vmem:[#allocation2] sm:$0xff] %v708
      %711 = vst [vmem:[#allocation2 + $0x8] sm:$0xff] %v709
      %v712 = vld [vmem:[%s244] sm:$0x8]
      %v713 = vld [vmem:[%s244 + $0x4] sm:$0x1]
      %v714 = vld [vmem:[%s244 + $0x8] sm:$0x8]
      %v715 = vld [vmem:[%s244 + $0xc] sm:$0x1]
      %v716 = vld [vmem:[%s244 + $0x10] sm:$0x8]
      %v717 = vld [vmem:[%s244 + $0x14] sm:$0x1]
      %v718 = vld [vmem:[%s244 + $0x18] sm:$0x8]
      %v719 = vld [vmem:[%s244 + $0x1c] sm:$0x1]
      %v729 = vunpack.c.l.s4 1983009808
      %v730 = vunpack.c.0.s8 %v729
      %v731 = vlaneseq
      %v732 = vshrl.u32 %v731, 7
      %v733 = vsub.s32 %v730, %v732
      %v734 = vrot.slane %v712, %v733
      %v735 = vcombine.high %v734, %v734
      %v737 = vunpack.c.l.s4 1983009808
      %v738 = vunpack.c.0.s8 %v737
      %v739 = vlaneseq
      %v740 = vshrl.u32 %v739, 7
      %v741 = vsub.s32 %v738, %v740
      %v742 = vrot.slane %v713, %v741
      %v744 = vunpack.c.l.s4 1983009808
      %v745 = vunpack.c.0.s8 %v744
      %v746 = vlaneseq
      %v747 = vshrl.u32 %v746, 7
      %v748 = vsub.s32 %v745, %v747
      %v749 = vrot.slane %v714, %v748
      %v750 = vcombine.high %v749, %v749
      %v752 = vunpack.c.l.s4 1983009808
      %v753 = vunpack.c.0.s8 %v752
      %v754 = vlaneseq
      %v755 = vshrl.u32 %v754, 7
      %v756 = vsub.s32 %v753, %v755
      %v757 = vrot.slane %v715, %v756
      %v759 = vunpack.c.l.s4 1983009808
      %v760 = vunpack.c.0.s8 %v759
      %v761 = vlaneseq
      %v762 = vshrl.u32 %v761, 7
      %v763 = vsub.s32 %v760, %v762
      %v764 = vrot.slane %v716, %v763
      %v765 = vcombine.high %v764, %v764
      %v767 = vunpack.c.l.s4 1983009808
      %v768 = vunpack.c.0.s8 %v767
      %v769 = vlaneseq
      %v770 = vshrl.u32 %v769, 7
      %v771 = vsub.s32 %v768, %v770
      %v772 = vrot.slane %v717, %v771
      %v774 = vunpack.c.l.s4 1983009808
      %v775 = vunpack.c.0.s8 %v774
      %v776 = vlaneseq
      %v777 = vshrl.u32 %v776, 7
      %v778 = vsub.s32 %v775, %v777
      %v779 = vrot.slane %v718, %v778
      %v780 = vcombine.high %v779, %v779
      %v782 = vunpack.c.l.s4 1983009808
      %v783 = vunpack.c.0.s8 %v782
      %v784 = vlaneseq
      %v785 = vshrl.u32 %v784, 7
      %v786 = vsub.s32 %v783, %v785
      %v787 = vrot.slane %v719, %v786
      %vm788 = vcmask 1040384
      %vm789 = vcmask 1042434
      %vm790 = vmor %vm788, %vm789
      %vm791 = vcmask 1044484
      %vm792 = vmor %vm790, %vm791
      %vm793 = vcmask 1046534
      %vm794 = vmor %vm792, %vm793
      %v795 = vrot.slane %v735, 7
      %v796 = vrot.slane %v795, 2
      %v797 = vrot.slane %v742, 7
      %v798 = vsel %vm794, %v796, %v797
      %v799 = vrot.slane %v750, 7
      %v800 = vrot.slane %v799, 2
      %v801 = vrot.slane %v757, 7
      %v802 = vsel %vm794, %v800, %v801
      %v803 = vrot.slane %v765, 7
      %v804 = vrot.slane %v803, 2
      %v805 = vrot.slane %v772, 7
      %v806 = vsel %vm794, %v804, %v805
      %v807 = vrot.slane %v780, 7
      %v808 = vrot.slane %v807, 2
      %v809 = vrot.slane %v787, 7
      %v810 = vsel %vm794, %v808, %v809
      %s811 = scalar_lea.vmem %s223, 24
      %v812 = vld [vmem:[%s811] sm:$0xf]
      %v813 = vld [vmem:[%s811 + $0x4] sm:$0xf]
      %v814 = vcombine.low %v798, %v802
      %v815 = vcombine.low %v806, %v810
      %v817 = vunpack.c.l.s4 1983009808
      %v818 = vunpack.c.0.s8 %v817
      %v819 = vlaneseq
      %v820 = vshrl.u32 %v819, 7
      %v821 = vsub.s32 %v818, %v820
      %v822 = vrot.slane %v814, %v821
      %v824 = vunpack.c.l.s4 1983009808
      %v825 = vunpack.c.0.s8 %v824
      %v826 = vlaneseq
      %v827 = vshrl.u32 %v826, 7
      %v828 = vsub.s32 %v825, %v827
      %v829 = vrot.slane %v815, %v828
      %v830 = vcombine.low %v822, %v829
      %v833 = vunpack.c.l.b16 %v812
      %v834 = vunpack.c.l.b16 %v813
      %v835 = vpack.c.b16 %v834, %v833
      %v838 = vsel %vm278, %v830, 0
      %840 = vmatprep.subr.bf16.mxu0 0
      %841 = vmatpush1.bf16.msra.mxu0 %v835
      %842 = vmatprep.subr.bf16.mxu0 0
      %843 = vmatpush1.bf16.msra.mxu0 0
      %844 = vmatprep.subr.bf16.mxu0 0
      %845 = vmatpush1.bf16.msra.mxu0 0
      %846 = vmatprep.subr.bf16.mxu0 0
      %847 = vmatpush1.bf16.msra.mxu0 0
      %848 = vmatprep.subr.bf16.mxu0 0
      %849 = vmatpush1.bf16.msra.mxu0 0
      %850 = vmatprep.subr.bf16.mxu0 0
      %851 = vmatpush1.bf16.msra.mxu0 0
      %852 = vmatprep.subr.bf16.mxu0 0
      %853 = vmatpush1.bf16.msra.mxu0 0
      %854 = vmatprep.subr.bf16.mxu0 0
      %855 = vmatpush1.bf16.msra.mxu0 0
      %856 = vmatprep.subr.bf16.mxu0 0
      %857 = vmatpush1.bf16.msra.mxu0 0
      %858 = vmatprep.subr.bf16.mxu0 0
      %859 = vmatpush1.bf16.msra.mxu0 0
      %860 = vmatprep.subr.bf16.mxu0 0
      %861 = vmatpush1.bf16.msra.mxu0 0
      %862 = vmatprep.subr.bf16.mxu0 0
      %863 = vmatpush1.bf16.msra.mxu0 0
      %864 = vmatprep.subr.bf16.mxu0 0
      %865 = vmatpush1.bf16.msra.mxu0 0
      %866 = vmatprep.subr.bf16.mxu0 0
      %867 = vmatpush1.bf16.msra.mxu0 0
      %868 = vmatprep.subr.bf16.mxu0 0
      %869 = vmatpush1.bf16.msra.mxu0 0
      %870 = vmatprep.subr.bf16.mxu0 0
      %871 = vmatpush1.bf16.msra.mxu0 0
      %872 = vmatprep.mubr.bf16.mxu0 0
      %873 = vmatmul.mubr.bf16.gmra.mrb[0].mxu0 %v838
      %v874 = vpop.f32.mrb[0].mxu0
      %v875 = vadd.f32 0.0, %v874
      %v876 = vpop.f32.mrb[0].mxu0
      %v877 = vpop.f32.mrb[0].mxu0
      %v878 = vadd.f32 0.0, %v877
      %v879 = vpop.f32.mrb[0].mxu0
      %880 = vdwg.mxu0
      %v881 = vld [vmem:[#allocation2] sm:$0xff]
      %v882 = vld [vmem:[#allocation2 + $0x8] sm:$0xff]
      %v883 = vadd.f32 %v881, %v875
      %v884 = vadd.f32 %v882, %v878
      %885 = vst [vmem:[#allocation2] sm:$0xff] %v883
      %886 = vst [vmem:[#allocation2 + $0x8] sm:$0xff] %v884
      %s887 = sadd.s32 %s241, 1
      %s888 = smul.u32 %s887, 2
      %s889 = smul.addr %s888, 4
      %s890 = scalar_lea.vmem %s219, %s889
      %v891 = vld [vmem:[%s890] sm:$0x3]
      %v892 = vld [vmem:[%s890 + $0x8] sm:$0x3]
      %v893 = vld [vmem:[%s890 + $0x10] sm:$0x3]
      %v894 = vld [vmem:[%s890 + $0x18] sm:$0x3]
      %s895 = scalar_lea.vmem %s223, 32
      %v896 = vld [vmem:[%s895] sm:$0xf]
      %v897 = vld [vmem:[%s895 + $0x4] sm:$0xf]
      %v902 = vcombine.low %v891, %v892
      %v903 = vcombine.low %v893, %v894
      %v905 = vunpack.c.l.s4 1983009808
      %v906 = vunpack.c.0.s8 %v905
      %v907 = vlaneseq
      %v908 = vshrl.u32 %v907, 7
      %v909 = vsub.s32 %v906, %v908
      %v910 = vrot.slane %v902, %v909
      %v912 = vunpack.c.l.s4 1983009808
      %v913 = vunpack.c.0.s8 %v912
      %v914 = vlaneseq
      %v915 = vshrl.u32 %v914, 7
      %v916 = vsub.s32 %v913, %v915
      %v917 = vrot.slane %v903, %v916
      %v918 = vcombine.low %v910, %v917
      %v921 = vunpack.c.l.b16 %v896
      %v922 = vunpack.c.l.b16 %v897
      %v923 = vpack.c.b16 %v922, %v921
      %v926 = vsel %vm278, %v918, 0
      %928 = vmatprep.subr.bf16.mxu0 0
      %929 = vmatpush1.bf16.msra.mxu0 %v923
      %930 = vmatprep.subr.bf16.mxu0 0
      %931 = vmatpush1.bf16.msra.mxu0 0
      %932 = vmatprep.subr.bf16.mxu0 0
      %933 = vmatpush1.bf16.msra.mxu0 0
      %934 = vmatprep.subr.bf16.mxu0 0
      %935 = vmatpush1.bf16.msra.mxu0 0
      %936 = vmatprep.subr.bf16.mxu0 0
      %937 = vmatpush1.bf16.msra.mxu0 0
      %938 = vmatprep.subr.bf16.mxu0 0
      %939 = vmatpush1.bf16.msra.mxu0 0
      %940 = vmatprep.subr.bf16.mxu0 0
      %941 = vmatpush1.bf16.msra.mxu0 0
      %942 = vmatprep.subr.bf16.mxu0 0
      %943 = vmatpush1.bf16.msra.mxu0 0
      %944 = vmatprep.subr.bf16.mxu0 0
      %945 = vmatpush1.bf16.msra.mxu0 0
      %946 = vmatprep.subr.bf16.mxu0 0
      %947 = vmatpush1.bf16.msra.mxu0 0
      %948 = vmatprep.subr.bf16.mxu0 0
      %949 = vmatpush1.bf16.msra.mxu0 0
      %950 = vmatprep.subr.bf16.mxu0 0
      %951 = vmatpush1.bf16.msra.mxu0 0
      %952 = vmatprep.subr.bf16.mxu0 0
      %953 = vmatpush1.bf16.msra.mxu0 0
      %954 = vmatprep.subr.bf16.mxu0 0
      %955 = vmatpush1.bf16.msra.mxu0 0
      %956 = vmatprep.subr.bf16.mxu0 0
      %957 = vmatpush1.bf16.msra.mxu0 0
      %958 = vmatprep.subr.bf16.mxu0 0
      %959 = vmatpush1.bf16.msra.mxu0 0
      %960 = vmatprep.mubr.bf16.mxu0 0
      %961 = vmatmul.mubr.bf16.gmra.mrb[0].mxu0 %v926
      %v962 = vpop.f32.mrb[0].mxu0
      %v963 = vadd.f32 0.0, %v962
      %v964 = vpop.f32.mrb[0].mxu0
      %v965 = vpop.f32.mrb[0].mxu0
      %v966 = vadd.f32 0.0, %v965
      %v967 = vpop.f32.mrb[0].mxu0
      %968 = vdwg.mxu0
      %v969 = vld [vmem:[#allocation2] sm:$0xff]
      %v970 = vld [vmem:[#allocation2 + $0x8] sm:$0xff]
      %v971 = vadd.f32 %v969, %v963
      %v972 = vadd.f32 %v970, %v966
      %973 = vst [vmem:[#allocation2] sm:$0xff] %v971
      %974 = vst [vmem:[#allocation2 + $0x8] sm:$0xff] %v972
      %v975 = vld [vmem:[%s890] sm:$0x7]
      %v976 = vld [vmem:[%s890 + $0x8] sm:$0x7]
      %v977 = vld [vmem:[%s890 + $0x10] sm:$0x7]
      %v978 = vld [vmem:[%s890 + $0x18] sm:$0x7]
      %v984 = vunpack.c.l.s4 1983009808
      %v985 = vunpack.c.0.s8 %v984
      %v986 = vlaneseq
      %v987 = vshrl.u32 %v986, 7
      %v988 = vsub.s32 %v985, %v987
      %v989 = vrot.slane %v975, %v988
      %v990 = vcombine.high %v989, %v989
      %v992 = vunpack.c.l.s4 1983009808
      %v993 = vunpack.c.0.s8 %v992
      %v994 = vlaneseq
      %v995 = vshrl.u32 %v994, 7
      %v996 = vsub.s32 %v993, %v995
      %v997 = vrot.slane %v976, %v996
      %v998 = vcombine.high %v997, %v997
      %v1000 = vunpack.c.l.s4 1983009808
      %v1001 = vunpack.c.0.s8 %v1000
      %v1002 = vlaneseq
      %v1003 = vshrl.u32 %v1002, 7
      %v1004 = vsub.s32 %v1001, %v1003
      %v1005 = vrot.slane %v977, %v1004
      %v1006 = vcombine.high %v1005, %v1005
      %v1008 = vunpack.c.l.s4 1983009808
      %v1009 = vunpack.c.0.s8 %v1008
      %v1010 = vlaneseq
      %v1011 = vshrl.u32 %v1010, 7
      %v1012 = vsub.s32 %v1009, %v1011
      %v1013 = vrot.slane %v978, %v1012
      %v1014 = vcombine.high %v1013, %v1013
      %v1016 = vshrl.u32 %v989, 16
      %v1018 = vrot.slane %v1016, 6
      %v1019 = vshll.u32 %v989, 16
      %v1021 = vrot.slane %v1019, 7
      %v1022 = vor.u32 %v1018, %v1021
      %v1023 = vrot.slane %v1022, 2
      %v1025 = vshll.u32 %v990, 16
      %v1027 = vrot.slane %v1025, 7
      %v1028 = vsel %vm371, %v1023, %v1027
      %v1030 = vshrl.u32 %v997, 16
      %v1032 = vrot.slane %v1030, 6
      %v1033 = vshll.u32 %v997, 16
      %v1035 = vrot.slane %v1033, 7
      %v1036 = vor.u32 %v1032, %v1035
      %v1037 = vrot.slane %v1036, 2
      %v1039 = vshll.u32 %v998, 16
      %v1041 = vrot.slane %v1039, 7
      %v1042 = vsel %vm371, %v1037, %v1041
      %v1044 = vshrl.u32 %v1005, 16
      %v1046 = vrot.slane %v1044, 6
      %v1047 = vshll.u32 %v1005, 16
      %v1049 = vrot.slane %v1047, 7
      %v1050 = vor.u32 %v1046, %v1049
      %v1051 = vrot.slane %v1050, 2
      %v1053 = vshll.u32 %v1006, 16
      %v1055 = vrot.slane %v1053, 7
      %v1056 = vsel %vm371, %v1051, %v1055
      %v1058 = vshrl.u32 %v1013, 16
      %v1060 = vrot.slane %v1058, 6
      %v1061 = vshll.u32 %v1013, 16
      %v1063 = vrot.slane %v1061, 7
      %v1064 = vor.u32 %v1060, %v1063
      %v1065 = vrot.slane %v1064, 2
      %v1067 = vshll.u32 %v1014, 16
      %v1069 = vrot.slane %v1067, 7
      %v1070 = vsel %vm371, %v1065, %v1069
      %s1071 = scalar_lea.vmem %s223, 40
      %v1072 = vld [vmem:[%s1071] sm:$0xf]
      %v1073 = vld [vmem:[%s1071 + $0x4] sm:$0xf]
      %v1074 = vcombine.low %v1028, %v1042
      %v1075 = vcombine.low %v1056, %v1070
      %v1077 = vunpack.c.l.s4 1983009808
      %v1078 = vunpack.c.0.s8 %v1077
      %v1079 = vlaneseq
      %v1080 = vshrl.u32 %v1079, 7
      %v1081 = vsub.s32 %v1078, %v1080
      %v1082 = vrot.slane %v1074, %v1081
      %v1084 = vunpack.c.l.s4 1983009808
      %v1085 = vunpack.c.0.s8 %v1084
      %v1086 = vlaneseq
      %v1087 = vshrl.u32 %v1086, 7
      %v1088 = vsub.s32 %v1085, %v1087
      %v1089 = vrot.slane %v1075, %v1088
      %v1090 = vcombine.low %v1082, %v1089
      %v1093 = vunpack.c.l.b16 %v1072
      %v1094 = vunpack.c.l.b16 %v1073
      %v1095 = vpack.c.b16 %v1094, %v1093
      %v1098 = vsel %vm278, %v1090, 0
      %1100 = vmatprep.subr.bf16.mxu0 0
      %1101 = vmatpush1.bf16.msra.mxu0 %v1095
      %1102 = vmatprep.subr.bf16.mxu0 0
      %1103 = vmatpush1.bf16.msra.mxu0 0
      %1104 = vmatprep.subr.bf16.mxu0 0
      %1105 = vmatpush1.bf16.msra.mxu0 0
      %1106 = vmatprep.subr.bf16.mxu0 0
      %1107 = vmatpush1.bf16.msra.mxu0 0
      %1108 = vmatprep.subr.bf16.mxu0 0
      %1109 = vmatpush1.bf16.msra.mxu0 0
      %1110 = vmatprep.subr.bf16.mxu0 0
      %1111 = vmatpush1.bf16.msra.mxu0 0
      %1112 = vmatprep.subr.bf16.mxu0 0
      %1113 = vmatpush1.bf16.msra.mxu0 0
      %1114 = vmatprep.subr.bf16.mxu0 0
      %1115 = vmatpush1.bf16.msra.mxu0 0
      %1116 = vmatprep.subr.bf16.mxu0 0
      %1117 = vmatpush1.bf16.msra.mxu0 0
      %1118 = vmatprep.subr.bf16.mxu0 0
      %1119 = vmatpush1.bf16.msra.mxu0 0
      %1120 = vmatprep.subr.bf16.mxu0 0
      %1121 = vmatpush1.bf16.msra.mxu0 0
      %1122 = vmatprep.subr.bf16.mxu0 0
      %1123 = vmatpush1.bf16.msra.mxu0 0
      %1124 = vmatprep.subr.bf16.mxu0 0
      %1125 = vmatpush1.bf16.msra.mxu0 0
      %1126 = vmatprep.subr.bf16.mxu0 0
      %1127 = vmatpush1.bf16.msra.mxu0 0
      %1128 = vmatprep.subr.bf16.mxu0 0
      %1129 = vmatpush1.bf16.msra.mxu0 0
      %1130 = vmatprep.subr.bf16.mxu0 0
      %1131 = vmatpush1.bf16.msra.mxu0 0
      %1132 = vmatprep.mubr.bf16.mxu0 0
      %1133 = vmatmul.mubr.bf16.gmra.mrb[0].mxu0 %v1098
      %v1134 = vpop.f32.mrb[0].mxu0
      %v1135 = vadd.f32 0.0, %v1134
      %v1136 = vpop.f32.mrb[0].mxu0
      %v1137 = vpop.f32.mrb[0].mxu0
      %v1138 = vadd.f32 0.0, %v1137
      %v1139 = vpop.f32.mrb[0].mxu0
      %1140 = vdwg.mxu0
      %v1141 = vld [vmem:[#allocation2] sm:$0xff]
      %v1142 = vld [vmem:[#allocation2 + $0x8] sm:$0xff]
      %v1143 = vadd.f32 %v1141, %v1135
      %v1144 = vadd.f32 %v1142, %v1138
      %1145 = vst [vmem:[#allocation2] sm:$0xff] %v1143
      %1146 = vst [vmem:[#allocation2 + $0x8] sm:$0xff] %v1144
      %v1147 = vld [vmem:[%s890] sm:$0xc]
      %v1148 = vld [vmem:[%s890 + $0x4] sm:$0x1]
      %v1149 = vld [vmem:[%s890 + $0x8] sm:$0xc]
      %v1150 = vld [vmem:[%s890 + $0xc] sm:$0x1]
      %v1151 = vld [vmem:[%s890 + $0x10] sm:$0xc]
      %v1152 = vld [vmem:[%s890 + $0x14] sm:$0x1]
      %v1153 = vld [vmem:[%s890 + $0x18] sm:$0xc]
      %v1154 = vld [vmem:[%s890 + $0x1c] sm:$0x1]
      %v1164 = vunpack.c.l.s4 1983009808
      %v1165 = vunpack.c.0.s8 %v1164
      %v1166 = vlaneseq
      %v1167 = vshrl.u32 %v1166, 7
      %v1168 = vsub.s32 %v1165, %v1167
      %v1169 = vrot.slane %v1147, %v1168
      %v1170 = vcombine.high %v1169, %v1169
      %v1172 = vunpack.c.l.s4 1983009808
      %v1173 = vunpack.c.0.s8 %v1172
      %v1174 = vlaneseq
      %v1175 = vshrl.u32 %v1174, 7
      %v1176 = vsub.s32 %v1173, %v1175
      %v1177 = vrot.slane %v1148, %v1176
      %v1179 = vunpack.c.l.s4 1983009808
      %v1180 = vunpack.c.0.s8 %v1179
      %v1181 = vlaneseq
      %v1182 = vshrl.u32 %v1181, 7
      %v1183 = vsub.s32 %v1180, %v1182
      %v1184 = vrot.slane %v1149, %v1183
      %v1185 = vcombine.high %v1184, %v1184
      %v1187 = vunpack.c.l.s4 1983009808
      %v1188 = vunpack.c.0.s8 %v1187
      %v1189 = vlaneseq
      %v1190 = vshrl.u32 %v1189, 7
      %v1191 = vsub.s32 %v1188, %v1190
      %v1192 = vrot.slane %v1150, %v1191
      %v1194 = vunpack.c.l.s4 1983009808
      %v1195 = vunpack.c.0.s8 %v1194
      %v1196 = vlaneseq
      %v1197 = vshrl.u32 %v1196, 7
      %v1198 = vsub.s32 %v1195, %v1197
      %v1199 = vrot.slane %v1151, %v1198
      %v1200 = vcombine.high %v1199, %v1199
      %v1202 = vunpack.c.l.s4 1983009808
      %v1203 = vunpack.c.0.s8 %v1202
      %v1204 = vlaneseq
      %v1205 = vshrl.u32 %v1204, 7
      %v1206 = vsub.s32 %v1203, %v1205
      %v1207 = vrot.slane %v1152, %v1206
      %v1209 = vunpack.c.l.s4 1983009808
      %v1210 = vunpack.c.0.s8 %v1209
      %v1211 = vlaneseq
      %v1212 = vshrl.u32 %v1211, 7
      %v1213 = vsub.s32 %v1210, %v1212
      %v1214 = vrot.slane %v1153, %v1213
      %v1215 = vcombine.high %v1214, %v1214
      %v1217 = vunpack.c.l.s4 1983009808
      %v1218 = vunpack.c.0.s8 %v1217
      %v1219 = vlaneseq
      %v1220 = vshrl.u32 %v1219, 7
      %v1221 = vsub.s32 %v1218, %v1220
      %v1222 = vrot.slane %v1154, %v1221
      %v1224 = vshrl.u32 %v1170, 16
      %v1226 = vrot.slane %v1224, 6
      %v1227 = vshll.u32 %v1170, 16
      %v1229 = vrot.slane %v1227, 7
      %v1230 = vor.u32 %v1226, %v1229
      %v1231 = vrot.slane %v1230, 2
      %v1233 = vshll.u32 %v1177, 16
      %v1235 = vrot.slane %v1233, 7
      %v1236 = vsel %vm371, %v1231, %v1235
      %v1238 = vshrl.u32 %v1185, 16
      %v1240 = vrot.slane %v1238, 6
      %v1241 = vshll.u32 %v1185, 16
      %v1243 = vrot.slane %v1241, 7
      %v1244 = vor.u32 %v1240, %v1243
      %v1245 = vrot.slane %v1244, 2
      %v1247 = vshll.u32 %v1192, 16
      %v1249 = vrot.slane %v1247, 7
      %v1250 = vsel %vm371, %v1245, %v1249
      %v1252 = vshrl.u32 %v1200, 16
      %v1254 = vrot.slane %v1252, 6
      %v1255 = vshll.u32 %v1200, 16
      %v1257 = vrot.slane %v1255, 7
      %v1258 = vor.u32 %v1254, %v1257
      %v1259 = vrot.slane %v1258, 2
      %v1261 = vshll.u32 %v1207, 16
      %v1263 = vrot.slane %v1261, 7
      %v1264 = vsel %vm371, %v1259, %v1263
      %v1266 = vshrl.u32 %v1215, 16
      %v1268 = vrot.slane %v1266, 6
      %v1269 = vshll.u32 %v1215, 16
      %v1271 = vrot.slane %v1269, 7
      %v1272 = vor.u32 %v1268, %v1271
      %v1273 = vrot.slane %v1272, 2
      %v1275 = vshll.u32 %v1222, 16
      %v1277 = vrot.slane %v1275, 7
      %v1278 = vsel %vm371, %v1273, %v1277
      %s1279 = scalar_lea.vmem %s223, 48
      %v1280 = vld [vmem:[%s1279] sm:$0xf]
      %v1281 = vld [vmem:[%s1279 + $0x4] sm:$0xf]
      %v1282 = vcombine.low %v1236, %v1250
      %v1283 = vcombine.low %v1264, %v1278
      %v1285 = vunpack.c.l.s4 1983009808
      %v1286 = vunpack.c.0.s8 %v1285
      %v1287 = vlaneseq
      %v1288 = vshrl.u32 %v1287, 7
      %v1289 = vsub.s32 %v1286, %v1288
      %v1290 = vrot.slane %v1282, %v1289
      %v1292 = vunpack.c.l.s4 1983009808
      %v1293 = vunpack.c.0.s8 %v1292
      %v1294 = vlaneseq
      %v1295 = vshrl.u32 %v1294, 7
      %v1296 = vsub.s32 %v1293, %v1295
      %v1297 = vrot.slane %v1283, %v1296
      %v1298 = vcombine.low %v1290, %v1297
      %v1301 = vunpack.c.l.b16 %v1280
      %v1302 = vunpack.c.l.b16 %v1281
      %v1303 = vpack.c.b16 %v1302, %v1301
      %v1306 = vsel %vm278, %v1298, 0
      %1308 = vmatprep.subr.bf16.mxu0 0
      %1309 = vmatpush1.bf16.msra.mxu0 %v1303
      %1310 = vmatprep.subr.bf16.mxu0 0
      %1311 = vmatpush1.bf16.msra.mxu0 0
      %1312 = vmatprep.subr.bf16.mxu0 0
      %1313 = vmatpush1.bf16.msra.mxu0 0
      %1314 = vmatprep.subr.bf16.mxu0 0
      %1315 = vmatpush1.bf16.msra.mxu0 0
      %1316 = vmatprep.subr.bf16.mxu0 0
      %1317 = vmatpush1.bf16.msra.mxu0 0
      %1318 = vmatprep.subr.bf16.mxu0 0
      %1319 = vmatpush1.bf16.msra.mxu0 0
      %1320 = vmatprep.subr.bf16.mxu0 0
      %1321 = vmatpush1.bf16.msra.mxu0 0
      %1322 = vmatprep.subr.bf16.mxu0 0
      %1323 = vmatpush1.bf16.msra.mxu0 0
      %1324 = vmatprep.subr.bf16.mxu0 0
      %1325 = vmatpush1.bf16.msra.mxu0 0
      %1326 = vmatprep.subr.bf16.mxu0 0
      %1327 = vmatpush1.bf16.msra.mxu0 0
      %1328 = vmatprep.subr.bf16.mxu0 0
      %1329 = vmatpush1.bf16.msra.mxu0 0
      %1330 = vmatprep.subr.bf16.mxu0 0
      %1331 = vmatpush1.bf16.msra.mxu0 0
      %1332 = vmatprep.subr.bf16.mxu0 0
      %1333 = vmatpush1.bf16.msra.mxu0 0
      %1334 = vmatprep.subr.bf16.mxu0 0
      %1335 = vmatpush1.bf16.msra.mxu0 0
      %1336 = vmatprep.subr.bf16.mxu0 0
      %1337 = vmatpush1.bf16.msra.mxu0 0
      %1338 = vmatprep.subr.bf16.mxu0 0
      %1339 = vmatpush1.bf16.msra.mxu0 0
      %1340 = vmatprep.mubr.bf16.mxu0 0
      %1341 = vmatmul.mubr.bf16.gmra.mrb[0].mxu0 %v1306
      %v1342 = vpop.f32.mrb[0].mxu0
      %v1343 = vadd.f32 0.0, %v1342
      %v1344 = vpop.f32.mrb[0].mxu0
      %v1345 = vpop.f32.mrb[0].mxu0
      %v1346 = vadd.f32 0.0, %v1345
      %v1347 = vpop.f32.mrb[0].mxu0
      %1348 = vdwg.mxu0
      %v1349 = vld [vmem:[#allocation2] sm:$0xff]
      %v1350 = vld [vmem:[#allocation2 + $0x8] sm:$0xff]
      %v1351 = vadd.f32 %v1349, %v1343
      %v1352 = vadd.f32 %v1350, %v1346
      %1353 = vst [vmem:[#allocation2] sm:$0xff] %v1351
      %1354 = vst [vmem:[#allocation2 + $0x8] sm:$0xff] %v1352
      %v1355 = vld [vmem:[%s890] sm:$0x8]
      %v1356 = vld [vmem:[%s890 + $0x4] sm:$0x1]
      %v1357 = vld [vmem:[%s890 + $0x8] sm:$0x8]
      %v1358 = vld [vmem:[%s890 + $0xc] sm:$0x1]
      %v1359 = vld [vmem:[%s890 + $0x10] sm:$0x8]
      %v1360 = vld [vmem:[%s890 + $0x14] sm:$0x1]
      %v1361 = vld [vmem:[%s890 + $0x18] sm:$0x8]
      %v1362 = vld [vmem:[%s890 + $0x1c] sm:$0x1]
      %v1372 = vunpack.c.l.s4 1983009808
      %v1373 = vunpack.c.0.s8 %v1372
      %v1374 = vlaneseq
      %v1375 = vshrl.u32 %v1374, 7
      %v1376 = vsub.s32 %v1373, %v1375
      %v1377 = vrot.slane %v1355, %v1376
      %v1378 = vcombine.high %v1377, %v1377
      %v1380 = vunpack.c.l.s4 1983009808
      %v1381 = vunpack.c.0.s8 %v1380
      %v1382 = vlaneseq
      %v1383 = vshrl.u32 %v1382, 7
      %v1384 = vsub.s32 %v1381, %v1383
      %v1385 = vrot.slane %v1356, %v1384
      %v1387 = vunpack.c.l.s4 1983009808
      %v1388 = vunpack.c.0.s8 %v1387
      %v1389 = vlaneseq
      %v1390 = vshrl.u32 %v1389, 7
      %v1391 = vsub.s32 %v1388, %v1390
      %v1392 = vrot.slane %v1357, %v1391
      %v1393 = vcombine.high %v1392, %v1392
      %v1395 = vunpack.c.l.s4 1983009808
      %v1396 = vunpack.c.0.s8 %v1395
      %v1397 = vlaneseq
      %v1398 = vshrl.u32 %v1397, 7
      %v1399 = vsub.s32 %v1396, %v1398
      %v1400 = vrot.slane %v1358, %v1399
      %v1402 = vunpack.c.l.s4 1983009808
      %v1403 = vunpack.c.0.s8 %v1402
      %v1404 = vlaneseq
      %v1405 = vshrl.u32 %v1404, 7
      %v1406 = vsub.s32 %v1403, %v1405
      %v1407 = vrot.slane %v1359, %v1406
      %v1408 = vcombine.high %v1407, %v1407
      %v1410 = vunpack.c.l.s4 1983009808
      %v1411 = vunpack.c.0.s8 %v1410
      %v1412 = vlaneseq
      %v1413 = vshrl.u32 %v1412, 7
      %v1414 = vsub.s32 %v1411, %v1413
      %v1415 = vrot.slane %v1360, %v1414
      %v1417 = vunpack.c.l.s4 1983009808
      %v1418 = vunpack.c.0.s8 %v1417
      %v1419 = vlaneseq
      %v1420 = vshrl.u32 %v1419, 7
      %v1421 = vsub.s32 %v1418, %v1420
      %v1422 = vrot.slane %v1361, %v1421
      %v1423 = vcombine.high %v1422, %v1422
      %v1425 = vunpack.c.l.s4 1983009808
      %v1426 = vunpack.c.0.s8 %v1425
      %v1427 = vlaneseq
      %v1428 = vshrl.u32 %v1427, 7
      %v1429 = vsub.s32 %v1426, %v1428
      %v1430 = vrot.slane %v1362, %v1429
      %v1431 = vrot.slane %v1378, 7
      %v1432 = vrot.slane %v1431, 2
      %v1433 = vrot.slane %v1385, 7
      %v1434 = vsel %vm794, %v1432, %v1433
      %v1435 = vrot.slane %v1393, 7
      %v1436 = vrot.slane %v1435, 2
      %v1437 = vrot.slane %v1400, 7
      %v1438 = vsel %vm794, %v1436, %v1437
      %v1439 = vrot.slane %v1408, 7
      %v1440 = vrot.slane %v1439, 2
      %v1441 = vrot.slane %v1415, 7
      %v1442 = vsel %vm794, %v1440, %v1441
      %v1443 = vrot.slane %v1423, 7
      %v1444 = vrot.slane %v1443, 2
      %v1445 = vrot.slane %v1430, 7
      %v1446 = vsel %vm794, %v1444, %v1445
      %s1447 = scalar_lea.vmem %s223, 56
      %v1448 = vld [vmem:[%s1447] sm:$0xf]
      %v1449 = vld [vmem:[%s1447 + $0x4] sm:$0xf]
      %v1450 = vcombine.low %v1434, %v1438
      %v1451 = vcombine.low %v1442, %v1446
      %v1453 = vunpack.c.l.s4 1983009808
      %v1454 = vunpack.c.0.s8 %v1453
      %v1455 = vlaneseq
      %v1456 = vshrl.u32 %v1455, 7
      %v1457 = vsub.s32 %v1454, %v1456
      %v1458 = vrot.slane %v1450, %v1457
      %v1460 = vunpack.c.l.s4 1983009808
      %v1461 = vunpack.c.0.s8 %v1460
      %v1462 = vlaneseq
      %v1463 = vshrl.u32 %v1462, 7
      %v1464 = vsub.s32 %v1461, %v1463
      %v1465 = vrot.slane %v1451, %v1464
      %v1466 = vcombine.low %v1458, %v1465
      %v1469 = vunpack.c.l.b16 %v1448
      %v1470 = vunpack.c.l.b16 %v1449
      %v1471 = vpack.c.b16 %v1470, %v1469
      %v1474 = vsel %vm278, %v1466, 0
      %1476 = vmatprep.subr.bf16.mxu0 0
      %1477 = vmatpush1.bf16.msra.mxu0 %v1471
      %1478 = vmatprep.subr.bf16.mxu0 0
      %1479 = vmatpush1.bf16.msra.mxu0 0
      %1480 = vmatprep.subr.bf16.mxu0 0
      %1481 = vmatpush1.bf16.msra.mxu0 0
      %1482 = vmatprep.subr.bf16.mxu0 0
      %1483 = vmatpush1.bf16.msra.mxu0 0
      %1484 = vmatprep.subr.bf16.mxu0 0
      %1485 = vmatpush1.bf16.msra.mxu0 0
      %1486 = vmatprep.subr.bf16.mxu0 0
      %1487 = vmatpush1.bf16.msra.mxu0 0
      %1488 = vmatprep.subr.bf16.mxu0 0
      %1489 = vmatpush1.bf16.msra.mxu0 0
      %1490 = vmatprep.subr.bf16.mxu0 0
      %1491 = vmatpush1.bf16.msra.mxu0 0
      %1492 = vmatprep.subr.bf16.mxu0 0
      %1493 = vmatpush1.bf16.msra.mxu0 0
      %1494 = vmatprep.subr.bf16.mxu0 0
      %1495 = vmatpush1.bf16.msra.mxu0 0
      %1496 = vmatprep.subr.bf16.mxu0 0
      %1497 = vmatpush1.bf16.msra.mxu0 0
      %1498 = vmatprep.subr.bf16.mxu0 0
      %1499 = vmatpush1.bf16.msra.mxu0 0
      %1500 = vmatprep.subr.bf16.mxu0 0
      %1501 = vmatpush1.bf16.msra.mxu0 0
      %1502 = vmatprep.subr.bf16.mxu0 0
      %1503 = vmatpush1.bf16.msra.mxu0 0
      %1504 = vmatprep.subr.bf16.mxu0 0
      %1505 = vmatpush1.bf16.msra.mxu0 0
      %1506 = vmatprep.subr.bf16.mxu0 0
      %1507 = vmatpush1.bf16.msra.mxu0 0
      %1508 = vmatprep.mubr.bf16.mxu0 0
      %1509 = vmatmul.mubr.bf16.gmra.mrb[0].mxu0 %v1474
      %v1510 = vpop.f32.mrb[0].mxu0
      %v1511 = vadd.f32 0.0, %v1510
      %v1512 = vpop.f32.mrb[0].mxu0
      %v1513 = vpop.f32.mrb[0].mxu0
      %v1514 = vadd.f32 0.0, %v1513
      %v1515 = vpop.f32.mrb[0].mxu0
      %1516 = vdwg.mxu0
      %v1517 = vld [vmem:[#allocation2] sm:$0xff]
      %v1518 = vld [vmem:[#allocation2 + $0x8] sm:$0xff]
      %v1519 = vadd.f32 %v1517, %v1511
      %v1520 = vadd.f32 %v1518, %v1514
      %1521 = vst [vmem:[#allocation2] sm:$0xff] %v1519
      %1522 = vst [vmem:[#allocation2 + $0x8] sm:$0xff] %v1520
      %v1523 = vld [vmem:[#allocation2] sm:$0xff]
      %v1524 = vld [vmem:[#allocation2 + $0x8] sm:$0xff]
      %v1525 = vld [vmem:[%s226] sm:$0x1]
      %v1527 = vlaneseq
      %v1528 = vshrl.u32 %v1527, 7
      %v1529 = vsub.s32 0, %v1528
      %v1530 = vrot.slane %v1525, %v1529
      %v1532 = vadd.f32 %v1523, %v1530
      %v1533 = vadd.f32 %v1524, %v1530
      %v1534 = vadd.f32 %v1532, %v1533
      %v1535 = vrot.slane %v1534, 4
      %v1536 = vadd.f32 %v1534, %v1535
      %v1537 = vrot.slane %v1536, 2
      %v1538 = vadd.f32 %v1536, %v1537
      %v1539 = vrot.slane %v1538, 1
      %v1540 = vadd.f32 %v1538, %v1539
      %v1541 = vmul.f32 %v1532, %v1532
      %v1542 = vmul.f32 %v1533, %v1533
      %v1543 = vadd.f32 %v1541, %v1542
      %v1544 = vrot.slane %v1543, 4
      %v1545 = vadd.f32 %v1543, %v1544
      %v1546 = vrot.slane %v1545, 2
      %v1547 = vadd.f32 %v1545, %v1546
      %v1548 = vrot.slane %v1547, 1
      %v1549 = vadd.f32 %v1547, %v1548
      %v1550 = vmul.f32 %v1540, 0.0625
      %v1551 = vmul.f32 %v1549, 0.0625
      %v1552 = vmul.f32 %v1550, %v1550
      %v1553 = vsub.f32 %v1551, %v1552
      %v1554 = vmax.f32 %v1553, 0.0
      %v1555 = vsub.f32 %v1532, %v1550
      %v1556 = vsub.f32 %v1533, %v1550
      %v1557 = vadd.f32 %v1554, 1e-05
      %v1558 = vrsqrt.pop %v1557
      %v1559 = vmul.f32 %v1555, %v1558
      %v1560 = vmul.f32 %v1556, %v1558
      %vm1561 = vcmp.gt.f32.partialorder %v1559, 0.0
      %vm1562 = vcmp.gt.f32.partialorder %v1560, 0.0
      %v1563 = vmul.f32 %v1559, 0.2
      %v1564 = vmul.f32 %v1560, 0.2
      %v1565 = vsel %vm1561, %v1559, %v1563
      %v1566 = vsel %vm1562, %v1560, %v1564
      %v1567 = vpack.c.bf16 %v1566, %v1565
      %v1569 = vunpack.c.l.b16 %v1567
      %v1570 = vunpack.c.h.b16 %v1567
      %v1571 = vpack.c.b16 %v1569, %v1569
      %v1572 = vpack.c.b16 %v1570, %v1570
      %1575 = vst [vmem:[%s238] sm:$0xf] %v1571
      %1576 = vst [vmem:[%s238 + $0x4] sm:$0xf] %v1572
      %s1577 = smul.u32 2, %s21
      %p1578 = scmp.lt.s32.totalorder %s19, 1
      %s1579 = scalar_select %p1578, %s19, 1
      %p1580 = scmp.lt.s32.totalorder %s1577, 1
      %s1581 = scalar_select %p1580, %s1577, 1
      %p1582 = scmp.lt.s32.totalorder %s20, 0
      %s1583 = scalar_select %p1582, %s20, 0
      %s1584 = sadd.s32 %s1583, %s1581
      %s1585 = smul.addr %s1579, 2
      %s1586 = sadd.s32 %s1584, %s1585
      %s1587 = smul.addr %s1586, 4
      %s1588 = scalar_lea.vmem %s3, %s1587
      // Predicated region
      $region33: #{_lambda_.5} parent=31 // pred_check
        %p1589 = pneg %p133
      $region34: #{_lambda_.5} parent=31 // pred_check_branch
        %1591 = sbr.rel (%p1589) target = $region36
      $region35: #{_lambda_.5} parent=31 // pred_region
        %s1592 = smul.u32 2, %s21
      $region36: #{_lambda_.5} parent=31 // pred_fallthru
        _
    $region32: #{_lambda_.5} parent=5 // pred_fallthru
      _
    %p1593 = scmp.le.s32.totalorder 2, %s9
    // Predicated region
    $region37: #{_lambda_.5} parent=5 // pred_check
      %p1594 = pneg %p1593
    $region38: #{_lambda_.5} parent=5 // pred_check_branch
      %1596 = sbr.rel (%p1594) target = $region40
    $region39: #{_lambda_.5} parent=5 // pred_region
      %s1597 = ssub.s32 %s9, 2
      // Predicated region
      $region41: #{_lambda_.5} parent=39 // pred_check
        %p1598 = pneg %p139
      $region42: #{_lambda_.5} parent=39 // pred_check_branch
        %1600 = sbr.rel (%p1598) target = $region44
      $region43: #{_lambda_.5} parent=39 // pred_region
        %s1601 = smul.u32 2, %s24
        %p1602 = scmp.lt.s32.totalorder %s22, 1
        %s1603 = scalar_select %p1602, %s22, 1
        %p1604 = scmp.lt.s32.totalorder %s1601, 1
        %s1605 = scalar_select %p1604, %s1601, 1
        %p1606 = scmp.lt.s32.totalorder %s23, 0
        %s1607 = scalar_select %p1606, %s23, 0
        %s1608 = sadd.s32 %s1607, %s1605
        %s1609 = smul.addr %s1603, 2
        %s1610 = sadd.s32 %s1608, %s1609
        %s1611 = smul.addr %s1610, 4
        %s1612 = scalar_lea.vmem %s3, %s1611
      $region44: #{_lambda_.5} parent=39 // pred_fallthru
        _
    $region40: #{_lambda_.5} parent=5 // pred_fallthru
      _
  $region6: #{_lambda_.5} parent=0 // loop_footer
    %s13 = sadd.s32 1, %s9
  $region7: #{_lambda_.5} parent=0 // loop_footer_branch
    %8 = sbr.rel target = $region3
  $region8: #{_lambda_.5} parent=0 // loop_exit
    _

// kernel: _lambda_.7
$region0: #{_lambda_.7}
  #allocation0 [shape = 'u32[]', space=smem, size = 0x4, offset = 0x4, fixed_abs, tag = 'smem constant byte address 0x4 - core index']
  #allocation1 [shape = 'u32[144,128]{1,0:T(1,128)}', space=vmem, size = 0x12000, scoped, tag = 'internal scratch']
  #allocation2 [shape = 'f32[1,128]{1,0:T(1,128)}', space=vmem, size = 0x200, scoped, tag = 'scratch operand']
  %s0 = inlined_call_operand.vmem [shape: bf16[2,4,4,32], index: 0, kind: input, shape index: {}]
  %s1 = inlined_call_operand.vmem [shape: bf16[16,32,128], index: 1, kind: input, shape index: {}]
  %s2 = inlined_call_operand.vmem [shape: f32[1,128], index: 2, kind: input, shape index: {}]
  %s3 = inlined_call_operand.vmem [shape: bf16[2,1,128], index: 3, kind: output, shape index: {}]
  %s4 = sld [smem:[#allocation0]]
  $region45: #{_lambda_.7} parent=0
    _
  %s6 = ssub.s32 1, %s4
  %s7 = scalar_select 0, %s6, %s4
  loop: start=0, step=1, limit=4
  $region2: #{_lambda_.7} parent=0 // loop_pre_header
    _
  $region3: #{_lambda_.7} parent=0 // loop_header
    %s9 = sphi 0, %s13
    %p10 = scmp.ge.s32.totalorder %s9, 4
    %s16 = sphi 0, %s35
    %s17 = sphi 0, %s31
    %s18 = sphi 0, %s27
    %s19 = sphi 0, %s16
    %s20 = sphi 0, %s17
    %s21 = sphi 0, %s18
    %s22 = sphi 0, %s19
    %s23 = sphi 0, %s20
    %s24 = sphi 0, %s21
    %s38 = sphi 0, %s40
    %s41 = sphi 0, %s38
    %s42 = sphi 0, %s41
    %s58 = sphi 0, %s42
    %s64 = sphi 0, %s66
    %s67 = sphi 0, %s64
    %s68 = sphi 0, %s67
    %s84 = sphi 0, %s68
    %s90 = sphi 0, %s92
    %s93 = sphi 0, %s90
    %s94 = sphi 0, %s93
    %s110 = sphi 0, %s94
    %s120 = sphi 0, %s122
    %s123 = sphi 0, %s120
    %s124 = sphi 0, %s123
    %s140 = sphi 0, %s124
  $region4: #{_lambda_.7} parent=0 // loop_header_branch
    %12 = sbr.rel (%p10) target = $region8
  $region5: #{_lambda_.7} parent=0 // loop_body
    %s14 = ssub.s32 %s9, 1
    %s15 = ssub.s32 %s9, 2
    %s25 = sadd.s32 1, %s18
    %p26 = scmp.ge.s32.totalorder %s25, 1
    %s27 = scalar_select %p26, 0, %s25
    %s28 = sadd.s32 1, %s17
    %s29 = scalar_select %p26, %s28, %s17
    %p30 = scmp.ge.s32.totalorder %s29, 1
    %s31 = scalar_select %p30, 0, %s29
    %s32 = sadd.s32 1, %s16
    %s33 = scalar_select %p30, %s32, %s16
    %p34 = scmp.ge.s32.totalorder %s33, 2
    %s35 = scalar_select %p34, 0, %s33
    %s36 = ssub.s32 %s16, %s35
    %p37 = scmp.eq.s32.totalorder %s36, 0
    %s39 = sadd.s32 %s38, 1
    %s40 = scalar_select %p37, %s38, %s39
    %p43 = pneg %p37
    %p44 = scmp.eq.s32.totalorder %s9, 1
    %p45 = por %p43, %p44
    %p46 = scmp.ne.s32.totalorder %s38, %s41
    %p47 = scmp.eq.s32.totalorder %s9, 0
    %p48 = por %p46, %p47
    %p49 = scmp.ne.s32.totalorder %s38, %s41
    %p50 = scmp.eq.s32.totalorder %s14, 1
    %p51 = por %p49, %p50
    %p52 = scmp.ne.s32.totalorder %s41, %s42
    %p53 = scmp.eq.s32.totalorder %s14, 0
    %p54 = por %p52, %p53
    %p55 = scmp.ne.s32.totalorder %s41, %s42
    %p56 = scmp.eq.s32.totalorder %s15, 1
    %p57 = por %p55, %p56
    %p59 = scmp.ne.s32.totalorder %s42, %s58
    %p60 = scmp.eq.s32.totalorder %s15, 0
    %p61 = por %p59, %p60
    %s62 = ssub.s32 %s17, %s31
    %p63 = scmp.eq.s32.totalorder %s62, 0
    %s65 = sadd.s32 %s64, 1
    %s66 = scalar_select %p63, %s64, %s65
    %p69 = pneg %p63
    %p70 = scmp.eq.s32.totalorder %s9, 1
    %p71 = por %p69, %p70
    %p72 = scmp.ne.s32.totalorder %s64, %s67
    %p73 = scmp.eq.s32.totalorder %s9, 0
    %p74 = por %p72, %p73
    %p75 = scmp.ne.s32.totalorder %s64, %s67
    %p76 = scmp.eq.s32.totalorder %s14, 1
    %p77 = por %p75, %p76
    %p78 = scmp.ne.s32.totalorder %s67, %s68
    %p79 = scmp.eq.s32.totalorder %s14, 0
    %p80 = por %p78, %p79
    %p81 = scmp.ne.s32.totalorder %s67, %s68
    %p82 = scmp.eq.s32.totalorder %s15, 1
    %p83 = por %p81, %p82
    %p85 = scmp.ne.s32.totalorder %s68, %s84
    %p86 = scmp.eq.s32.totalorder %s15, 0
    %p87 = por %p85, %p86
    %s88 = ssub.s32 %s17, %s31
    %p89 = scmp.eq.s32.totalorder %s88, 0
    %s91 = sadd.s32 %s90, 1
    %s92 = scalar_select %p89, %s90, %s91
    %p95 = pneg %p89
    %p96 = scmp.eq.s32.totalorder %s9, 1
    %p97 = por %p95, %p96
    %p98 = scmp.ne.s32.totalorder %s90, %s93
    %p99 = scmp.eq.s32.totalorder %s9, 0
    %p100 = por %p98, %p99
    %p101 = scmp.ne.s32.totalorder %s90, %s93
    %p102 = scmp.eq.s32.totalorder %s14, 1
    %p103 = por %p101, %p102
    %p104 = scmp.ne.s32.totalorder %s93, %s94
    %p105 = scmp.eq.s32.totalorder %s14, 0
    %p106 = por %p104, %p105
    %p107 = scmp.ne.s32.totalorder %s93, %s94
    %p108 = scmp.eq.s32.totalorder %s15, 1
    %p109 = por %p107, %p108
    %p111 = scmp.ne.s32.totalorder %s94, %s110
    %p112 = scmp.eq.s32.totalorder %s15, 0
    %p113 = por %p111, %p112
    %s114 = ssub.s32 %s16, %s35
    %s115 = ssub.s32 %s18, %s27
    %s116 = sor.u32 %s114, %s115
    %s117 = ssub.s32 %s17, %s31
    %s118 = sor.u32 %s116, %s117
    %p119 = scmp.eq.s32.totalorder %s118, 0
    %s121 = sadd.s32 %s120, 1
    %s122 = scalar_select %p119, %s120, %s121
    %p125 = pneg %p119
    %p126 = scmp.eq.s32.totalorder %s9, 1
    %p127 = por %p125, %p126
    %p128 = scmp.ne.s32.totalorder %s120, %s123
    %p129 = scmp.eq.s32.totalorder %s9, 0
    %p130 = por %p128, %p129
    %p131 = scmp.ne.s32.totalorder %s120, %s123
    %p132 = scmp.eq.s32.totalorder %s14, 1
    %p133 = por %p131, %p132
    %p134 = scmp.ne.s32.totalorder %s123, %s124
    %p135 = scmp.eq.s32.totalorder %s14, 0
    %p136 = por %p134, %p135
    %p137 = scmp.ne.s32.totalorder %s123, %s124
    %p138 = scmp.eq.s32.totalorder %s15, 1
    %p139 = por %p137, %p138
    %p141 = scmp.ne.s32.totalorder %s124, %s140
    %p142 = scmp.eq.s32.totalorder %s15, 0
    %p143 = por %p141, %p142
    %p144 = scmp.le.s32.totalorder 1, %s9
    %p145 = scmp.lt.s32.totalorder %s9, 3
    %p146 = pnand %p144, %p145
    %p147 = pneg %p146
    // Predicated region
    $region9: #{_lambda_.7} parent=5 // pred_check
      _
    $region10: #{_lambda_.7} parent=5 // pred_check_branch
      %149 = sbr.rel (%p146) target = $region12
    $region11: #{_lambda_.7} parent=5 // pred_region
      %s150 = ssub.s32 %s9, 1
      // Predicated region
      $region13: #{_lambda_.7} parent=11 // pred_check
        %p151 = pneg %p80
      $region14: #{_lambda_.7} parent=11 // pred_check_branch
        %153 = sbr.rel (%p151) target = $region16
      $region15: #{_lambda_.7} parent=11 // pred_region
        %p154 = scmp.lt.s32.totalorder %s20, 0
        %s155 = scalar_select %p154, %s20, 0
        %s156 = smul.addr %s155, 4
        %s157 = scalar_lea.vmem %s1, %s156
      $region16: #{_lambda_.7} parent=11 // pred_fallthru
        _
      // Predicated region
      $region17: #{_lambda_.7} parent=11 // pred_check
        %p158 = pneg %p106
      $region18: #{_lambda_.7} parent=11 // pred_check_branch
        %160 = sbr.rel (%p158) target = $region20
      $region19: #{_lambda_.7} parent=11 // pred_region
        %p161 = scmp.lt.s32.totalorder %s20, 0
        %s162 = scalar_select %p161, %s20, 0
        %s163 = scalar_lea.vmem %s2, %s162
      $region20: #{_lambda_.7} parent=11 // pred_fallthru
        _
    $region12: #{_lambda_.7} parent=5 // pred_fallthru
      _
    %p164 = scmp.lt.s32.totalorder %s9, 2
    // Predicated region
    $region21: #{_lambda_.7} parent=5 // pred_check
      %p165 = pneg %p164
    $region22: #{_lambda_.7} parent=5 // pred_check_branch
      %167 = sbr.rel (%p165) target = $region24
    $region23: #{_lambda_.7} parent=5 // pred_region
      // Predicated region
      $region25: #{_lambda_.7} parent=23 // pred_check
        %p168 = pneg %p48
      $region26: #{_lambda_.7} parent=23 // pred_check_branch
        %170 = sbr.rel (%p168) target = $region28
      $region27: #{_lambda_.7} parent=23 // pred_region
        %p171 = scmp.lt.s32.totalorder %s16, 1
        %s172 = scalar_select %p171, %s16, 1
        %s173 = smul.addr %s172, 4
        %s174 = smul.addr %s173, 2
        %s175 = scalar_lea.vmem %s0, %s174
      $region28: #{_lambda_.7} parent=23 // pred_fallthru
        _
    $region24: #{_lambda_.7} parent=5 // pred_fallthru
      _
    %p176 = scmp.le.s32.totalorder 1, %s9
    %p177 = scmp.lt.s32.totalorder %s9, 3
    %p178 = pnand %p176, %p177
    %p179 = pneg %p178
    // Predicated region
    $region29: #{_lambda_.7} parent=5 // pred_check
      _
    $region30: #{_lambda_.7} parent=5 // pred_check_branch
      %181 = sbr.rel (%p178) target = $region32
    $region31: #{_lambda_.7} parent=5 // pred_region
      %s182 = ssub.s32 %s9, 1
      %p183 = scmp.lt.s32.totalorder %s19, 1
      %s184 = scalar_select %p183, %s19, 1
      %s185 = smul.addr %s184, 4
      %s186 = smul.addr %s185, 2
      %s187 = scalar_lea.vmem %s0, %s186
      %p188 = pneg %p54
      %p189 = pneg %p51
      %p190 = scmp.lt.s32.totalorder %s20, 0
      %s191 = scalar_select %p190, %s20, 0
      %s192 = smul.addr %s191, 4
      %s193 = scalar_lea.vmem %s1, %s192
      %p194 = pneg %p80
      %p195 = pneg %p77
      %p196 = scmp.lt.s32.totalorder %s20, 0
      %s197 = scalar_select %p196, %s20, 0
      %s198 = scalar_lea.vmem %s2, %s197
      %p199 = pneg %p106
      %p200 = pneg %p103
      %p201 = pneg %p136
      %p202 = pneg %p133
      %p203 = scmp.lt.s32.totalorder %s19, 1
      %s204 = scalar_select %p203, %s19, 1
      %p205 = scmp.lt.s32.totalorder %s21, 0
      %s206 = scalar_select %p205, %s21, 0
      %p207 = scmp.lt.s32.totalorder %s20, 0
      %s208 = scalar_select %p207, %s20, 0
      %s209 = sadd.s32 %s208, %s206
      %s210 = sadd.s32 %s209, %s204
      %s211 = scalar_lea.vmem %s3, %s210
      %p212 = scmp.lt.s32.totalorder %s19, 1
      %s213 = scalar_select %p212, %s19, 1
      %s214 = smul.addr %s213, 4
      %s215 = smul.addr %s214, 2
      %s216 = scalar_lea.vmem %s0, %s215
      %p217 = scmp.lt.s32.totalorder %s20, 0
      %s218 = scalar_select %p217, %s20, 0
      %s219 = smul.addr %s218, 4
      %s220 = scalar_lea.vmem %s1, %s219
      %p221 = scmp.lt.s32.totalorder %s20, 0
      %s222 = scalar_select %p221, %s20, 0
      %s223 = scalar_lea.vmem %s2, %s222
      %p224 = scmp.lt.s32.totalorder %s19, 1
      %s225 = scalar_select %p224, %s19, 1
      %p226 = scmp.lt.s32.totalorder %s21, 0
      %s227 = scalar_select %p226, %s21, 0
      %p228 = scmp.lt.s32.totalorder %s20, 0
      %s229 = scalar_select %p228, %s20, 0
      %s230 = sadd.s32 %s229, %s227
      %s231 = sadd.s32 %s230, %s225
      %s232 = scalar_lea.vmem %s3, %s231
      %s234 = smul.addr %s21, 2
      %s235 = scalar_lea.vmem %s216, %s234
      %v236 = vld [vmem:[%s235] sm:$0x1]
      %v237 = vld [vmem:[%s220] sm:$0xf]
      %v238 = vld [vmem:[%s220 + $0x4] sm:$0xf]
      %v239 = vld [vmem:[%s220 + $0x8] sm:$0xf]
      %v240 = vld [vmem:[%s220 + $0xc] sm:$0xf]
      %v245 = vunpack.c.l.b16 %v237
      %v246 = vunpack.c.l.b16 %v238
      %v247 = vunpack.c.l.b16 %v239
      %v248 = vunpack.c.l.b16 %v240
      %v249 = vpack.c.b16 %v246, %v245
      %v250 = vpack.c.b16 %v248, %v247
      %vm253 = vcmask 261120
      %v255 = vsel %vm253, %v236, 0
      %257 = vmatprep.subr.bf16.mxu0 0
      %258 = vmatpush1.bf16.msra.mxu0 %v249
      %259 = vmatprep.subr.bf16.mxu0 0
      %260 = vmatpush1.bf16.msra.mxu0 %v250
      %261 = vmatprep.subr.bf16.mxu0 0
      %262 = vmatpush1.bf16.msra.mxu0 0
      %263 = vmatprep.subr.bf16.mxu0 0
      %264 = vmatpush1.bf16.msra.mxu0 0
      %265 = vmatprep.subr.bf16.mxu0 0
      %266 = vmatpush1.bf16.msra.mxu0 0
      %267 = vmatprep.subr.bf16.mxu0 0
      %268 = vmatpush1.bf16.msra.mxu0 0
      %269 = vmatprep.subr.bf16.mxu0 0
      %270 = vmatpush1.bf16.msra.mxu0 0
      %271 = vmatprep.subr.bf16.mxu0 0
      %272 = vmatpush1.bf16.msra.mxu0 0
      %273 = vmatprep.subr.bf16.mxu0 0
      %274 = vmatpush1.bf16.msra.mxu0 0
      %275 = vmatprep.subr.bf16.mxu0 0
      %276 = vmatpush1.bf16.msra.mxu0 0
      %277 = vmatprep.subr.bf16.mxu0 0
      %278 = vmatpush1.bf16.msra.mxu0 0
      %279 = vmatprep.subr.bf16.mxu0 0
      %280 = vmatpush1.bf16.msra.mxu0 0
      %281 = vmatprep.subr.bf16.mxu0 0
      %282 = vmatpush1.bf16.msra.mxu0 0
      %283 = vmatprep.subr.bf16.mxu0 0
      %284 = vmatpush1.bf16.msra.mxu0 0
      %285 = vmatprep.subr.bf16.mxu0 0
      %286 = vmatpush1.bf16.msra.mxu0 0
      %287 = vmatprep.subr.bf16.mxu0 0
      %288 = vmatpush1.bf16.msra.mxu0 0
      %289 = vmatprep.mubr.bf16.mxu0 0
      %290 = vmatmul.mubr.bf16.gmra.mrb[0].mxu0 %v255
      %v291 = vpop.f32.mrb[0].mxu0
      %v292 = vadd.f32 0.0, %v291
      %v293 = vpop.f32.mrb[0].mxu0
      %v294 = vpop.f32.mrb[0].mxu0
      %v295 = vpop.f32.mrb[0].mxu0
      %296 = vdwg.mxu0
      %297 = vst [vmem:[#allocation2] sm:$0x1] %v292
      %v298 = vld [vmem:[%s235] sm:$0x1]
      %s299 = scalar_lea.vmem %s220, 16
      %v300 = vld [vmem:[%s299] sm:$0xf]
      %v301 = vld [vmem:[%s299 + $0x4] sm:$0xf]
      %v302 = vld [vmem:[%s299 + $0x8] sm:$0xf]
      %v303 = vld [vmem:[%s299 + $0xc] sm:$0xf]
      %v306 = vunpack.c.l.s4 1983009808
      %v307 = vunpack.c.0.s8 %v306
      %v308 = vlaneseq
      %v309 = vshrl.u32 %v308, 7
      %v310 = vsub.s32 %v307, %v309
      %v311 = vrot.slane %v298, %v310
      %v313 = vshrl.u32 %v311, 16
      %v319 = vunpack.c.l.b16 %v300
      %v320 = vunpack.c.l.b16 %v301
      %v321 = vunpack.c.l.b16 %v302
      %v322 = vunpack.c.l.b16 %v303
      %v323 = vpack.c.b16 %v320, %v319
      %v324 = vpack.c.b16 %v322, %v321
      %v328 = vsel %vm253, %v313, 0
      %330 = vmatprep.subr.bf16.mxu0 0
      %331 = vmatpush1.bf16.msra.mxu0 %v323
      %332 = vmatprep.subr.bf16.mxu0 0
      %333 = vmatpush1.bf16.msra.mxu0 %v324
      %334 = vmatprep.subr.bf16.mxu0 0
      %335 = vmatpush1.bf16.msra.mxu0 0
      %336 = vmatprep.subr.bf16.mxu0 0
      %337 = vmatpush1.bf16.msra.mxu0 0
      %338 = vmatprep.subr.bf16.mxu0 0
      %339 = vmatpush1.bf16.msra.mxu0 0
      %340 = vmatprep.subr.bf16.mxu0 0
      %341 = vmatpush1.bf16.msra.mxu0 0
      %342 = vmatprep.subr.bf16.mxu0 0
      %343 = vmatpush1.bf16.msra.mxu0 0
      %344 = vmatprep.subr.bf16.mxu0 0
      %345 = vmatpush1.bf16.msra.mxu0 0
      %346 = vmatprep.subr.bf16.mxu0 0
      %347 = vmatpush1.bf16.msra.mxu0 0
      %348 = vmatprep.subr.bf16.mxu0 0
      %349 = vmatpush1.bf16.msra.mxu0 0
      %350 = vmatprep.subr.bf16.mxu0 0
      %351 = vmatpush1.bf16.msra.mxu0 0
      %352 = vmatprep.subr.bf16.mxu0 0
      %353 = vmatpush1.bf16.msra.mxu0 0
      %354 = vmatprep.subr.bf16.mxu0 0
      %355 = vmatpush1.bf16.msra.mxu0 0
      %356 = vmatprep.subr.bf16.mxu0 0
      %357 = vmatpush1.bf16.msra.mxu0 0
      %358 = vmatprep.subr.bf16.mxu0 0
      %359 = vmatpush1.bf16.msra.mxu0 0
      %360 = vmatprep.subr.bf16.mxu0 0
      %361 = vmatpush1.bf16.msra.mxu0 0
      %362 = vmatprep.mubr.bf16.mxu0 0
      %363 = vmatmul.mubr.bf16.gmra.mrb[0].mxu0 %v328
      %v364 = vpop.f32.mrb[0].mxu0
      %v365 = vadd.f32 0.0, %v364
      %v366 = vpop.f32.mrb[0].mxu0
      %v367 = vpop.f32.mrb[0].mxu0
      %v368 = vpop.f32.mrb[0].mxu0
      %369 = vdwg.mxu0
      %v370 = vld [vmem:[#allocation2] sm:$0x1]
      %v371 = vadd.f32 %v370, %v365
      %372 = vst [vmem:[#allocation2] sm:$0x1] %v371
      %v373 = vld [vmem:[%s235] sm:$0x2]
      %s374 = scalar_lea.vmem %s220, 32
      %v375 = vld [vmem:[%s374] sm:$0xf]
      %v376 = vld [vmem:[%s374 + $0x4] sm:$0xf]
      %v377 = vld [vmem:[%s374 + $0x8] sm:$0xf]
      %v378 = vld [vmem:[%s374 + $0xc] sm:$0xf]
      %v381 = vunpack.c.l.s4 1983009808
      %v382 = vunpack.c.0.s8 %v381
      %v383 = vlaneseq
      %v384 = vshrl.u32 %v383, 7
      %v385 = vsub.s32 %v382, %v384
      %v386 = vrot.slane %v373, %v385
      %v387 = vrot.slane %v386, 1
      %v392 = vunpack.c.l.b16 %v375
      %v393 = vunpack.c.l.b16 %v376
      %v394 = vunpack.c.l.b16 %v377
      %v395 = vunpack.c.l.b16 %v378
      %v396 = vpack.c.b16 %v393, %v392
      %v397 = vpack.c.b16 %v395, %v394
      %v401 = vsel %vm253, %v387, 0
      %403 = vmatprep.subr.bf16.mxu0 0
      %404 = vmatpush1.bf16.msra.mxu0 %v396
      %405 = vmatprep.subr.bf16.mxu0 0
      %406 = vmatpush1.bf16.msra.mxu0 %v397
      %407 = vmatprep.subr.bf16.mxu0 0
      %408 = vmatpush1.bf16.msra.mxu0 0
      %409 = vmatprep.subr.bf16.mxu0 0
      %410 = vmatpush1.bf16.msra.mxu0 0
      %411 = vmatprep.subr.bf16.mxu0 0
      %412 = vmatpush1.bf16.msra.mxu0 0
      %413 = vmatprep.subr.bf16.mxu0 0
      %414 = vmatpush1.bf16.msra.mxu0 0
      %415 = vmatprep.subr.bf16.mxu0 0
      %416 = vmatpush1.bf16.msra.mxu0 0
      %417 = vmatprep.subr.bf16.mxu0 0
      %418 = vmatpush1.bf16.msra.mxu0 0
      %419 = vmatprep.subr.bf16.mxu0 0
      %420 = vmatpush1.bf16.msra.mxu0 0
      %421 = vmatprep.subr.bf16.mxu0 0
      %422 = vmatpush1.bf16.msra.mxu0 0
      %423 = vmatprep.subr.bf16.mxu0 0
      %424 = vmatpush1.bf16.msra.mxu0 0
      %425 = vmatprep.subr.bf16.mxu0 0
      %426 = vmatpush1.bf16.msra.mxu0 0
      %427 = vmatprep.subr.bf16.mxu0 0
      %428 = vmatpush1.bf16.msra.mxu0 0
      %429 = vmatprep.subr.bf16.mxu0 0
      %430 = vmatpush1.bf16.msra.mxu0 0
      %431 = vmatprep.subr.bf16.mxu0 0
      %432 = vmatpush1.bf16.msra.mxu0 0
      %433 = vmatprep.subr.bf16.mxu0 0
      %434 = vmatpush1.bf16.msra.mxu0 0
      %435 = vmatprep.mubr.bf16.mxu0 0
      %436 = vmatmul.mubr.bf16.gmra.mrb[0].mxu0 %v401
      %v437 = vpop.f32.mrb[0].mxu0
      %v438 = vadd.f32 0.0, %v437
      %v439 = vpop.f32.mrb[0].mxu0
      %v440 = vpop.f32.mrb[0].mxu0
      %v441 = vpop.f32.mrb[0].mxu0
      %442 = vdwg.mxu0
      %v443 = vld [vmem:[#allocation2] sm:$0x1]
      %v444 = vadd.f32 %v443, %v438
      %445 = vst [vmem:[#allocation2] sm:$0x1] %v444
      %v446 = vld [vmem:[%s235] sm:$0x2]
      %s447 = scalar_lea.vmem %s220, 48
      %v448 = vld [vmem:[%s447] sm:$0xf]
      %v449 = vld [vmem:[%s447 + $0x4] sm:$0xf]
      %v450 = vld [vmem:[%s447 + $0x8] sm:$0xf]
      %v451 = vld [vmem:[%s447 + $0xc] sm:$0xf]
      %v454 = vunpack.c.l.s4 1983009808
      %v455 = vunpack.c.0.s8 %v454
      %v456 = vlaneseq
      %v457 = vshrl.u32 %v456, 7
      %v458 = vsub.s32 %v455, %v457
      %v459 = vrot.slane %v446, %v458
      %v461 = vshrl.u32 %v459, 16
      %v463 = vrot.slane %v461, 1
      %v468 = vunpack.c.l.b16 %v448
      %v469 = vunpack.c.l.b16 %v449
      %v470 = vunpack.c.l.b16 %v450
      %v471 = vunpack.c.l.b16 %v451
      %v472 = vpack.c.b16 %v469, %v468
      %v473 = vpack.c.b16 %v471, %v470
      %v477 = vsel %vm253, %v463, 0
      %479 = vmatprep.subr.bf16.mxu0 0
      %480 = vmatpush1.bf16.msra.mxu0 %v472
      %481 = vmatprep.subr.bf16.mxu0 0
      %482 = vmatpush1.bf16.msra.mxu0 %v473
      %483 = vmatprep.subr.bf16.mxu0 0
      %484 = vmatpush1.bf16.msra.mxu0 0
      %485 = vmatprep.subr.bf16.mxu0 0
      %486 = vmatpush1.bf16.msra.mxu0 0
      %487 = vmatprep.subr.bf16.mxu0 0
      %488 = vmatpush1.bf16.msra.mxu0 0
      %489 = vmatprep.subr.bf16.mxu0 0
      %490 = vmatpush1.bf16.msra.mxu0 0
      %491 = vmatprep.subr.bf16.mxu0 0
      %492 = vmatpush1.bf16.msra.mxu0 0
      %493 = vmatprep.subr.bf16.mxu0 0
      %494 = vmatpush1.bf16.msra.mxu0 0
      %495 = vmatprep.subr.bf16.mxu0 0
      %496 = vmatpush1.bf16.msra.mxu0 0
      %497 = vmatprep.subr.bf16.mxu0 0
      %498 = vmatpush1.bf16.msra.mxu0 0
      %499 = vmatprep.subr.bf16.mxu0 0
      %500 = vmatpush1.bf16.msra.mxu0 0
      %501 = vmatprep.subr.bf16.mxu0 0
      %502 = vmatpush1.bf16.msra.mxu0 0
      %503 = vmatprep.subr.bf16.mxu0 0
      %504 = vmatpush1.bf16.msra.mxu0 0
      %505 = vmatprep.subr.bf16.mxu0 0
      %506 = vmatpush1.bf16.msra.mxu0 0
      %507 = vmatprep.subr.bf16.mxu0 0
      %508 = vmatpush1.bf16.msra.mxu0 0
      %509 = vmatprep.subr.bf16.mxu0 0
      %510 = vmatpush1.bf16.msra.mxu0 0
      %511 = vmatprep.mubr.bf16.mxu0 0
      %512 = vmatmul.mubr.bf16.gmra.mrb[0].mxu0 %v477
      %v513 = vpop.f32.mrb[0].mxu0
      %v514 = vadd.f32 0.0, %v513
      %v515 = vpop.f32.mrb[0].mxu0
      %v516 = vpop.f32.mrb[0].mxu0
      %v517 = vpop.f32.mrb[0].mxu0
      %518 = vdwg.mxu0
      %v519 = vld [vmem:[#allocation2] sm:$0x1]
      %v520 = vadd.f32 %v519, %v514
      %521 = vst [vmem:[#allocation2] sm:$0x1] %v520
      %s522 = sadd.s32 %s21, 1
      %s523 = smul.addr %s522, 2
      %s524 = scalar_lea.vmem %s216, %s523
      %v525 = vld [vmem:[%s524] sm:$0x1]
      %s526 = scalar_lea.vmem %s220, 64
      %v527 = vld [vmem:[%s526] sm:$0xf]
      %v528 = vld [vmem:[%s526 + $0x4] sm:$0xf]
      %v529 = vld [vmem:[%s526 + $0x8] sm:$0xf]
      %v530 = vld [vmem:[%s526 + $0xc] sm:$0xf]
      %v535 = vunpack.c.l.b16 %v527
      %v536 = vunpack.c.l.b16 %v528
      %v537 = vunpack.c.l.b16 %v529
      %v538 = vunpack.c.l.b16 %v530
      %v539 = vpack.c.b16 %v536, %v535
      %v540 = vpack.c.b16 %v538, %v537
      %v544 = vsel %vm253, %v525, 0
      %546 = vmatprep.subr.bf16.mxu0 0
      %547 = vmatpush1.bf16.msra.mxu0 %v539
      %548 = vmatprep.subr.bf16.mxu0 0
      %549 = vmatpush1.bf16.msra.mxu0 %v540
      %550 = vmatprep.subr.bf16.mxu0 0
      %551 = vmatpush1.bf16.msra.mxu0 0
      %552 = vmatprep.subr.bf16.mxu0 0
      %553 = vmatpush1.bf16.msra.mxu0 0
      %554 = vmatprep.subr.bf16.mxu0 0
      %555 = vmatpush1.bf16.msra.mxu0 0
      %556 = vmatprep.subr.bf16.mxu0 0
      %557 = vmatpush1.bf16.msra.mxu0 0
      %558 = vmatprep.subr.bf16.mxu0 0
      %559 = vmatpush1.bf16.msra.mxu0 0
      %560 = vmatprep.subr.bf16.mxu0 0
      %561 = vmatpush1.bf16.msra.mxu0 0
      %562 = vmatprep.subr.bf16.mxu0 0
      %563 = vmatpush1.bf16.msra.mxu0 0
      %564 = vmatprep.subr.bf16.mxu0 0
      %565 = vmatpush1.bf16.msra.mxu0 0
      %566 = vmatprep.subr.bf16.mxu0 0
      %567 = vmatpush1.bf16.msra.mxu0 0
      %568 = vmatprep.subr.bf16.mxu0 0
      %569 = vmatpush1.bf16.msra.mxu0 0
      %570 = vmatprep.subr.bf16.mxu0 0
      %571 = vmatpush1.bf16.msra.mxu0 0
      %572 = vmatprep.subr.bf16.mxu0 0
      %573 = vmatpush1.bf16.msra.mxu0 0
      %574 = vmatprep.subr.bf16.mxu0 0
      %575 = vmatpush1.bf16.msra.mxu0 0
      %576 = vmatprep.subr.bf16.mxu0 0
      %577 = vmatpush1.bf16.msra.mxu0 0
      %578 = vmatprep.mubr.bf16.mxu0 0
      %579 = vmatmul.mubr.bf16.gmra.mrb[0].mxu0 %v544
      %v580 = vpop.f32.mrb[0].mxu0
      %v581 = vadd.f32 0.0, %v580
      %v582 = vpop.f32.mrb[0].mxu0
      %v583 = vpop.f32.mrb[0].mxu0
      %v584 = vpop.f32.mrb[0].mxu0
      %585 = vdwg.mxu0
      %v586 = vld [vmem:[#allocation2] sm:$0x1]
      %v587 = vadd.f32 %v586, %v581
      %588 = vst [vmem:[#allocation2] sm:$0x1] %v587
      %v589 = vld [vmem:[%s524] sm:$0x1]
      %s590 = scalar_lea.vmem %s220, 80
      %v591 = vld [vmem:[%s590] sm:$0xf]
      %v592 = vld [vmem:[%s590 + $0x4] sm:$0xf]
      %v593 = vld [vmem:[%s590 + $0x8] sm:$0xf]
      %v594 = vld [vmem:[%s590 + $0xc] sm:$0xf]
      %v597 = vunpack.c.l.s4 1983009808
      %v598 = vunpack.c.0.s8 %v597
      %v599 = vlaneseq
      %v600 = vshrl.u32 %v599, 7
      %v601 = vsub.s32 %v598, %v600
      %v602 = vrot.slane %v589, %v601
      %v604 = vshrl.u32 %v602, 16
      %v610 = vunpack.c.l.b16 %v591
      %v611 = vunpack.c.l.b16 %v592
      %v612 = vunpack.c.l.b16 %v593
      %v613 = vunpack.c.l.b16 %v594
      %v614 = vpack.c.b16 %v611, %v610
      %v615 = vpack.c.b16 %v613, %v612
      %v619 = vsel %vm253, %v604, 0
      %621 = vmatprep.subr.bf16.mxu0 0
      %622 = vmatpush1.bf16.msra.mxu0 %v614
      %623 = vmatprep.subr.bf16.mxu0 0
      %624 = vmatpush1.bf16.msra.mxu0 %v615
      %625 = vmatprep.subr.bf16.mxu0 0
      %626 = vmatpush1.bf16.msra.mxu0 0
      %627 = vmatprep.subr.bf16.mxu0 0
      %628 = vmatpush1.bf16.msra.mxu0 0
      %629 = vmatprep.subr.bf16.mxu0 0
      %630 = vmatpush1.bf16.msra.mxu0 0
      %631 = vmatprep.subr.bf16.mxu0 0
      %632 = vmatpush1.bf16.msra.mxu0 0
      %633 = vmatprep.subr.bf16.mxu0 0
      %634 = vmatpush1.bf16.msra.mxu0 0
      %635 = vmatprep.subr.bf16.mxu0 0
      %636 = vmatpush1.bf16.msra.mxu0 0
      %637 = vmatprep.subr.bf16.mxu0 0
      %638 = vmatpush1.bf16.msra.mxu0 0
      %639 = vmatprep.subr.bf16.mxu0 0
      %640 = vmatpush1.bf16.msra.mxu0 0
      %641 = vmatprep.subr.bf16.mxu0 0
      %642 = vmatpush1.bf16.msra.mxu0 0
      %643 = vmatprep.subr.bf16.mxu0 0
      %644 = vmatpush1.bf16.msra.mxu0 0
      %645 = vmatprep.subr.bf16.mxu0 0
      %646 = vmatpush1.bf16.msra.mxu0 0
      %647 = vmatprep.subr.bf16.mxu0 0
      %648 = vmatpush1.bf16.msra.mxu0 0
      %649 = vmatprep.subr.bf16.mxu0 0
      %650 = vmatpush1.bf16.msra.mxu0 0
      %651 = vmatprep.subr.bf16.mxu0 0
      %652 = vmatpush1.bf16.msra.mxu0 0
      %653 = vmatprep.mubr.bf16.mxu0 0
      %654 = vmatmul.mubr.bf16.gmra.mrb[0].mxu0 %v619
      %v655 = vpop.f32.mrb[0].mxu0
      %v656 = vadd.f32 0.0, %v655
      %v657 = vpop.f32.mrb[0].mxu0
      %v658 = vpop.f32.mrb[0].mxu0
      %v659 = vpop.f32.mrb[0].mxu0
      %660 = vdwg.mxu0
      %v661 = vld [vmem:[#allocation2] sm:$0x1]
      %v662 = vadd.f32 %v661, %v656
      %663 = vst [vmem:[#allocation2] sm:$0x1] %v662
      %v664 = vld [vmem:[%s524] sm:$0x2]
      %s665 = scalar_lea.vmem %s220, 96
      %v666 = vld [vmem:[%s665] sm:$0xf]
      %v667 = vld [vmem:[%s665 + $0x4] sm:$0xf]
      %v668 = vld [vmem:[%s665 + $0x8] sm:$0xf]
      %v669 = vld [vmem:[%s665 + $0xc] sm:$0xf]
      %v672 = vunpack.c.l.s4 1983009808
      %v673 = vunpack.c.0.s8 %v672
      %v674 = vlaneseq
      %v675 = vshrl.u32 %v674, 7
      %v676 = vsub.s32 %v673, %v675
      %v677 = vrot.slane %v664, %v676
      %v678 = vrot.slane %v677, 1
      %v683 = vunpack.c.l.b16 %v666
      %v684 = vunpack.c.l.b16 %v667
      %v685 = vunpack.c.l.b16 %v668
      %v686 = vunpack.c.l.b16 %v669
      %v687 = vpack.c.b16 %v684, %v683
      %v688 = vpack.c.b16 %v686, %v685
      %v692 = vsel %vm253, %v678, 0
      %694 = vmatprep.subr.bf16.mxu0 0
      %695 = vmatpush1.bf16.msra.mxu0 %v687
      %696 = vmatprep.subr.bf16.mxu0 0
      %697 = vmatpush1.bf16.msra.mxu0 %v688
      %698 = vmatprep.subr.bf16.mxu0 0
      %699 = vmatpush1.bf16.msra.mxu0 0
      %700 = vmatprep.subr.bf16.mxu0 0
      %701 = vmatpush1.bf16.msra.mxu0 0
      %702 = vmatprep.subr.bf16.mxu0 0
      %703 = vmatpush1.bf16.msra.mxu0 0
      %704 = vmatprep.subr.bf16.mxu0 0
      %705 = vmatpush1.bf16.msra.mxu0 0
      %706 = vmatprep.subr.bf16.mxu0 0
      %707 = vmatpush1.bf16.msra.mxu0 0
      %708 = vmatprep.subr.bf16.mxu0 0
      %709 = vmatpush1.bf16.msra.mxu0 0
      %710 = vmatprep.subr.bf16.mxu0 0
      %711 = vmatpush1.bf16.msra.mxu0 0
      %712 = vmatprep.subr.bf16.mxu0 0
      %713 = vmatpush1.bf16.msra.mxu0 0
      %714 = vmatprep.subr.bf16.mxu0 0
      %715 = vmatpush1.bf16.msra.mxu0 0
      %716 = vmatprep.subr.bf16.mxu0 0
      %717 = vmatpush1.bf16.msra.mxu0 0
      %718 = vmatprep.subr.bf16.mxu0 0
      %719 = vmatpush1.bf16.msra.mxu0 0
      %720 = vmatprep.subr.bf16.mxu0 0
      %721 = vmatpush1.bf16.msra.mxu0 0
      %722 = vmatprep.subr.bf16.mxu0 0
      %723 = vmatpush1.bf16.msra.mxu0 0
      %724 = vmatprep.subr.bf16.mxu0 0
      %725 = vmatpush1.bf16.msra.mxu0 0
      %726 = vmatprep.mubr.bf16.mxu0 0
      %727 = vmatmul.mubr.bf16.gmra.mrb[0].mxu0 %v692
      %v728 = vpop.f32.mrb[0].mxu0
      %v729 = vadd.f32 0.0, %v728
      %v730 = vpop.f32.mrb[0].mxu0
      %v731 = vpop.f32.mrb[0].mxu0
      %v732 = vpop.f32.mrb[0].mxu0
      %733 = vdwg.mxu0
      %v734 = vld [vmem:[#allocation2] sm:$0x1]
      %v735 = vadd.f32 %v734, %v729
      %736 = vst [vmem:[#allocation2] sm:$0x1] %v735
      %v737 = vld [vmem:[%s524] sm:$0x2]
      %s738 = scalar_lea.vmem %s220, 112
      %v739 = vld [vmem:[%s738] sm:$0xf]
      %v740 = vld [vmem:[%s738 + $0x4] sm:$0xf]
      %v741 = vld [vmem:[%s738 + $0x8] sm:$0xf]
      %v742 = vld [vmem:[%s738 + $0xc] sm:$0xf]
      %v745 = vunpack.c.l.s4 1983009808
      %v746 = vunpack.c.0.s8 %v745
      %v747 = vlaneseq
      %v748 = vshrl.u32 %v747, 7
      %v749 = vsub.s32 %v746, %v748
      %v750 = vrot.slane %v737, %v749
      %v752 = vshrl.u32 %v750, 16
      %v754 = vrot.slane %v752, 1
      %v759 = vunpack.c.l.b16 %v739
      %v760 = vunpack.c.l.b16 %v740
      %v761 = vunpack.c.l.b16 %v741
      %v762 = vunpack.c.l.b16 %v742
      %v763 = vpack.c.b16 %v760, %v759
      %v764 = vpack.c.b16 %v762, %v761
      %v768 = vsel %vm253, %v754, 0
      %770 = vmatprep.subr.bf16.mxu0 0
      %771 = vmatpush1.bf16.msra.mxu0 %v763
      %772 = vmatprep.subr.bf16.mxu0 0
      %773 = vmatpush1.bf16.msra.mxu0 %v764
      %774 = vmatprep.subr.bf16.mxu0 0
      %775 = vmatpush1.bf16.msra.mxu0 0
      %776 = vmatprep.subr.bf16.mxu0 0
      %777 = vmatpush1.bf16.msra.mxu0 0
      %778 = vmatprep.subr.bf16.mxu0 0
      %779 = vmatpush1.bf16.msra.mxu0 0
      %780 = vmatprep.subr.bf16.mxu0 0
      %781 = vmatpush1.bf16.msra.mxu0 0
      %782 = vmatprep.subr.bf16.mxu0 0
      %783 = vmatpush1.bf16.msra.mxu0 0
      %784 = vmatprep.subr.bf16.mxu0 0
      %785 = vmatpush1.bf16.msra.mxu0 0
      %786 = vmatprep.subr.bf16.mxu0 0
      %787 = vmatpush1.bf16.msra.mxu0 0
      %788 = vmatprep.subr.bf16.mxu0 0
      %789 = vmatpush1.bf16.msra.mxu0 0
      %790 = vmatprep.subr.bf16.mxu0 0
      %791 = vmatpush1.bf16.msra.mxu0 0
      %792 = vmatprep.subr.bf16.mxu0 0
      %793 = vmatpush1.bf16.msra.mxu0 0
      %794 = vmatprep.subr.bf16.mxu0 0
      %795 = vmatpush1.bf16.msra.mxu0 0
      %796 = vmatprep.subr.bf16.mxu0 0
      %797 = vmatpush1.bf16.msra.mxu0 0
      %798 = vmatprep.subr.bf16.mxu0 0
      %799 = vmatpush1.bf16.msra.mxu0 0
      %800 = vmatprep.subr.bf16.mxu0 0
      %801 = vmatpush1.bf16.msra.mxu0 0
      %802 = vmatprep.mubr.bf16.mxu0 0
      %803 = vmatmul.mubr.bf16.gmra.mrb[0].mxu0 %v768
      %v804 = vpop.f32.mrb[0].mxu0
      %v805 = vadd.f32 0.0, %v804
      %v806 = vpop.f32.mrb[0].mxu0
      %v807 = vpop.f32.mrb[0].mxu0
      %v808 = vpop.f32.mrb[0].mxu0
      %809 = vdwg.mxu0
      %v810 = vld [vmem:[#allocation2] sm:$0x1]
      %v811 = vadd.f32 %v810, %v805
      %812 = vst [vmem:[#allocation2] sm:$0x1] %v811
      %s813 = sadd.s32 %s21, 2
      %s814 = smul.addr %s813, 2
      %s815 = scalar_lea.vmem %s216, %s814
      %v816 = vld [vmem:[%s815] sm:$0x1]
      %s817 = scalar_lea.vmem %s220, 128
      %v818 = vld [vmem:[%s817] sm:$0xf]
      %v819 = vld [vmem:[%s817 + $0x4] sm:$0xf]
      %v820 = vld [vmem:[%s817 + $0x8] sm:$0xf]
      %v821 = vld [vmem:[%s817 + $0xc] sm:$0xf]
      %v826 = vunpack.c.l.b16 %v818
      %v827 = vunpack.c.l.b16 %v819
      %v828 = vunpack.c.l.b16 %v820
      %v829 = vunpack.c.l.b16 %v821
      %v830 = vpack.c.b16 %v827, %v826
      %v831 = vpack.c.b16 %v829, %v828
      %v835 = vsel %vm253, %v816, 0
      %837 = vmatprep.subr.bf16.mxu0 0
      %838 = vmatpush1.bf16.msra.mxu0 %v830
      %839 = vmatprep.subr.bf16.mxu0 0
      %840 = vmatpush1.bf16.msra.mxu0 %v831
      %841 = vmatprep.subr.bf16.mxu0 0
      %842 = vmatpush1.bf16.msra.mxu0 0
      %843 = vmatprep.subr.bf16.mxu0 0
      %844 = vmatpush1.bf16.msra.mxu0 0
      %845 = vmatprep.subr.bf16.mxu0 0
      %846 = vmatpush1.bf16.msra.mxu0 0
      %847 = vmatprep.subr.bf16.mxu0 0
      %848 = vmatpush1.bf16.msra.mxu0 0
      %849 = vmatprep.subr.bf16.mxu0 0
      %850 = vmatpush1.bf16.msra.mxu0 0
      %851 = vmatprep.subr.bf16.mxu0 0
      %852 = vmatpush1.bf16.msra.mxu0 0
      %853 = vmatprep.subr.bf16.mxu0 0
      %854 = vmatpush1.bf16.msra.mxu0 0
      %855 = vmatprep.subr.bf16.mxu0 0
      %856 = vmatpush1.bf16.msra.mxu0 0
      %857 = vmatprep.subr.bf16.mxu0 0
      %858 = vmatpush1.bf16.msra.mxu0 0
      %859 = vmatprep.subr.bf16.mxu0 0
      %860 = vmatpush1.bf16.msra.mxu0 0
      %861 = vmatprep.subr.bf16.mxu0 0
      %862 = vmatpush1.bf16.msra.mxu0 0
      %863 = vmatprep.subr.bf16.mxu0 0
      %864 = vmatpush1.bf16.msra.mxu0 0
      %865 = vmatprep.subr.bf16.mxu0 0
      %866 = vmatpush1.bf16.msra.mxu0 0
      %867 = vmatprep.subr.bf16.mxu0 0
      %868 = vmatpush1.bf16.msra.mxu0 0
      %869 = vmatprep.mubr.bf16.mxu0 0
      %870 = vmatmul.mubr.bf16.gmra.mrb[0].mxu0 %v835
      %v871 = vpop.f32.mrb[0].mxu0
      %v872 = vadd.f32 0.0, %v871
      %v873 = vpop.f32.mrb[0].mxu0
      %v874 = vpop.f32.mrb[0].mxu0
      %v875 = vpop.f32.mrb[0].mxu0
      %876 = vdwg.mxu0
      %v877 = vld [vmem:[#allocation2] sm:$0x1]
      %v878 = vadd.f32 %v877, %v872
      %879 = vst [vmem:[#allocation2] sm:$0x1] %v878
      %v880 = vld [vmem:[%s815] sm:$0x1]
      %s881 = scalar_lea.vmem %s220, 144
      %v882 = vld [vmem:[%s881] sm:$0xf]
      %v883 = vld [vmem:[%s881 + $0x4] sm:$0xf]
      %v884 = vld [vmem:[%s881 + $0x8] sm:$0xf]
      %v885 = vld [vmem:[%s881 + $0xc] sm:$0xf]
      %v888 = vunpack.c.l.s4 1983009808
      %v889 = vunpack.c.0.s8 %v888
      %v890 = vlaneseq
      %v891 = vshrl.u32 %v890, 7
      %v892 = vsub.s32 %v889, %v891
      %v893 = vrot.slane %v880, %v892
      %v895 = vshrl.u32 %v893, 16
      %v901 = vunpack.c.l.b16 %v882
      %v902 = vunpack.c.l.b16 %v883
      %v903 = vunpack.c.l.b16 %v884
      %v904 = vunpack.c.l.b16 %v885
      %v905 = vpack.c.b16 %v902, %v901
      %v906 = vpack.c.b16 %v904, %v903
      %v910 = vsel %vm253, %v895, 0
      %912 = vmatprep.subr.bf16.mxu0 0
      %913 = vmatpush1.bf16.msra.mxu0 %v905
      %914 = vmatprep.subr.bf16.mxu0 0
      %915 = vmatpush1.bf16.msra.mxu0 %v906
      %916 = vmatprep.subr.bf16.mxu0 0
      %917 = vmatpush1.bf16.msra.mxu0 0
      %918 = vmatprep.subr.bf16.mxu0 0
      %919 = vmatpush1.bf16.msra.mxu0 0
      %920 = vmatprep.subr.bf16.mxu0 0
      %921 = vmatpush1.bf16.msra.mxu0 0
      %922 = vmatprep.subr.bf16.mxu0 0
      %923 = vmatpush1.bf16.msra.mxu0 0
      %924 = vmatprep.subr.bf16.mxu0 0
      %925 = vmatpush1.bf16.msra.mxu0 0
      %926 = vmatprep.subr.bf16.mxu0 0
      %927 = vmatpush1.bf16.msra.mxu0 0
      %928 = vmatprep.subr.bf16.mxu0 0
      %929 = vmatpush1.bf16.msra.mxu0 0
      %930 = vmatprep.subr.bf16.mxu0 0
      %931 = vmatpush1.bf16.msra.mxu0 0
      %932 = vmatprep.subr.bf16.mxu0 0
      %933 = vmatpush1.bf16.msra.mxu0 0
      %934 = vmatprep.subr.bf16.mxu0 0
      %935 = vmatpush1.bf16.msra.mxu0 0
      %936 = vmatprep.subr.bf16.mxu0 0
      %937 = vmatpush1.bf16.msra.mxu0 0
      %938 = vmatprep.subr.bf16.mxu0 0
      %939 = vmatpush1.bf16.msra.mxu0 0
      %940 = vmatprep.subr.bf16.mxu0 0
      %941 = vmatpush1.bf16.msra.mxu0 0
      %942 = vmatprep.subr.bf16.mxu0 0
      %943 = vmatpush1.bf16.msra.mxu0 0
      %944 = vmatprep.mubr.bf16.mxu0 0
      %945 = vmatmul.mubr.bf16.gmra.mrb[0].mxu0 %v910
      %v946 = vpop.f32.mrb[0].mxu0
      %v947 = vadd.f32 0.0, %v946
      %v948 = vpop.f32.mrb[0].mxu0
      %v949 = vpop.f32.mrb[0].mxu0
      %v950 = vpop.f32.mrb[0].mxu0
      %951 = vdwg.mxu0
      %v952 = vld [vmem:[#allocation2] sm:$0x1]
      %v953 = vadd.f32 %v952, %v947
      %954 = vst [vmem:[#allocation2] sm:$0x1] %v953
      %v955 = vld [vmem:[%s815] sm:$0x2]
      %s956 = scalar_lea.vmem %s220, 160
      %v957 = vld [vmem:[%s956] sm:$0xf]
      %v958 = vld [vmem:[%s956 + $0x4] sm:$0xf]
      %v959 = vld [vmem:[%s956 + $0x8] sm:$0xf]
      %v960 = vld [vmem:[%s956 + $0xc] sm:$0xf]
      %v963 = vunpack.c.l.s4 1983009808
      %v964 = vunpack.c.0.s8 %v963
      %v965 = vlaneseq
      %v966 = vshrl.u32 %v965, 7
      %v967 = vsub.s32 %v964, %v966
      %v968 = vrot.slane %v955, %v967
      %v969 = vrot.slane %v968, 1
      %v974 = vunpack.c.l.b16 %v957
      %v975 = vunpack.c.l.b16 %v958
      %v976 = vunpack.c.l.b16 %v959
      %v977 = vunpack.c.l.b16 %v960
      %v978 = vpack.c.b16 %v975, %v974
      %v979 = vpack.c.b16 %v977, %v976
      %v983 = vsel %vm253, %v969, 0
      %985 = vmatprep.subr.bf16.mxu0 0
      %986 = vmatpush1.bf16.msra.mxu0 %v978
      %987 = vmatprep.subr.bf16.mxu0 0
      %988 = vmatpush1.bf16.msra.mxu0 %v979
      %989 = vmatprep.subr.bf16.mxu0 0
      %990 = vmatpush1.bf16.msra.mxu0 0
      %991 = vmatprep.subr.bf16.mxu0 0
      %992 = vmatpush1.bf16.msra.mxu0 0
      %993 = vmatprep.subr.bf16.mxu0 0
      %994 = vmatpush1.bf16.msra.mxu0 0
      %995 = vmatprep.subr.bf16.mxu0 0
      %996 = vmatpush1.bf16.msra.mxu0 0
      %997 = vmatprep.subr.bf16.mxu0 0
      %998 = vmatpush1.bf16.msra.mxu0 0
      %999 = vmatprep.subr.bf16.mxu0 0
      %1000 = vmatpush1.bf16.msra.mxu0 0
      %1001 = vmatprep.subr.bf16.mxu0 0
      %1002 = vmatpush1.bf16.msra.mxu0 0
      %1003 = vmatprep.subr.bf16.mxu0 0
      %1004 = vmatpush1.bf16.msra.mxu0 0
      %1005 = vmatprep.subr.bf16.mxu0 0
      %1006 = vmatpush1.bf16.msra.mxu0 0
      %1007 = vmatprep.subr.bf16.mxu0 0
      %1008 = vmatpush1.bf16.msra.mxu0 0
      %1009 = vmatprep.subr.bf16.mxu0 0
      %1010 = vmatpush1.bf16.msra.mxu0 0
      %1011 = vmatprep.subr.bf16.mxu0 0
      %1012 = vmatpush1.bf16.msra.mxu0 0
      %1013 = vmatprep.subr.bf16.mxu0 0
      %1014 = vmatpush1.bf16.msra.mxu0 0
      %1015 = vmatprep.subr.bf16.mxu0 0
      %1016 = vmatpush1.bf16.msra.mxu0 0
      %1017 = vmatprep.mubr.bf16.mxu0 0
      %1018 = vmatmul.mubr.bf16.gmra.mrb[0].mxu0 %v983
      %v1019 = vpop.f32.mrb[0].mxu0
      %v1020 = vadd.f32 0.0, %v1019
      %v1021 = vpop.f32.mrb[0].mxu0
      %v1022 = vpop.f32.mrb[0].mxu0
      %v1023 = vpop.f32.mrb[0].mxu0
      %1024 = vdwg.mxu0
      %v1025 = vld [vmem:[#allocation2] sm:$0x1]
      %v1026 = vadd.f32 %v1025, %v1020
      %1027 = vst [vmem:[#allocation2] sm:$0x1] %v1026
      %v1028 = vld [vmem:[%s815] sm:$0x2]
      %s1029 = scalar_lea.vmem %s220, 176
      %v1030 = vld [vmem:[%s1029] sm:$0xf]
      %v1031 = vld [vmem:[%s1029 + $0x4] sm:$0xf]
      %v1032 = vld [vmem:[%s1029 + $0x8] sm:$0xf]
      %v1033 = vld [vmem:[%s1029 + $0xc] sm:$0xf]
      %v1036 = vunpack.c.l.s4 1983009808
      %v1037 = vunpack.c.0.s8 %v1036
      %v1038 = vlaneseq
      %v1039 = vshrl.u32 %v1038, 7
      %v1040 = vsub.s32 %v1037, %v1039
      %v1041 = vrot.slane %v1028, %v1040
      %v1043 = vshrl.u32 %v1041, 16
      %v1045 = vrot.slane %v1043, 1
      %v1050 = vunpack.c.l.b16 %v1030
      %v1051 = vunpack.c.l.b16 %v1031
      %v1052 = vunpack.c.l.b16 %v1032
      %v1053 = vunpack.c.l.b16 %v1033
      %v1054 = vpack.c.b16 %v1051, %v1050
      %v1055 = vpack.c.b16 %v1053, %v1052
      %v1059 = vsel %vm253, %v1045, 0
      %1061 = vmatprep.subr.bf16.mxu0 0
      %1062 = vmatpush1.bf16.msra.mxu0 %v1054
      %1063 = vmatprep.subr.bf16.mxu0 0
      %1064 = vmatpush1.bf16.msra.mxu0 %v1055
      %1065 = vmatprep.subr.bf16.mxu0 0
      %1066 = vmatpush1.bf16.msra.mxu0 0
      %1067 = vmatprep.subr.bf16.mxu0 0
      %1068 = vmatpush1.bf16.msra.mxu0 0
      %1069 = vmatprep.subr.bf16.mxu0 0
      %1070 = vmatpush1.bf16.msra.mxu0 0
      %1071 = vmatprep.subr.bf16.mxu0 0
      %1072 = vmatpush1.bf16.msra.mxu0 0
      %1073 = vmatprep.subr.bf16.mxu0 0
      %1074 = vmatpush1.bf16.msra.mxu0 0
      %1075 = vmatprep.subr.bf16.mxu0 0
      %1076 = vmatpush1.bf16.msra.mxu0 0
      %1077 = vmatprep.subr.bf16.mxu0 0
      %1078 = vmatpush1.bf16.msra.mxu0 0
      %1079 = vmatprep.subr.bf16.mxu0 0
      %1080 = vmatpush1.bf16.msra.mxu0 0
      %1081 = vmatprep.subr.bf16.mxu0 0
      %1082 = vmatpush1.bf16.msra.mxu0 0
      %1083 = vmatprep.subr.bf16.mxu0 0
      %1084 = vmatpush1.bf16.msra.mxu0 0
      %1085 = vmatprep.subr.bf16.mxu0 0
      %1086 = vmatpush1.bf16.msra.mxu0 0
      %1087 = vmatprep.subr.bf16.mxu0 0
      %1088 = vmatpush1.bf16.msra.mxu0 0
      %1089 = vmatprep.subr.bf16.mxu0 0
      %1090 = vmatpush1.bf16.msra.mxu0 0
      %1091 = vmatprep.subr.bf16.mxu0 0
      %1092 = vmatpush1.bf16.msra.mxu0 0
      %1093 = vmatprep.mubr.bf16.mxu0 0
      %1094 = vmatmul.mubr.bf16.gmra.mrb[0].mxu0 %v1059
      %v1095 = vpop.f32.mrb[0].mxu0
      %v1096 = vadd.f32 0.0, %v1095
      %v1097 = vpop.f32.mrb[0].mxu0
      %v1098 = vpop.f32.mrb[0].mxu0
      %v1099 = vpop.f32.mrb[0].mxu0
      %1100 = vdwg.mxu0
      %v1101 = vld [vmem:[#allocation2] sm:$0x1]
      %v1102 = vadd.f32 %v1101, %v1096
      %1103 = vst [vmem:[#allocation2] sm:$0x1] %v1102
      %s1104 = sadd.s32 %s21, 3
      %s1105 = smul.addr %s1104, 2
      %s1106 = scalar_lea.vmem %s216, %s1105
      %v1107 = vld [vmem:[%s1106] sm:$0x1]
      %s1108 = scalar_lea.vmem %s220, 192
      %v1109 = vld [vmem:[%s1108] sm:$0xf]
      %v1110 = vld [vmem:[%s1108 + $0x4] sm:$0xf]
      %v1111 = vld [vmem:[%s1108 + $0x8] sm:$0xf]
      %v1112 = vld [vmem:[%s1108 + $0xc] sm:$0xf]
      %v1117 = vunpack.c.l.b16 %v1109
      %v1118 = vunpack.c.l.b16 %v1110
      %v1119 = vunpack.c.l.b16 %v1111
      %v1120 = vunpack.c.l.b16 %v1112
      %v1121 = vpack.c.b16 %v1118, %v1117
      %v1122 = vpack.c.b16 %v1120, %v1119
      %v1126 = vsel %vm253, %v1107, 0
      %1128 = vmatprep.subr.bf16.mxu0 0
      %1129 = vmatpush1.bf16.msra.mxu0 %v1121
      %1130 = vmatprep.subr.bf16.mxu0 0
      %1131 = vmatpush1.bf16.msra.mxu0 %v1122
      %1132 = vmatprep.subr.bf16.mxu0 0
      %1133 = vmatpush1.bf16.msra.mxu0 0
      %1134 = vmatprep.subr.bf16.mxu0 0
      %1135 = vmatpush1.bf16.msra.mxu0 0
      %1136 = vmatprep.subr.bf16.mxu0 0
      %1137 = vmatpush1.bf16.msra.mxu0 0
      %1138 = vmatprep.subr.bf16.mxu0 0
      %1139 = vmatpush1.bf16.msra.mxu0 0
      %1140 = vmatprep.subr.bf16.mxu0 0
      %1141 = vmatpush1.bf16.msra.mxu0 0
      %1142 = vmatprep.subr.bf16.mxu0 0
      %1143 = vmatpush1.bf16.msra.mxu0 0
      %1144 = vmatprep.subr.bf16.mxu0 0
      %1145 = vmatpush1.bf16.msra.mxu0 0
      %1146 = vmatprep.subr.bf16.mxu0 0
      %1147 = vmatpush1.bf16.msra.mxu0 0
      %1148 = vmatprep.subr.bf16.mxu0 0
      %1149 = vmatpush1.bf16.msra.mxu0 0
      %1150 = vmatprep.subr.bf16.mxu0 0
      %1151 = vmatpush1.bf16.msra.mxu0 0
      %1152 = vmatprep.subr.bf16.mxu0 0
      %1153 = vmatpush1.bf16.msra.mxu0 0
      %1154 = vmatprep.subr.bf16.mxu0 0
      %1155 = vmatpush1.bf16.msra.mxu0 0
      %1156 = vmatprep.subr.bf16.mxu0 0
      %1157 = vmatpush1.bf16.msra.mxu0 0
      %1158 = vmatprep.subr.bf16.mxu0 0
      %1159 = vmatpush1.bf16.msra.mxu0 0
      %1160 = vmatprep.mubr.bf16.mxu0 0
      %1161 = vmatmul.mubr.bf16.gmra.mrb[0].mxu0 %v1126
      %v1162 = vpop.f32.mrb[0].mxu0
      %v1163 = vadd.f32 0.0, %v1162
      %v1164 = vpop.f32.mrb[0].mxu0
      %v1165 = vpop.f32.mrb[0].mxu0
      %v1166 = vpop.f32.mrb[0].mxu0
      %1167 = vdwg.mxu0
      %v1168 = vld [vmem:[#allocation2] sm:$0x1]
      %v1169 = vadd.f32 %v1168, %v1163
      %1170 = vst [vmem:[#allocation2] sm:$0x1] %v1169
      %v1171 = vld [vmem:[%s1106] sm:$0x1]
      %s1172 = scalar_lea.vmem %s220, 208
      %v1173 = vld [vmem:[%s1172] sm:$0xf]
      %v1174 = vld [vmem:[%s1172 + $0x4] sm:$0xf]
      %v1175 = vld [vmem:[%s1172 + $0x8] sm:$0xf]
      %v1176 = vld [vmem:[%s1172 + $0xc] sm:$0xf]
      %v1179 = vunpack.c.l.s4 1983009808
      %v1180 = vunpack.c.0.s8 %v1179
      %v1181 = vlaneseq
      %v1182 = vshrl.u32 %v1181, 7
      %v1183 = vsub.s32 %v1180, %v1182
      %v1184 = vrot.slane %v1171, %v1183
      %v1186 = vshrl.u32 %v1184, 16
      %v1192 = vunpack.c.l.b16 %v1173
      %v1193 = vunpack.c.l.b16 %v1174
      %v1194 = vunpack.c.l.b16 %v1175
      %v1195 = vunpack.c.l.b16 %v1176
      %v1196 = vpack.c.b16 %v1193, %v1192
      %v1197 = vpack.c.b16 %v1195, %v1194
      %v1201 = vsel %vm253, %v1186, 0
      %1203 = vmatprep.subr.bf16.mxu0 0
      %1204 = vmatpush1.bf16.msra.mxu0 %v1196
      %1205 = vmatprep.subr.bf16.mxu0 0
      %1206 = vmatpush1.bf16.msra.mxu0 %v1197
      %1207 = vmatprep.subr.bf16.mxu0 0
      %1208 = vmatpush1.bf16.msra.mxu0 0
      %1209 = vmatprep.subr.bf16.mxu0 0
      %1210 = vmatpush1.bf16.msra.mxu0 0
      %1211 = vmatprep.subr.bf16.mxu0 0
      %1212 = vmatpush1.bf16.msra.mxu0 0
      %1213 = vmatprep.subr.bf16.mxu0 0
      %1214 = vmatpush1.bf16.msra.mxu0 0
      %1215 = vmatprep.subr.bf16.mxu0 0
      %1216 = vmatpush1.bf16.msra.mxu0 0
      %1217 = vmatprep.subr.bf16.mxu0 0
      %1218 = vmatpush1.bf16.msra.mxu0 0
      %1219 = vmatprep.subr.bf16.mxu0 0
      %1220 = vmatpush1.bf16.msra.mxu0 0
      %1221 = vmatprep.subr.bf16.mxu0 0
      %1222 = vmatpush1.bf16.msra.mxu0 0
      %1223 = vmatprep.subr.bf16.mxu0 0
      %1224 = vmatpush1.bf16.msra.mxu0 0
      %1225 = vmatprep.subr.bf16.mxu0 0
      %1226 = vmatpush1.bf16.msra.mxu0 0
      %1227 = vmatprep.subr.bf16.mxu0 0
      %1228 = vmatpush1.bf16.msra.mxu0 0
      %1229 = vmatprep.subr.bf16.mxu0 0
      %1230 = vmatpush1.bf16.msra.mxu0 0
      %1231 = vmatprep.subr.bf16.mxu0 0
      %1232 = vmatpush1.bf16.msra.mxu0 0
      %1233 = vmatprep.subr.bf16.mxu0 0
      %1234 = vmatpush1.bf16.msra.mxu0 0
      %1235 = vmatprep.mubr.bf16.mxu0 0
      %1236 = vmatmul.mubr.bf16.gmra.mrb[0].mxu0 %v1201
      %v1237 = vpop.f32.mrb[0].mxu0
      %v1238 = vadd.f32 0.0, %v1237
      %v1239 = vpop.f32.mrb[0].mxu0
      %v1240 = vpop.f32.mrb[0].mxu0
      %v1241 = vpop.f32.mrb[0].mxu0
      %1242 = vdwg.mxu0
      %v1243 = vld [vmem:[#allocation2] sm:$0x1]
      %v1244 = vadd.f32 %v1243, %v1238
      %1245 = vst [vmem:[#allocation2] sm:$0x1] %v1244
      %v1246 = vld [vmem:[%s1106] sm:$0x2]
      %s1247 = scalar_lea.vmem %s220, 224
      %v1248 = vld [vmem:[%s1247] sm:$0xf]
      %v1249 = vld [vmem:[%s1247 + $0x4] sm:$0xf]
      %v1250 = vld [vmem:[%s1247 + $0x8] sm:$0xf]
      %v1251 = vld [vmem:[%s1247 + $0xc] sm:$0xf]
      %v1254 = vunpack.c.l.s4 1983009808
      %v1255 = vunpack.c.0.s8 %v1254
      %v1256 = vlaneseq
      %v1257 = vshrl.u32 %v1256, 7
      %v1258 = vsub.s32 %v1255, %v1257
      %v1259 = vrot.slane %v1246, %v1258
      %v1260 = vrot.slane %v1259, 1
      %v1265 = vunpack.c.l.b16 %v1248
      %v1266 = vunpack.c.l.b16 %v1249
      %v1267 = vunpack.c.l.b16 %v1250
      %v1268 = vunpack.c.l.b16 %v1251
      %v1269 = vpack.c.b16 %v1266, %v1265
      %v1270 = vpack.c.b16 %v1268, %v1267
      %v1274 = vsel %vm253, %v1260, 0
      %1276 = vmatprep.subr.bf16.mxu0 0
      %1277 = vmatpush1.bf16.msra.mxu0 %v1269
      %1278 = vmatprep.subr.bf16.mxu0 0
      %1279 = vmatpush1.bf16.msra.mxu0 %v1270
      %1280 = vmatprep.subr.bf16.mxu0 0
      %1281 = vmatpush1.bf16.msra.mxu0 0
      %1282 = vmatprep.subr.bf16.mxu0 0
      %1283 = vmatpush1.bf16.msra.mxu0 0
      %1284 = vmatprep.subr.bf16.mxu0 0
      %1285 = vmatpush1.bf16.msra.mxu0 0
      %1286 = vmatprep.subr.bf16.mxu0 0
      %1287 = vmatpush1.bf16.msra.mxu0 0
      %1288 = vmatprep.subr.bf16.mxu0 0
      %1289 = vmatpush1.bf16.msra.mxu0 0
      %1290 = vmatprep.subr.bf16.mxu0 0
      %1291 = vmatpush1.bf16.msra.mxu0 0
      %1292 = vmatprep.subr.bf16.mxu0 0
      %1293 = vmatpush1.bf16.msra.mxu0 0
      %1294 = vmatprep.subr.bf16.mxu0 0
      %1295 = vmatpush1.bf16.msra.mxu0 0
      %1296 = vmatprep.subr.bf16.mxu0 0
      %1297 = vmatpush1.bf16.msra.mxu0 0
      %1298 = vmatprep.subr.bf16.mxu0 0
      %1299 = vmatpush1.bf16.msra.mxu0 0
      %1300 = vmatprep.subr.bf16.mxu0 0
      %1301 = vmatpush1.bf16.msra.mxu0 0
      %1302 = vmatprep.subr.bf16.mxu0 0
      %1303 = vmatpush1.bf16.msra.mxu0 0
      %1304 = vmatprep.subr.bf16.mxu0 0
      %1305 = vmatpush1.bf16.msra.mxu0 0
      %1306 = vmatprep.subr.bf16.mxu0 0
      %1307 = vmatpush1.bf16.msra.mxu0 0
      %1308 = vmatprep.mubr.bf16.mxu0 0
      %1309 = vmatmul.mubr.bf16.gmra.mrb[0].mxu0 %v1274
      %v1310 = vpop.f32.mrb[0].mxu0
      %v1311 = vadd.f32 0.0, %v1310
      %v1312 = vpop.f32.mrb[0].mxu0
      %v1313 = vpop.f32.mrb[0].mxu0
      %v1314 = vpop.f32.mrb[0].mxu0
      %1315 = vdwg.mxu0
      %v1316 = vld [vmem:[#allocation2] sm:$0x1]
      %v1317 = vadd.f32 %v1316, %v1311
      %1318 = vst [vmem:[#allocation2] sm:$0x1] %v1317
      %v1319 = vld [vmem:[%s1106] sm:$0x2]
      %s1320 = scalar_lea.vmem %s220, 240
      %v1321 = vld [vmem:[%s1320] sm:$0xf]
      %v1322 = vld [vmem:[%s1320 + $0x4] sm:$0xf]
      %v1323 = vld [vmem:[%s1320 + $0x8] sm:$0xf]
      %v1324 = vld [vmem:[%s1320 + $0xc] sm:$0xf]
      %v1327 = vunpack.c.l.s4 1983009808
      %v1328 = vunpack.c.0.s8 %v1327
      %v1329 = vlaneseq
      %v1330 = vshrl.u32 %v1329, 7
      %v1331 = vsub.s32 %v1328, %v1330
      %v1332 = vrot.slane %v1319, %v1331
      %v1334 = vshrl.u32 %v1332, 16
      %v1336 = vrot.slane %v1334, 1
      %v1341 = vunpack.c.l.b16 %v1321
      %v1342 = vunpack.c.l.b16 %v1322
      %v1343 = vunpack.c.l.b16 %v1323
      %v1344 = vunpack.c.l.b16 %v1324
      %v1345 = vpack.c.b16 %v1342, %v1341
      %v1346 = vpack.c.b16 %v1344, %v1343
      %v1350 = vsel %vm253, %v1336, 0
      %1352 = vmatprep.subr.bf16.mxu0 0
      %1353 = vmatpush1.bf16.msra.mxu0 %v1345
      %1354 = vmatprep.subr.bf16.mxu0 0
      %1355 = vmatpush1.bf16.msra.mxu0 %v1346
      %1356 = vmatprep.subr.bf16.mxu0 0
      %1357 = vmatpush1.bf16.msra.mxu0 0
      %1358 = vmatprep.subr.bf16.mxu0 0
      %1359 = vmatpush1.bf16.msra.mxu0 0
      %1360 = vmatprep.subr.bf16.mxu0 0
      %1361 = vmatpush1.bf16.msra.mxu0 0
      %1362 = vmatprep.subr.bf16.mxu0 0
      %1363 = vmatpush1.bf16.msra.mxu0 0
      %1364 = vmatprep.subr.bf16.mxu0 0
      %1365 = vmatpush1.bf16.msra.mxu0 0
      %1366 = vmatprep.subr.bf16.mxu0 0
      %1367 = vmatpush1.bf16.msra.mxu0 0
      %1368 = vmatprep.subr.bf16.mxu0 0
      %1369 = vmatpush1.bf16.msra.mxu0 0
      %1370 = vmatprep.subr.bf16.mxu0 0
      %1371 = vmatpush1.bf16.msra.mxu0 0
      %1372 = vmatprep.subr.bf16.mxu0 0
      %1373 = vmatpush1.bf16.msra.mxu0 0
      %1374 = vmatprep.subr.bf16.mxu0 0
      %1375 = vmatpush1.bf16.msra.mxu0 0
      %1376 = vmatprep.subr.bf16.mxu0 0
      %1377 = vmatpush1.bf16.msra.mxu0 0
      %1378 = vmatprep.subr.bf16.mxu0 0
      %1379 = vmatpush1.bf16.msra.mxu0 0
      %1380 = vmatprep.subr.bf16.mxu0 0
      %1381 = vmatpush1.bf16.msra.mxu0 0
      %1382 = vmatprep.subr.bf16.mxu0 0
      %1383 = vmatpush1.bf16.msra.mxu0 0
      %1384 = vmatprep.mubr.bf16.mxu0 0
      %1385 = vmatmul.mubr.bf16.gmra.mrb[0].mxu0 %v1350
      %v1386 = vpop.f32.mrb[0].mxu0
      %v1387 = vadd.f32 0.0, %v1386
      %v1388 = vpop.f32.mrb[0].mxu0
      %v1389 = vpop.f32.mrb[0].mxu0
      %v1390 = vpop.f32.mrb[0].mxu0
      %1391 = vdwg.mxu0
      %v1392 = vld [vmem:[#allocation2] sm:$0x1]
      %v1393 = vadd.f32 %v1392, %v1387
      %1394 = vst [vmem:[#allocation2] sm:$0x1] %v1393
      %v1395 = vld [vmem:[#allocation2] sm:$0x1]
      %v1396 = vld [vmem:[%s223] sm:$0x1]
      %v1397 = vadd.f32 %v1395, %v1396
      %v1398 = vpack.c.bf16 %v1397, %v1397
      %vm1399 = vcmask 1040384
      %vm1400 = vsmask.f32 256
      %vm1401 = vmand %vm1399, %vm1400
      %v1402 = vld [vmem:[%s232] sm:$0x1]
      %v1403 = vsel %vm1401, %v1398, %v1402
      %1404 = vst [vmem:[%s232] sm:$0x1] %v1403
      %p1405 = scmp.lt.s32.totalorder %s19, 1
      %s1406 = scalar_select %p1405, %s19, 1
      %p1407 = scmp.lt.s32.totalorder %s21, 0
      %s1408 = scalar_select %p1407, %s21, 0
      %p1409 = scmp.lt.s32.totalorder %s20, 0
      %s1410 = scalar_select %p1409, %s20, 0
      %s1411 = sadd.s32 %s1410, %s1408
      %s1412 = sadd.s32 %s1411, %s1406
      %s1413 = scalar_lea.vmem %s3, %s1412
      // Predicated region
      $region33: #{_lambda_.7} parent=31 // pred_check
        %p1414 = pneg %p133
      $region34: #{_lambda_.7} parent=31 // pred_check_branch
        %1416 = sbr.rel (%p1414) target = $region36
      $region35: #{_lambda_.7} parent=31 // pred_region
        _
      $region36: #{_lambda_.7} parent=31 // pred_fallthru
        _
    $region32: #{_lambda_.7} parent=5 // pred_fallthru
      _
    %p1417 = scmp.le.s32.totalorder 2, %s9
    // Predicated region
    $region37: #{_lambda_.7} parent=5 // pred_check
      %p1418 = pneg %p1417
    $region38: #{_lambda_.7} parent=5 // pred_check_branch
      %1420 = sbr.rel (%p1418) target = $region40
    $region39: #{_lambda_.7} parent=5 // pred_region
      %s1421 = ssub.s32 %s9, 2
      // Predicated region
      $region41: #{_lambda_.7} parent=39 // pred_check
        %p1422 = pneg %p139
      $region42: #{_lambda_.7} parent=39 // pred_check_branch
        %1424 = sbr.rel (%p1422) target = $region44
      $region43: #{_lambda_.7} parent=39 // pred_region
        %p1425 = scmp.lt.s32.totalorder %s22, 1
        %s1426 = scalar_select %p1425, %s22, 1
        %p1427 = scmp.lt.s32.totalorder %s24, 0
        %s1428 = scalar_select %p1427, %s24, 0
        %p1429 = scmp.lt.s32.totalorder %s23, 0
        %s1430 = scalar_select %p1429, %s23, 0
        %s1431 = sadd.s32 %s1430, %s1428
        %s1432 = sadd.s32 %s1431, %s1426
        %s1433 = scalar_lea.vmem %s3, %s1432
      $region44: #{_lambda_.7} parent=39 // pred_fallthru
        _
    $region40: #{_lambda_.7} parent=5 // pred_fallthru
      _
  $region6: #{_lambda_.7} parent=0 // loop_footer
    %s13 = sadd.s32 1, %s9
  $region7: #{_lambda_.7} parent=0 // loop_footer_branch
    %8 = sbr.rel target = $region3
  $region8: #{_lambda_.7} parent=0 // loop_exit
    _

</llo_original>
